<compile_context>
chip_gen: v7x
topology: tpu7x:2x2x1
jax: 0.10.0
libtpu: 0.0.40
codegen_flags: <defaults>
</compile_context>

<pallas_src>
import jax
import jax.numpy as jnp
from jax.experimental import pallas as pl
from jax.experimental.pallas import tpu as pltpu

NUM_KP = 17  # number of COCO keypoints


# ----------------------------- glue (plain JAX) ------------------------------

def compute_locations_per_level(h, w, stride):
    shifts_x = jnp.arange(0, w * stride, stride, dtype=jnp.float32)
    shifts_y = jnp.arange(0, h * stride, stride, dtype=jnp.float32)
    sy, sx = jnp.meshgrid(shifts_y, shifts_x, indexing="ij")
    locs = jnp.stack([sx.reshape(-1), sy.reshape(-1)], axis=1) + (stride // 2)
    return locs  # (H*W, 2), float32


# ----------------------------- Pallas kernels --------------------------------

def _linear_kernel(x_ref, w_ref, b_ref, o_ref):
    # atten_producer: (n_inst, 2304)[bf16] @ (2304, attn_pad)[bf16] + bias, f32 acc
    x = x_ref[...].astype(jnp.bfloat16)
    o_ref[...] = (jnp.dot(x, w_ref[...], preferred_element_type=jnp.float32)
                  + b_ref[...])


def atten_producer(x, w_t_bf16, b_row):
    # x: (n_inst, attn_in) f32; w_t_bf16: (attn_in, attn_pad) bf16 (pre-transposed,
    # zero-padded at init); b_row: (1, attn_pad) f32.
    n_inst, in_dim = x.shape
    attn_pad = w_t_bf16.shape[1]
    return pl.pallas_call(
        _linear_kernel,
        out_shape=jax.ShapeDtypeStruct((n_inst, attn_pad), jnp.float32),
        grid=(1,),
        in_specs=[
            pl.BlockSpec((n_inst, in_dim), lambda i: (0, 0)),
            pl.BlockSpec((in_dim, attn_pad), lambda i: (0, 0)),
            pl.BlockSpec((1, attn_pad), lambda i: (0, 0)),
        ],
        out_specs=pl.BlockSpec((n_inst, attn_pad), lambda i: (0, 0)),
        compiler_params=pltpu.CompilerParams(
            dimension_semantics=("arbitrary",)),
    )(x, w_t_bf16, b_row)


def _dyn_head_kernel(x_ref, w0_ref, w1_ref, w2_ref, dir_ref, o_ref):
    # x_ref : (n, cin+1, HW)  offsets+bases with a ones row (bias folding)
    # w0_ref: (n, ch, cin+1); w1_ref: (n, ch, ch+1); w2_ref: (n, 17, ch+1)
    # dir_ref: (2, 17, HW)    keypoint direction maps (x plane, y plane)
    # o_ref : (3, n, 17)      [x; y; score] planes, written once
    x = x_ref[...]
    n = x.shape[0]
    hw = x.shape[-1]
    ones = jnp.ones((n, 1, hw), jnp.float32)

    # 3-layer dynamic "grouped 1x1 conv" chain as batched matmuls over HW.
    h = jnp.einsum('nci,nip->ncp', w0_ref[...], x,
                   preferred_element_type=jnp.float32)
    h = jnp.maximum(h, 0.0)
    h = jnp.concatenate([h, ones], axis=1)
    h = jnp.einsum('nci,nip->ncp', w1_ref[...], h,
                   preferred_element_type=jnp.float32)
    h = jnp.maximum(h, 0.0)
    h = jnp.concatenate([h, ones], axis=1)
    logits = jnp.einsum('nki,nip->nkp', w2_ref[...], h,
                        preferred_element_type=jnp.float32)        # (n,17,HW)

    # first-occurrence argmax over HW (matches torch.max tie-breaking)
    max_val = jnp.max(logits, axis=2, keepdims=True)               # (n,17,1)
    col = jax.lax.broadcasted_iota(jnp.int32, logits.shape, 2)
    idx = jnp.min(jnp.where(logits == max_val, col, hw), axis=2, keepdims=True)
    sel = col == idx                                               # one True/row

    dx = jnp.broadcast_to(dir_ref[0][None], sel.shape)
    dy = jnp.broadcast_to(dir_ref[1][None], sel.shape)
    kx = jnp.sum(jnp.where(sel, dx, 0.0), axis=2)                  # (n,17)
    ky = jnp.sum(jnp.where(sel, dy, 0.0), axis=2)                  # (n,17)
    score = jnp.max(logits, axis=2)                                # (n,17)
    o_ref[...] = jnp.stack([kx, ky, score], axis=0)                # (3,n,17)


def dynamic_head(x_aug, w0_aug, w1_aug, w2_aug, dir_xy):
    n_inst, cin1, hw = x_aug.shape
    ch = w0_aug.shape[1]
    return pl.pallas_call(
        _dyn_head_kernel,
        out_shape=jax.ShapeDtypeStruct((3, n_inst, NUM_KP), jnp.float32),
        grid=(1,),
        in_specs=[
            pl.BlockSpec((n_inst, cin1, hw), lambda i: (0, 0, 0)),
            pl.BlockSpec((n_inst, ch, cin1), lambda i: (0, 0, 0)),
            pl.BlockSpec((n_inst, ch, ch + 1), lambda i: (0, 0, 0)),
            pl.BlockSpec((n_inst, NUM_KP, ch + 1), lambda i: (0, 0, 0)),
            pl.BlockSpec((2, NUM_KP, hw), lambda i: (0, 0, 0)),
        ],
        out_specs=pl.BlockSpec((3, n_inst, NUM_KP), lambda i: (0, 0, 0)),
        compiler_params=pltpu.CompilerParams(
            dimension_semantics=("arbitrary",)),
    )(x_aug, w0_aug, w1_aug, w2_aug, dir_xy)


# ----------------------------- module wrapper --------------------------------

class FCPoseHead:
    """Eval-mode forward of fcpose_head_module (single image)."""

    def __init__(self, key, num_bases=4, channels=8, attn_in=256 * 9,
                 sizes_of_interest=(64, 128, 256, 512), max_size=1333):
        self.num_bases = num_bases
        self.channels = channels
        self.attn_len = ((2 + num_bases) * channels + channels
                         + channels * channels + channels
                         + channels * NUM_KP + NUM_KP)
        k1, k2 = jax.random.split(key)
        # canonical nn.Linear(256*9, attn_len) parameters (PyTorch layout, f32)
        lin_w = 0.01 * jax.random.normal(k1, (self.attn_len, attn_in), jnp.float32)
        lin_b = 0.01 * jax.random.normal(k2, (self.attn_len,), jnp.float32)
        # kernel layout: zero-pad attn_len to a lane multiple, pre-transpose, bf16
        attn_pad = ((self.attn_len + 127) // 128) * 128
        w_pad = jnp.zeros((attn_pad, attn_in), jnp.float32).at[:self.attn_len].set(lin_w)
        b_pad = jnp.zeros((attn_pad,), jnp.float32).at[:self.attn_len].set(lin_b)
        self.lin_w_kernel = w_pad.T.astype(jnp.bfloat16)        # (attn_in, attn_pad)
        self.lin_b_kernel = b_pad.reshape(1, attn_pad)          # (1, attn_pad) f32
        self.attn_pad = attn_pad
        self.sizes_of_interest = jnp.array(list(sizes_of_interest) + [max_size],
                                           jnp.float32)

    def forward(self, bases_in, per_attns, per_locations, fpn_levels,
                base_stride=8):
        # bases_in: (N=1, num_bases + 34, H, W)   (NCHW, like PyTorch)
        N, _, H, W = bases_in.shape
        hw = H * W
        nb, ch = self.num_bases, self.channels
        bases, direction = jnp.split(bases_in, [nb], axis=1)

        base_locations = compute_locations_per_level(H, W, base_stride)  # (HW,2)
        dl = base_locations.reshape(H, W, 2).transpose(2, 0, 1)          # (2,H,W)
        dl = jnp.tile(dl[None], (N, NUM_KP, 1, 1))                       # (N,34,H,W)
        direction = direction + dl
        dir_xy = jnp.stack([direction[0, 0::2].reshape(NUM_KP, hw),
                            direction[0, 1::2].reshape(NUM_KP, hw)], axis=0)

        n_inst = per_attns.shape[0]
        max_ranges = self.sizes_of_interest[fpn_levels.astype(jnp.int32)]
        offsets = (per_locations.reshape(-1, 1, 2)
                   - base_locations.reshape(1, -1, 2))                   # (n,HW,2)
        offsets = offsets.transpose(0, 2, 1) / max_ranges.reshape(-1, 1, 1)
        base_flat = jnp.broadcast_to(bases[0].reshape(1, nb, hw),
                                     (n_inst, nb, hw))
        ones = jnp.ones((n_inst, 1, hw), jnp.float32)
        x_aug = jnp.concatenate([offsets, base_flat, ones], axis=1)      # (n,3+nb,HW)

        # dynamic per-instance parameters from the (fused-bias) linear output
        attns = atten_producer(per_attns, self.lin_w_kernel, self.lin_b_kernel)
        s0 = (2 + nb) * ch
        o1 = s0 + ch
        o2 = o1 + ch * ch + ch
        w0 = attns[:, :s0].reshape(n_inst, ch, 2 + nb)
        b0 = attns[:, s0:o1].reshape(n_inst, ch, 1)
        w1 = attns[:, o1:o1 + ch * ch].reshape(n_inst, ch, ch)
        b1 = attns[:, o1 + ch * ch:o2].reshape(n_inst, ch, 1)
        w2 = attns[:, o2:o2 + ch * NUM_KP].reshape(n_inst, NUM_KP, ch)
        b2 = attns[:, o2 + ch * NUM_KP:o2 + ch * NUM_KP + NUM_KP].reshape(
            n_inst, NUM_KP, 1)
        w0_aug = jnp.concatenate([w0, b0], axis=2)                       # (n,8,7)
        w1_aug = jnp.concatenate([w1, b1], axis=2)                       # (n,8,9)
        w2_aug = jnp.concatenate([w2, b2], axis=2)                       # (n,17,9)

        kp = dynamic_head(x_aug, w0_aug, w1_aug, w2_aug, dir_xy)         # (3,n,17)
        return jnp.transpose(kp, (1, 2, 0))                              # (n,17,3)


# ----------------------------------- main ------------------------------------

if __name__ == "__main__":
    key = jax.random.PRNGKey(0)
    k_mod, k_bases, k_attn, k_loc, k_lvl = jax.random.split(key, 5)

    num_bases, channels = 4, 8
    N, H, W = 1, 16, 16
    n_inst = 4

    head = FCPoseHead(k_mod, num_bases=num_bases, channels=channels)

    bases_in = jax.random.normal(
        k_bases, (N, num_bases + 2 * NUM_KP, H, W), jnp.float32)
    per_attns = jax.random.normal(k_attn, (n_inst, 256 * 9), jnp.float32)
    per_locations = jax.random.uniform(
        k_loc, (n_inst, 2), jnp.float32, 0.0, W * 8.0)
    fpn_levels = jax.random.randint(k_lvl, (n_inst,), 0, 5)

    fwd = jax.jit(head.forward)
    kp = fwd(bases_in, per_attns, per_locations, fpn_levels)
    kp = jax.block_until_ready(kp)
    assert kp.shape == (n_inst, NUM_KP, 3)
    print("KERNEL_OK")
</pallas_src>

<mosaic_0001>
module attributes {stable_mosaic.version = 11 : i64} {
  func.func @_linear_kernel(%arg0: i32, %arg1: memref<4x2304xf32, #tpu.memory_space<vmem>>, %arg2: memref<2304x384xbf16, #tpu.memory_space<vmem>>, %arg3: memref<1x384xf32, #tpu.memory_space<vmem>>, %arg4: memref<4x384xf32, #tpu.memory_space<vmem>>) attributes {dimension_semantics = [#tpu.dimension_semantics<arbitrary>], iteration_bounds = array<i64: 1>, scalar_prefetch = 0 : i64, scratch_operands = 0 : i64, tpu.core_type = #tpu.core_type<tc>, window_params = [{pipeline_mode = #tpu.pipeline_mode<synchronous>, transform_indices = @transform_0, window_bounds = array<i64: 4, 2304>}, {pipeline_mode = #tpu.pipeline_mode<synchronous>, transform_indices = @transform_1, window_bounds = array<i64: 2304, 384>}, {pipeline_mode = #tpu.pipeline_mode<synchronous>, transform_indices = @transform_2, window_bounds = array<i64: 1, 384>}, {pipeline_mode = #tpu.pipeline_mode<synchronous>, transform_indices = @transform_3, window_bounds = array<i64: 4, 384>}]} {
    %c0 = arith.constant 0 : index
    %c0_0 = arith.constant 0 : index
    %0 = vector.load %arg1[%c0, %c0_0] : memref<4x2304xf32, #tpu.memory_space<vmem>>, vector<4x2304xf32>
    %1 = arith.truncf %0 : vector<4x2304xf32> to vector<4x2304xbf16>
    %c0_1 = arith.constant 0 : index
    %c0_2 = arith.constant 0 : index
    %2 = vector.load %arg2[%c0_1, %c0_2] : memref<2304x384xbf16, #tpu.memory_space<vmem>>, vector<2304x384xbf16>
    %cst = arith.constant dense<0.000000e+00> : vector<4x384xf32>
    %3 = tpu.matmul %1, %2, %cst {dimension_numbers = #tpu.dot_dimension_numbers<[1], [0], [0], [1], [0, 0, 1, 1], [], []>} : vector<4x2304xbf16>, vector<2304x384xbf16>, vector<4x384xf32> -> vector<4x384xf32>
    %c0_3 = arith.constant 0 : index
    %c0_4 = arith.constant 0 : index
    %4 = vector.load %arg3[%c0_3, %c0_4] : memref<1x384xf32, #tpu.memory_space<vmem>>, vector<1x384xf32>
    %5 = vector.broadcast %4 : vector<1x384xf32> to vector<4x384xf32>
    %6 = arith.addf %3, %5 : vector<4x384xf32>
    %c0_5 = arith.constant 0 : index
    %c0_6 = arith.constant 0 : index
    %7 = vector.load %arg4[%c0_5, %c0_6] : memref<4x384xf32, #tpu.memory_space<vmem>>, vector<4x384xf32>
    tpu.vector_store %arg4[%c0_5, %c0_6], %6 {strides = array<i32>} : memref<4x384xf32, #tpu.memory_space<vmem>>, vector<4x384xf32>,
    return
  }
  func.func @transform_0(%arg0: i32) -> (i32, i32) {
    %c0_i32 = arith.constant 0 : i32
    %c0_i32_0 = arith.constant 0 : i32
    %c0_i32_1 = arith.constant 0 : i32
    return %c0_i32, %c0_i32_0 : i32, i32
  }
  func.func @transform_1(%arg0: i32) -> (i32, i32) {
    %c0_i32 = arith.constant 0 : i32
    %c0_i32_0 = arith.constant 0 : i32
    %c0_i32_1 = arith.constant 0 : i32
    return %c0_i32, %c0_i32_0 : i32, i32
  }
  func.func @transform_2(%arg0: i32) -> (i32, i32) {
    %c0_i32 = arith.constant 0 : i32
    %c0_i32_0 = arith.constant 0 : i32
    %c0_i32_1 = arith.constant 0 : i32
    return %c0_i32, %c0_i32_0 : i32, i32
  }
  func.func @transform_3(%arg0: i32) -> (i32, i32) {
    %c0_i32 = arith.constant 0 : i32
    %c0_i32_0 = arith.constant 0 : i32
    %c0_i32_1 = arith.constant 0 : i32
    return %c0_i32, %c0_i32_0 : i32, i32
  }
}

module attributes {stable_mosaic.version = 11 : i64} {
  func.func @_dyn_head_kernel(%arg0: i32, %arg1: memref<4x7x256xf32, #tpu.memory_space<vmem>>, %arg2: memref<4x8x7xf32, #tpu.memory_space<vmem>>, %arg3: memref<4x8x9xf32, #tpu.memory_space<vmem>>, %arg4: memref<4x17x9xf32, #tpu.memory_space<vmem>>, %arg5: memref<2x17x256xf32, #tpu.memory_space<vmem>>, %arg6: memref<3x4x17xf32, #tpu.memory_space<vmem>>) attributes {dimension_semantics = [#tpu.dimension_semantics<arbitrary>], iteration_bounds = array<i64: 1>, scalar_prefetch = 0 : i64, scratch_operands = 0 : i64, tpu.core_type = #tpu.core_type<tc>, window_params = [{pipeline_mode = #tpu.pipeline_mode<synchronous>, transform_indices = @transform_0, window_bounds = array<i64: 4, 7, 256>}, {pipeline_mode = #tpu.pipeline_mode<synchronous>, transform_indices = @transform_1, window_bounds = array<i64: 4, 8, 7>}, {pipeline_mode = #tpu.pipeline_mode<synchronous>, transform_indices = @transform_2, window_bounds = array<i64: 4, 8, 9>}, {pipeline_mode = #tpu.pipeline_mode<synchronous>, transform_indices = @transform_3, window_bounds = array<i64: 4, 17, 9>}, {pipeline_mode = #tpu.pipeline_mode<synchronous>, transform_indices = @transform_4, window_bounds = array<i64: 2, 17, 256>}, {pipeline_mode = #tpu.pipeline_mode<synchronous>, transform_indices = @transform_5, window_bounds = array<i64: 3, 4, 17>}]} {
    %c0 = arith.constant 0 : index
    %c0_0 = arith.constant 0 : index
    %c0_1 = arith.constant 0 : index
    %0 = vector.load %arg1[%c0, %c0_0, %c0_1] : memref<4x7x256xf32, #tpu.memory_space<vmem>>, vector<4x7x256xf32>
    %cst = arith.constant 1.000000e+00 : f32
    %1 = vector.broadcast %cst : f32 to vector<4x1x256xf32>
    %c0_2 = arith.constant 0 : index
    %c0_3 = arith.constant 0 : index
    %c0_4 = arith.constant 0 : index
    %2 = vector.load %arg2[%c0_2, %c0_3, %c0_4] : memref<4x8x7xf32, #tpu.memory_space<vmem>>, vector<4x8x7xf32>
    "tpu.trace_start"() <{level = 10 : i32, message = "nci,nip->ncp"}> : () -> ()
    %cst_5 = arith.constant dense<0.000000e+00> : vector<4x8x256xf32>
    %3 = tpu.matmul %2, %0, %cst_5 {dimension_numbers = #tpu.dot_dimension_numbers<[2], [1], [1], [2], [0, 0, 0, 1, 1, 2], [0], [0]>} : vector<4x8x7xf32>, vector<4x7x256xf32>, vector<4x8x256xf32> -> vector<4x8x256xf32>
    "tpu.trace_stop"() : () -> ()
    %cst_6 = arith.constant 0.000000e+00 : f32
    %4 = vector.broadcast %cst_6 : f32 to vector<4x8x256xf32>
    %5 = arith.maximumf %3, %4 : vector<4x8x256xf32>
    %6 = tpu.concatenate %5, %1 in 1 : vector<4x8x256xf32>, vector<4x1x256xf32> -> vector<4x9x256xf32>
    %c0_7 = arith.constant 0 : index
    %c0_8 = arith.constant 0 : index
    %c0_9 = arith.constant 0 : index
    %7 = vector.load %arg3[%c0_7, %c0_8, %c0_9] : memref<4x8x9xf32, #tpu.memory_space<vmem>>, vector<4x8x9xf32>
    "tpu.trace_start"() <{level = 10 : i32, message = "nci,nip->ncp"}> : () -> ()
    %cst_10 = arith.constant dense<0.000000e+00> : vector<4x8x256xf32>
    %8 = tpu.matmul %7, %6, %cst_10 {dimension_numbers = #tpu.dot_dimension_numbers<[2], [1], [1], [2], [0, 0, 0, 1, 1, 2], [0], [0]>} : vector<4x8x9xf32>, vector<4x9x256xf32>, vector<4x8x256xf32> -> vector<4x8x256xf32>
    "tpu.trace_stop"() : () -> ()
    %cst_11 = arith.constant 0.000000e+00 : f32
    %9 = vector.broadcast %cst_11 : f32 to vector<4x8x256xf32>
    %10 = arith.maximumf %8, %9 : vector<4x8x256xf32>
    %11 = tpu.concatenate %10, %1 in 1 : vector<4x8x256xf32>, vector<4x1x256xf32> -> vector<4x9x256xf32>
    %c0_12 = arith.constant 0 : index
    %c0_13 = arith.constant 0 : index
    %c0_14 = arith.constant 0 : index
    %12 = vector.load %arg4[%c0_12, %c0_13, %c0_14] : memref<4x17x9xf32, #tpu.memory_space<vmem>>, vector<4x17x9xf32>
    "tpu.trace_start"() <{level = 10 : i32, message = "nki,nip->nkp"}> : () -> ()
    %cst_15 = arith.constant dense<0.000000e+00> : vector<4x17x256xf32>
    %13 = tpu.matmul %12, %11, %cst_15 {dimension_numbers = #tpu.dot_dimension_numbers<[2], [1], [1], [2], [0, 0, 0, 1, 1, 2], [0], [0]>} : vector<4x17x9xf32>, vector<4x9x256xf32>, vector<4x17x256xf32> -> vector<4x17x256xf32>
    "tpu.trace_stop"() : () -> ()
    %cst_16 = arith.constant dense<0xFF800000> : vector<4x17xf32>
    %14 = vector.multi_reduction <maximumf>, %13, %cst_16 [2] : vector<4x17x256xf32> to vector<4x17xf32>
    %15 = vector.shape_cast %14 : vector<4x17xf32> to vector<4x17x1xf32>
    %16 = tpu.iota {dimensions = array<i32: 2>} : vector<4x17x256xi32>
    %17 = vector.broadcast %15 : vector<4x17x1xf32> to vector<4x17x256xf32>
    %18 = arith.cmpf oeq, %13, %17 : vector<4x17x256xf32>
    %c256_i32 = arith.constant 256 : i32
    %19 = vector.broadcast %c256_i32 : i32 to vector<4x17x256xi32>
    %20 = arith.select %18, %16, %19 : vector<4x17x256xi1>, vector<4x17x256xi32>
    %cst_17 = arith.constant dense<2147483647> : vector<4x17xi32>
    %21 = vector.multi_reduction <minsi>, %20, %cst_17 [2] : vector<4x17x256xi32> to vector<4x17xi32>
    %22 = vector.shape_cast %21 : vector<4x17xi32> to vector<4x17x1xi32>
    %23 = vector.broadcast %22 : vector<4x17x1xi32> to vector<4x17x256xi32>
    %24 = arith.cmpi eq, %16, %23 : vector<4x17x256xi32>
    %c0_18 = arith.constant 0 : index
    %c0_19 = arith.constant 0 : index
    %c0_20 = arith.constant 0 : index
    %25 = vector.load %arg5[%c0_18, %c0_19, %c0_20] : memref<2x17x256xf32, #tpu.memory_space<vmem>>, vector<1x17x256xf32>
    %26 = vector.shape_cast %25 : vector<1x17x256xf32> to vector<17x256xf32>
    %27 = vector.shape_cast %26 : vector<17x256xf32> to vector<1x17x256xf32>
    %28 = vector.shape_cast %27 : vector<1x17x256xf32> to vector<1x17x256xf32>
    %29 = vector.broadcast %28 : vector<1x17x256xf32> to vector<4x17x256xf32>
    %c1 = arith.constant 1 : index
    %c0_21 = arith.constant 0 : index
    %c0_22 = arith.constant 0 : index
    %30 = vector.load %arg5[%c1, %c0_21, %c0_22] : memref<2x17x256xf32, #tpu.memory_space<vmem>>, vector<1x17x256xf32>
    %31 = vector.shape_cast %30 : vector<1x17x256xf32> to vector<17x256xf32>
    %32 = vector.shape_cast %31 : vector<17x256xf32> to vector<1x17x256xf32>
    %33 = vector.shape_cast %32 : vector<1x17x256xf32> to vector<1x17x256xf32>
    %34 = vector.broadcast %33 : vector<1x17x256xf32> to vector<4x17x256xf32>
    %cst_23 = arith.constant 0.000000e+00 : f32
    %35 = vector.broadcast %cst_23 : f32 to vector<4x17x256xf32>
    %36 = arith.select %24, %29, %35 : vector<4x17x256xi1>, vector<4x17x256xf32>
    %cst_24 = arith.constant dense<0.000000e+00> : vector<4x17xf32>
    %37 = vector.multi_reduction <add>, %36, %cst_24 [2] : vector<4x17x256xf32> to vector<4x17xf32>
    %cst_25 = arith.constant 0.000000e+00 : f32
    %38 = vector.broadcast %cst_25 : f32 to vector<4x17x256xf32>
    %39 = arith.select %24, %34, %38 : vector<4x17x256xi1>, vector<4x17x256xf32>
    %cst_26 = arith.constant dense<0.000000e+00> : vector<4x17xf32>
    %40 = vector.multi_reduction <add>, %39, %cst_26 [2] : vector<4x17x256xf32> to vector<4x17xf32>
    %cst_27 = arith.constant dense<0xFF800000> : vector<4x17xf32>
    %41 = vector.multi_reduction <maximumf>, %13, %cst_27 [2] : vector<4x17x256xf32> to vector<4x17xf32>
    %42 = vector.shape_cast %37 : vector<4x17xf32> to vector<1x4x17xf32>
    %43 = vector.shape_cast %40 : vector<4x17xf32> to vector<1x4x17xf32>
    %44 = vector.shape_cast %41 : vector<4x17xf32> to vector<1x4x17xf32>
    %45 = tpu.concatenate %42, %43, %44 in 0 : vector<1x4x17xf32>, vector<1x4x17xf32>, vector<1x4x17xf32> -> vector<3x4x17xf32>
    %c0_28 = arith.constant 0 : index
    %c0_29 = arith.constant 0 : index
    %c0_30 = arith.constant 0 : index
    %46 = vector.load %arg6[%c0_28, %c0_29, %c0_30] : memref<3x4x17xf32, #tpu.memory_space<vmem>>, vector<3x4x17xf32>
    tpu.vector_store %arg6[%c0_28, %c0_29, %c0_30], %45 {strides = array<i32>} : memref<3x4x17xf32, #tpu.memory_space<vmem>>, vector<3x4x17xf32>,
    return
  }
  func.func @transform_0(%arg0: i32) -> (i32, i32, i32) {
    %c0_i32 = arith.constant 0 : i32
    %c0_i32_0 = arith.constant 0 : i32
    %c0_i32_1 = arith.constant 0 : i32
    %c0_i32_2 = arith.constant 0 : i32
    return %c0_i32, %c0_i32_0, %c0_i32_1 : i32, i32, i32
  }
  func.func @transform_1(%arg0: i32) -> (i32, i32, i32) {
    %c0_i32 = arith.constant 0 : i32
    %c0_i32_0 = arith.constant 0 : i32
    %c0_i32_1 = arith.constant 0 : i32
    %c0_i32_2 = arith.constant 0 : i32
    return %c0_i32, %c0_i32_0, %c0_i32_1 : i32, i32, i32
  }
  func.func @transform_2(%arg0: i32) -> (i32, i32, i32) {
    %c0_i32 = arith.constant 0 : i32
    %c0_i32_0 = arith.constant 0 : i32
    %c0_i32_1 = arith.constant 0 : i32
    %c0_i32_2 = arith.constant 0 : i32
    return %c0_i32, %c0_i32_0, %c0_i32_1 : i32, i32, i32
  }
  func.func @transform_3(%arg0: i32) -> (i32, i32, i32) {
    %c0_i32 = arith.constant 0 : i32
    %c0_i32_0 = arith.constant 0 : i32
    %c0_i32_1 = arith.constant 0 : i32
    %c0_i32_2 = arith.constant 0 : i32
    return %c0_i32, %c0_i32_0, %c0_i32_1 : i32, i32, i32
  }
  func.func @transform_4(%arg0: i32) -> (i32, i32, i32) {
    %c0_i32 = arith.constant 0 : i32
    %c0_i32_0 = arith.constant 0 : i32
    %c0_i32_1 = arith.constant 0 : i32
    %c0_i32_2 = arith.constant 0 : i32
    return %c0_i32, %c0_i32_0, %c0_i32_1 : i32, i32, i32
  }
  func.func @transform_5(%arg0: i32) -> (i32, i32, i32) {
    %c0_i32 = arith.constant 0 : i32
    %c0_i32_0 = arith.constant 0 : i32
    %c0_i32_1 = arith.constant 0 : i32
    %c0_i32_2 = arith.constant 0 : i32
    return %c0_i32, %c0_i32_0, %c0_i32_1 : i32, i32, i32
  }
}

</mosaic_0001>

<llo_original>
// kernel: split.3
$region0: #{split.3}
  #allocation0 [shape = 'u32[2048]{0}', space=vmem, size = 0x2000, scoped, tag = 'scoped memory for split.3']
  #allocation1 [shape = 'u32[2048]{0}', space=vmem, size = 0x2000, scoped, tag = 'scoped memory for split.3']
  #allocation2 [shape = 'u32[2048]{0}', space=vmem, size = 0x2000, scoped, tag = 'scoped memory for split.3']
  #allocation3 [shape = 'u32[2048]{0}', space=vmem, size = 0x2000, scoped, tag = 'scoped memory for split.3']
  #allocation4 [shape = 'u32[2048]{0}', space=vmem, size = 0x2000, scoped, tag = 'scoped memory for split.3']
  #allocation5 [shape = 's32[1]{0}', space=sflag, size = 0x4, scoped, tag = 'scoped memory for split.3']
  %s0 = inlined_call_operand.vmem [shape: f32[1,38,16,16], index: 0, kind: input, shape index: {}]
  %s1 = inlined_call_operand.vmem [shape: f32[1,34,16,16], index: 1, kind: output, shape index: {}]
  %v2 = vld [vmem:[%s0] sm:$0xff]
  %v3 = vlaneseq
  %v4 = vand.u32 %v3, 127
  %vm5 = vcmp.lt.s32.totalorder %v4, 4
  %v6 = vsel %vm5, 0, %v2
  %7 = vrot.lane.b32.xlu0 %v6, 124
  %v8 = vpop.permute.xlu0 %7
  %9 = vst [vmem:[%s1] sm:$0xff] %v8
  %s10 = scalar_lea.vmem %s0, 16
  %v11 = vld [vmem:[%s10] sm:$0xff]
  %v12 = vlaneseq
  %v13 = vand.u32 %v12, 127
  %vm14 = vcmp.lt.s32.totalorder %v13, 4
  %v15 = vsel %vm14, 0, %v11
  %16 = vrot.lane.b32.xlu0 %v15, 124
  %v17 = vpop.permute.xlu0 %16
  %s18 = scalar_lea.vmem %s1, 16
  %19 = vst [vmem:[%s18] sm:$0xff] %v17
  %s20 = scalar_lea.vmem %s0, 32
  %v21 = vld [vmem:[%s20] sm:$0xff]
  %v22 = vlaneseq
  %v23 = vand.u32 %v22, 127
  %vm24 = vcmp.lt.s32.totalorder %v23, 4
  %v25 = vsel %vm24, 0, %v21
  %26 = vrot.lane.b32.xlu0 %v25, 124
  %v27 = vpop.permute.xlu0 %26
  %s28 = scalar_lea.vmem %s1, 32
  %29 = vst [vmem:[%s28] sm:$0xff] %v27
  %s30 = scalar_lea.vmem %s0, 48
  %v31 = vld [vmem:[%s30] sm:$0xff]
  %v32 = vlaneseq
  %v33 = vand.u32 %v32, 127
  %vm34 = vcmp.lt.s32.totalorder %v33, 4
  %v35 = vsel %vm34, 0, %v31
  %36 = vrot.lane.b32.xlu0 %v35, 124
  %v37 = vpop.permute.xlu0 %36
  %s38 = scalar_lea.vmem %s1, 48
  %39 = vst [vmem:[%s38] sm:$0xff] %v37
  %s40 = scalar_lea.vmem %s0, 64
  %v41 = vld [vmem:[%s40] sm:$0xff]
  %v42 = vlaneseq
  %v43 = vand.u32 %v42, 127
  %vm44 = vcmp.lt.s32.totalorder %v43, 4
  %v45 = vsel %vm44, 0, %v41
  %46 = vrot.lane.b32.xlu0 %v45, 124
  %v47 = vpop.permute.xlu0 %46
  %s48 = scalar_lea.vmem %s1, 64
  %49 = vst [vmem:[%s48] sm:$0xff] %v47
  %s50 = scalar_lea.vmem %s0, 80
  %v51 = vld [vmem:[%s50] sm:$0xff]
  %v52 = vlaneseq
  %v53 = vand.u32 %v52, 127
  %vm54 = vcmp.lt.s32.totalorder %v53, 4
  %v55 = vsel %vm54, 0, %v51
  %56 = vrot.lane.b32.xlu0 %v55, 124
  %v57 = vpop.permute.xlu0 %56
  %s58 = scalar_lea.vmem %s1, 80
  %59 = vst [vmem:[%s58] sm:$0xff] %v57
  %s60 = scalar_lea.vmem %s0, 96
  %v61 = vld [vmem:[%s60] sm:$0xff]
  %v62 = vlaneseq
  %v63 = vand.u32 %v62, 127
  %vm64 = vcmp.lt.s32.totalorder %v63, 4
  %v65 = vsel %vm64, 0, %v61
  %66 = vrot.lane.b32.xlu0 %v65, 124
  %v67 = vpop.permute.xlu0 %66
  %s68 = scalar_lea.vmem %s1, 96
  %69 = vst [vmem:[%s68] sm:$0xff] %v67
  %s70 = scalar_lea.vmem %s0, 112
  %v71 = vld [vmem:[%s70] sm:$0xff]
  %v72 = vlaneseq
  %v73 = vand.u32 %v72, 127
  %vm74 = vcmp.lt.s32.totalorder %v73, 4
  %v75 = vsel %vm74, 0, %v71
  %76 = vrot.lane.b32.xlu0 %v75, 124
  %v77 = vpop.permute.xlu0 %76
  %s78 = scalar_lea.vmem %s1, 112
  %79 = vst [vmem:[%s78] sm:$0xff] %v77
  %s80 = scalar_lea.vmem %s0, 128
  %v81 = vld [vmem:[%s80] sm:$0xff]
  %v82 = vlaneseq
  %v83 = vand.u32 %v82, 127
  %vm84 = vcmp.lt.s32.totalorder %v83, 4
  %v85 = vsel %vm84, 0, %v81
  %86 = vrot.lane.b32.xlu0 %v85, 124
  %v87 = vpop.permute.xlu0 %86
  %s88 = scalar_lea.vmem %s1, 128
  %89 = vst [vmem:[%s88] sm:$0xff] %v87
  %s90 = scalar_lea.vmem %s0, 144
  %v91 = vld [vmem:[%s90] sm:$0xff]
  %v92 = vlaneseq
  %v93 = vand.u32 %v92, 127
  %vm94 = vcmp.lt.s32.totalorder %v93, 4
  %v95 = vsel %vm94, 0, %v91
  %96 = vrot.lane.b32.xlu0 %v95, 124
  %v97 = vpop.permute.xlu0 %96
  %s98 = scalar_lea.vmem %s1, 144
  %99 = vst [vmem:[%s98] sm:$0xff] %v97
  %s100 = scalar_lea.vmem %s0, 160
  %v101 = vld [vmem:[%s100] sm:$0xff]
  %v102 = vlaneseq
  %v103 = vand.u32 %v102, 127
  %vm104 = vcmp.lt.s32.totalorder %v103, 4
  %v105 = vsel %vm104, 0, %v101
  %106 = vrot.lane.b32.xlu0 %v105, 124
  %v107 = vpop.permute.xlu0 %106
  %s108 = scalar_lea.vmem %s1, 160
  %109 = vst [vmem:[%s108] sm:$0xff] %v107
  %s110 = scalar_lea.vmem %s0, 176
  %v111 = vld [vmem:[%s110] sm:$0xff]
  %v112 = vlaneseq
  %v113 = vand.u32 %v112, 127
  %vm114 = vcmp.lt.s32.totalorder %v113, 4
  %v115 = vsel %vm114, 0, %v111
  %116 = vrot.lane.b32.xlu0 %v115, 124
  %v117 = vpop.permute.xlu0 %116
  %s118 = scalar_lea.vmem %s1, 176
  %119 = vst [vmem:[%s118] sm:$0xff] %v117
  %s120 = scalar_lea.vmem %s0, 192
  %v121 = vld [vmem:[%s120] sm:$0xff]
  %v122 = vlaneseq
  %v123 = vand.u32 %v122, 127
  %vm124 = vcmp.lt.s32.totalorder %v123, 4
  %v125 = vsel %vm124, 0, %v121
  %126 = vrot.lane.b32.xlu0 %v125, 124
  %v127 = vpop.permute.xlu0 %126
  %s128 = scalar_lea.vmem %s1, 192
  %129 = vst [vmem:[%s128] sm:$0xff] %v127
  %s130 = scalar_lea.vmem %s0, 208
  %v131 = vld [vmem:[%s130] sm:$0xff]
  %v132 = vlaneseq
  %v133 = vand.u32 %v132, 127
  %vm134 = vcmp.lt.s32.totalorder %v133, 4
  %v135 = vsel %vm134, 0, %v131
  %136 = vrot.lane.b32.xlu0 %v135, 124
  %v137 = vpop.permute.xlu0 %136
  %s138 = scalar_lea.vmem %s1, 208
  %139 = vst [vmem:[%s138] sm:$0xff] %v137
  %s140 = scalar_lea.vmem %s0, 224
  %v141 = vld [vmem:[%s140] sm:$0xff]
  %v142 = vlaneseq
  %v143 = vand.u32 %v142, 127
  %vm144 = vcmp.lt.s32.totalorder %v143, 4
  %v145 = vsel %vm144, 0, %v141
  %146 = vrot.lane.b32.xlu0 %v145, 124
  %v147 = vpop.permute.xlu0 %146
  %s148 = scalar_lea.vmem %s1, 224
  %149 = vst [vmem:[%s148] sm:$0xff] %v147
  %s150 = scalar_lea.vmem %s0, 240
  %v151 = vld [vmem:[%s150] sm:$0xff]
  %v152 = vlaneseq
  %v153 = vand.u32 %v152, 127
  %vm154 = vcmp.lt.s32.totalorder %v153, 4
  %v155 = vsel %vm154, 0, %v151
  %156 = vrot.lane.b32.xlu0 %v155, 124
  %v157 = vpop.permute.xlu0 %156
  %s158 = scalar_lea.vmem %s1, 240
  %159 = vst [vmem:[%s158] sm:$0xff] %v157
  %s160 = scalar_lea.vmem %s0, 8
  %v161 = vld [vmem:[%s160] sm:$0xff]
  %v162 = vlaneseq
  %v163 = vand.u32 %v162, 127
  %vm164 = vcmp.lt.s32.totalorder %v163, 4
  %v165 = vsel %vm164, 0, %v161
  %166 = vrot.lane.b32.xlu0 %v165, 124
  %v167 = vpop.permute.xlu0 %166
  %s168 = scalar_lea.vmem %s1, 8
  %169 = vst [vmem:[%s168] sm:$0xff] %v167
  %s170 = scalar_lea.vmem %s0, 24
  %v171 = vld [vmem:[%s170] sm:$0xff]
  %v172 = vlaneseq
  %v173 = vand.u32 %v172, 127
  %vm174 = vcmp.lt.s32.totalorder %v173, 4
  %v175 = vsel %vm174, 0, %v171
  %176 = vrot.lane.b32.xlu0 %v175, 124
  %v177 = vpop.permute.xlu0 %176
  %s178 = scalar_lea.vmem %s1, 24
  %179 = vst [vmem:[%s178] sm:$0xff] %v177
  %s180 = scalar_lea.vmem %s0, 40
  %v181 = vld [vmem:[%s180] sm:$0xff]
  %v182 = vlaneseq
  %v183 = vand.u32 %v182, 127
  %vm184 = vcmp.lt.s32.totalorder %v183, 4
  %v185 = vsel %vm184, 0, %v181
  %186 = vrot.lane.b32.xlu0 %v185, 124
  %v187 = vpop.permute.xlu0 %186
  %s188 = scalar_lea.vmem %s1, 40
  %189 = vst [vmem:[%s188] sm:$0xff] %v187
  %s190 = scalar_lea.vmem %s0, 56
  %v191 = vld [vmem:[%s190] sm:$0xff]
  %v192 = vlaneseq
  %v193 = vand.u32 %v192, 127
  %vm194 = vcmp.lt.s32.totalorder %v193, 4
  %v195 = vsel %vm194, 0, %v191
  %196 = vrot.lane.b32.xlu0 %v195, 124
  %v197 = vpop.permute.xlu0 %196
  %s198 = scalar_lea.vmem %s1, 56
  %199 = vst [vmem:[%s198] sm:$0xff] %v197
  %s200 = scalar_lea.vmem %s0, 72
  %v201 = vld [vmem:[%s200] sm:$0xff]
  %v202 = vlaneseq
  %v203 = vand.u32 %v202, 127
  %vm204 = vcmp.lt.s32.totalorder %v203, 4
  %v205 = vsel %vm204, 0, %v201
  %206 = vrot.lane.b32.xlu0 %v205, 124
  %v207 = vpop.permute.xlu0 %206
  %s208 = scalar_lea.vmem %s1, 72
  %209 = vst [vmem:[%s208] sm:$0xff] %v207
  %s210 = scalar_lea.vmem %s0, 88
  %v211 = vld [vmem:[%s210] sm:$0xff]
  %v212 = vlaneseq
  %v213 = vand.u32 %v212, 127
  %vm214 = vcmp.lt.s32.totalorder %v213, 4
  %v215 = vsel %vm214, 0, %v211
  %216 = vrot.lane.b32.xlu0 %v215, 124
  %v217 = vpop.permute.xlu0 %216
  %s218 = scalar_lea.vmem %s1, 88
  %219 = vst [vmem:[%s218] sm:$0xff] %v217
  %s220 = scalar_lea.vmem %s0, 104
  %v221 = vld [vmem:[%s220] sm:$0xff]
  %v222 = vlaneseq
  %v223 = vand.u32 %v222, 127
  %vm224 = vcmp.lt.s32.totalorder %v223, 4
  %v225 = vsel %vm224, 0, %v221
  %226 = vrot.lane.b32.xlu0 %v225, 124
  %v227 = vpop.permute.xlu0 %226
  %s228 = scalar_lea.vmem %s1, 104
  %229 = vst [vmem:[%s228] sm:$0xff] %v227
  %s230 = scalar_lea.vmem %s0, 120
  %v231 = vld [vmem:[%s230] sm:$0xff]
  %v232 = vlaneseq
  %v233 = vand.u32 %v232, 127
  %vm234 = vcmp.lt.s32.totalorder %v233, 4
  %v235 = vsel %vm234, 0, %v231
  %236 = vrot.lane.b32.xlu0 %v235, 124
  %v237 = vpop.permute.xlu0 %236
  %s238 = scalar_lea.vmem %s1, 120
  %239 = vst [vmem:[%s238] sm:$0xff] %v237
  %s240 = scalar_lea.vmem %s0, 136
  %v241 = vld [vmem:[%s240] sm:$0xff]
  %v242 = vlaneseq
  %v243 = vand.u32 %v242, 127
  %vm244 = vcmp.lt.s32.totalorder %v243, 4
  %v245 = vsel %vm244, 0, %v241
  %246 = vrot.lane.b32.xlu0 %v245, 124
  %v247 = vpop.permute.xlu0 %246
  %s248 = scalar_lea.vmem %s1, 136
  %249 = vst [vmem:[%s248] sm:$0xff] %v247
  %s250 = scalar_lea.vmem %s0, 152
  %v251 = vld [vmem:[%s250] sm:$0xff]
  %v252 = vlaneseq
  %v253 = vand.u32 %v252, 127
  %vm254 = vcmp.lt.s32.totalorder %v253, 4
  %v255 = vsel %vm254, 0, %v251
  %256 = vrot.lane.b32.xlu0 %v255, 124
  %v257 = vpop.permute.xlu0 %256
  %s258 = scalar_lea.vmem %s1, 152
  %259 = vst [vmem:[%s258] sm:$0xff] %v257
  %s260 = scalar_lea.vmem %s0, 168
  %v261 = vld [vmem:[%s260] sm:$0xff]
  %v262 = vlaneseq
  %v263 = vand.u32 %v262, 127
  %vm264 = vcmp.lt.s32.totalorder %v263, 4
  %v265 = vsel %vm264, 0, %v261
  %266 = vrot.lane.b32.xlu0 %v265, 124
  %v267 = vpop.permute.xlu0 %266
  %s268 = scalar_lea.vmem %s1, 168
  %269 = vst [vmem:[%s268] sm:$0xff] %v267
  %s270 = scalar_lea.vmem %s0, 184
  %v271 = vld [vmem:[%s270] sm:$0xff]
  %v272 = vlaneseq
  %v273 = vand.u32 %v272, 127
  %vm274 = vcmp.lt.s32.totalorder %v273, 4
  %v275 = vsel %vm274, 0, %v271
  %276 = vrot.lane.b32.xlu0 %v275, 124
  %v277 = vpop.permute.xlu0 %276
  %s278 = scalar_lea.vmem %s1, 184
  %279 = vst [vmem:[%s278] sm:$0xff] %v277
  %s280 = scalar_lea.vmem %s0, 200
  %v281 = vld [vmem:[%s280] sm:$0xff]
  %v282 = vlaneseq
  %v283 = vand.u32 %v282, 127
  %vm284 = vcmp.lt.s32.totalorder %v283, 4
  %v285 = vsel %vm284, 0, %v281
  %286 = vrot.lane.b32.xlu0 %v285, 124
  %v287 = vpop.permute.xlu0 %286
  %s288 = scalar_lea.vmem %s1, 200
  %289 = vst [vmem:[%s288] sm:$0xff] %v287
  %s290 = scalar_lea.vmem %s0, 216
  %v291 = vld [vmem:[%s290] sm:$0xff]
  %v292 = vlaneseq
  %v293 = vand.u32 %v292, 127
  %vm294 = vcmp.lt.s32.totalorder %v293, 4
  %v295 = vsel %vm294, 0, %v291
  %296 = vrot.lane.b32.xlu0 %v295, 124
  %v297 = vpop.permute.xlu0 %296
  %s298 = scalar_lea.vmem %s1, 216
  %299 = vst [vmem:[%s298] sm:$0xff] %v297
  %s300 = scalar_lea.vmem %s0, 232
  %v301 = vld [vmem:[%s300] sm:$0xff]
  %v302 = vlaneseq
  %v303 = vand.u32 %v302, 127
  %vm304 = vcmp.lt.s32.totalorder %v303, 4
  %v305 = vsel %vm304, 0, %v301
  %306 = vrot.lane.b32.xlu0 %v305, 124
  %v307 = vpop.permute.xlu0 %306
  %s308 = scalar_lea.vmem %s1, 232
  %309 = vst [vmem:[%s308] sm:$0xff] %v307
  %s310 = scalar_lea.vmem %s0, 248
  %v311 = vld [vmem:[%s310] sm:$0xff]
  %v312 = vlaneseq
  %v313 = vand.u32 %v312, 127
  %vm314 = vcmp.lt.s32.totalorder %v313, 4
  %v315 = vsel %vm314, 0, %v311
  %316 = vrot.lane.b32.xlu0 %v315, 124
  %v317 = vpop.permute.xlu0 %316
  %s318 = scalar_lea.vmem %s1, 248
  %319 = vst [vmem:[%s318] sm:$0xff] %v317

// kernel: squeeze.1
$region0: #{squeeze.1}
  %s0 = inlined_call_operand.vmem [shape: f32[1,17,16,16], index: 0, kind: input, shape index: {}]
  %s1 = inlined_call_operand.vmem [shape: f32[1,17,256], index: 1, kind: output, shape index: {}]
  %v2 = vld [vmem:[%s0] ss:$8 sm:$0xf]
  %v3 = vld [vmem:[%s0] ss:$8 sm:$0xf0]
  %vm4 = vcmask 1047556
  %v5 = vsel %vm4, %v3, %v2
  %vm6 = vcmask 130048
  %7 = vst.msk [vmem:[%s1] ss:$8 sm:$0x3] %vm6, %v5
  %s8 = scalar_lea.vmem %s1, 4294967281
  %9 = vst.msk [vmem:[%s8] ss:$8 sm:$0xc] %vm6, %v5
  %s10 = scalar_lea.vmem %s1, 4294967266
  %11 = vst.msk [vmem:[%s10] ss:$8 sm:$0x30] %vm6, %v5
  %s12 = scalar_lea.vmem %s1, 4294967251
  %13 = vst.msk [vmem:[%s12] ss:$8 sm:$0xc0] %vm6, %v5
  %s14 = scalar_lea.vmem %s0, 64
  %v15 = vld [vmem:[%s14] ss:$8 sm:$0xf]
  %s16 = scalar_lea.vmem %s0, 64
  %v17 = vld [vmem:[%s16] ss:$8 sm:$0xf0]
  %vm18 = vcmask 1047556
  %v19 = vsel %vm18, %v17, %v15
  %vm20 = vcmask 130048
  %s21 = scalar_lea.vmem %s1, 4
  %22 = vst.msk [vmem:[%s21] ss:$8 sm:$0x3] %vm20, %v19
  %s23 = scalar_lea.vmem %s1, 4294967285
  %24 = vst.msk [vmem:[%s23] ss:$8 sm:$0xc] %vm20, %v19
  %s25 = scalar_lea.vmem %s1, 4294967270
  %26 = vst.msk [vmem:[%s25] ss:$8 sm:$0x30] %vm20, %v19
  %s27 = scalar_lea.vmem %s1, 4294967255
  %28 = vst.msk [vmem:[%s27] ss:$8 sm:$0xc0] %vm20, %v19
  %s29 = scalar_lea.vmem %s0, 128
  %v30 = vld [vmem:[%s29] ss:$8 sm:$0xf]
  %s31 = scalar_lea.vmem %s0, 128
  %v32 = vld [vmem:[%s31] ss:$8 sm:$0xf0]
  %vm33 = vcmask 1047556
  %v34 = vsel %vm33, %v32, %v30
  %vm35 = vcmask 130048
  %s36 = scalar_lea.vmem %s1, 16
  %37 = vst.msk [vmem:[%s36] ss:$8 sm:$0x3] %vm35, %v34
  %s38 = scalar_lea.vmem %s1, 1
  %39 = vst.msk [vmem:[%s38] ss:$8 sm:$0xc] %vm35, %v34
  %s40 = scalar_lea.vmem %s1, 4294967282
  %41 = vst.msk [vmem:[%s40] ss:$8 sm:$0x30] %vm35, %v34
  %s42 = scalar_lea.vmem %s1, 4294967267
  %43 = vst.msk [vmem:[%s42] ss:$8 sm:$0xc0] %vm35, %v34
  %s44 = scalar_lea.vmem %s0, 192
  %v45 = vld [vmem:[%s44] ss:$8 sm:$0xf]
  %s46 = scalar_lea.vmem %s0, 192
  %v47 = vld [vmem:[%s46] ss:$8 sm:$0xf0]
  %vm48 = vcmask 1047556
  %v49 = vsel %vm48, %v47, %v45
  %vm50 = vcmask 130048
  %s51 = scalar_lea.vmem %s1, 20
  %52 = vst.msk [vmem:[%s51] ss:$8 sm:$0x3] %vm50, %v49
  %s53 = scalar_lea.vmem %s1, 5
  %54 = vst.msk [vmem:[%s53] ss:$8 sm:$0xc] %vm50, %v49
  %s55 = scalar_lea.vmem %s1, 4294967286
  %56 = vst.msk [vmem:[%s55] ss:$8 sm:$0x30] %vm50, %v49
  %s57 = scalar_lea.vmem %s1, 4294967271
  %58 = vst.msk [vmem:[%s57] ss:$8 sm:$0xc0] %vm50, %v49
  %s59 = scalar_lea.vmem %s0, 256
  %s60 = smov 3
  %v61 = vld [vmem:[%s59] ss:$8 sm:%s60]
  %vm62 = vcmask 130048
  %s63 = scalar_lea.vmem %s1, 32
  %64 = vst.msk [vmem:[%s63] ss:$8 sm:$0x3] %vm62, %v61
  %s65 = scalar_lea.vmem %s0, 7
  %s66 = smov 3
  %v67 = vld [vmem:[%s65] ss:$16 sm:%s66]
  %s68 = scalar_lea.vmem %s0, 7
  %s69 = smov 12
  %v70 = vld [vmem:[%s68] ss:$16 sm:%s69]
  %vm71 = vcmask 1043458
  %v72 = vsel %vm71, %v70, %v67
  %s73 = scalar_lea.vmem %s0, 7
  %s74 = smov 48
  %v75 = vld [vmem:[%s73] ss:$16 sm:%s74]
  %vm76 = vcmask 1045508
  %v77 = vsel %vm76, %v75, %v72
  %s78 = scalar_lea.vmem %s0, 7
  %s79 = smov 192
  %v80 = vld [vmem:[%s78] ss:$16 sm:%s79]
  %vm81 = vcmask 1047558
  %v82 = vsel %vm81, %v80, %v77
  %83 = vrot.lane.b32.xlu0 %v82, 112
  %v84 = vpop.permute.xlu0 %83
  %vm85 = vcmask 1048448
  %86 = vst.msk [vmem:[%s1] sm:$0xff] %vm85, %v84
  %s87 = scalar_lea.vmem %s0, 263
  %s88 = smov 3
  %v89 = vld [vmem:[%s87] ss:$-248 sm:%s88]
  %s90 = scalar_lea.vmem %s0, 4294967295
  %s91 = smov 12
  %v92 = vld [vmem:[%s90] ss:$16 sm:%s91]
  %vm93 = vcmask 1043458
  %v94 = vsel %vm93, %v92, %v89
  %s95 = scalar_lea.vmem %s0, 4294967295
  %s96 = smov 48
  %v97 = vld [vmem:[%s95] ss:$16 sm:%s96]
  %vm98 = vcmask 1045508
  %v99 = vsel %vm98, %v97, %v94
  %s100 = scalar_lea.vmem %s0, 4294967295
  %s101 = smov 192
  %v102 = vld [vmem:[%s100] ss:$16 sm:%s101]
  %vm103 = vcmask 1047558
  %v104 = vsel %vm103, %v102, %v99
  %105 = vrot.lane.b32.xlu0 %v104, 112
  %v106 = vpop.permute.xlu0 %105
  %vm107 = vcmask 1048448
  %s108 = scalar_lea.vmem %s1, 32
  %109 = vst.msk [vmem:[%s108] ss:$-24 sm:$0x3] %vm107, %v106
  %s110 = scalar_lea.vmem %s1, 7
  %111 = vst.msk [vmem:[%s110] sm:$0xfc] %vm107, %v106
  %s112 = scalar_lea.vmem %s0, 271
  %s113 = smov 3
  %v114 = vld [vmem:[%s112] ss:$-144 sm:%s113]
  %s115 = scalar_lea.vmem %s0, 103
  %s116 = smov 12
  %v117 = vld [vmem:[%s115] ss:$16 sm:%s116]
  %vm118 = vcmask 1043458
  %v119 = vsel %vm118, %v117, %v114
  %s120 = scalar_lea.vmem %s0, 103
  %s121 = smov 48
  %v122 = vld [vmem:[%s120] ss:$16 sm:%s121]
  %vm123 = vcmask 1045508
  %v124 = vsel %vm123, %v122, %v119
  %s125 = scalar_lea.vmem %s0, 103
  %s126 = smov 192
  %v127 = vld [vmem:[%s125] ss:$16 sm:%s126]
  %vm128 = vcmask 1047558
  %v129 = vsel %vm128, %v127, %v124
  %130 = vrot.lane.b32.xlu0 %v129, 112
  %v131 = vpop.permute.xlu0 %130
  %vm132 = vcmask 1048448
  %s133 = scalar_lea.vmem %s1, 40
  %134 = vst.msk [vmem:[%s133] ss:$-25 sm:$0x3] %vm132, %v131
  %s135 = scalar_lea.vmem %s1, 14
  %136 = vst.msk [vmem:[%s135] sm:$0xfc] %vm132, %v131
  %s137 = scalar_lea.vmem %s0, 231
  %s138 = smov 3
  %v139 = vld [vmem:[%s137] ss:$16 sm:%s138]
  %s140 = scalar_lea.vmem %s0, 111
  %s141 = smov 12
  %v142 = vld [vmem:[%s140] ss:$16 sm:%s141]
  %vm143 = vcmask 1043458
  %v144 = vsel %vm143, %v142, %v139
  %s145 = scalar_lea.vmem %s0, 111
  %s146 = smov 48
  %v147 = vld [vmem:[%s145] ss:$16 sm:%s146]
  %vm148 = vcmask 1045508
  %v149 = vsel %vm148, %v147, %v144
  %s150 = scalar_lea.vmem %s0, 111
  %s151 = smov 192
  %v152 = vld [vmem:[%s150] ss:$16 sm:%s151]
  %vm153 = vcmask 1047558
  %v154 = vsel %vm153, %v152, %v149
  %155 = vrot.lane.b32.xlu0 %v154, 112
  %v156 = vpop.permute.xlu0 %155
  %vm157 = vcmask 1048448
  %s158 = scalar_lea.vmem %s1, 22
  %159 = vst.msk [vmem:[%s158] sm:$0xff] %vm157, %v156
  %s160 = scalar_lea.vmem %s0, 239
  %s161 = smov 3
  %v162 = vld [vmem:[%s160] ss:$16 sm:%s161]
  %163 = vrot.lane.b32.xlu0 %v162, 112
  %v164 = vpop.permute.xlu0 %163
  %vm165 = vcmask 1048448
  %s166 = scalar_lea.vmem %s1, 30
  %167 = vst.msk [vmem:[%s166] sm:$0x3] %vm165, %v164
  %s168 = scalar_lea.vmem %s0, 6
  %s169 = smov 3
  %v170 = vld [vmem:[%s168] ss:$16 sm:%s169]
  %s171 = scalar_lea.vmem %s0, 6
  %s172 = smov 12
  %v173 = vld [vmem:[%s171] ss:$16 sm:%s172]
  %vm174 = vcmask 1043458
  %v175 = vsel %vm174, %v173, %v170
  %s176 = scalar_lea.vmem %s0, 6
  %s177 = smov 48
  %v178 = vld [vmem:[%s176] ss:$16 sm:%s177]
  %vm179 = vcmask 1045508
  %v180 = vsel %vm179, %v178, %v175
  %s181 = scalar_lea.vmem %s0, 6
  %s182 = smov 192
  %v183 = vld [vmem:[%s181] ss:$16 sm:%s182]
  %vm184 = vcmask 1047558
  %v185 = vsel %vm184, %v183, %v180
  %186 = vrot.lane.b32.xlu0 %v185, 96
  %v187 = vpop.permute.xlu0 %186
  %vm188 = vcmask 917248
  %189 = vst.msk [vmem:[%s1] sm:$0xff] %vm188, %v187
  %s190 = scalar_lea.vmem %s0, 262
  %s191 = smov 3
  %v192 = vld [vmem:[%s190] ss:$-248 sm:%s191]
  %s193 = scalar_lea.vmem %s0, 4294967294
  %s194 = smov 12
  %v195 = vld [vmem:[%s193] ss:$16 sm:%s194]
  %vm196 = vcmask 1043458
  %v197 = vsel %vm196, %v195, %v192
  %s198 = scalar_lea.vmem %s0, 4294967294
  %s199 = smov 48
  %v200 = vld [vmem:[%s198] ss:$16 sm:%s199]
  %vm201 = vcmask 1045508
  %v202 = vsel %vm201, %v200, %v197
  %s203 = scalar_lea.vmem %s0, 4294967294
  %s204 = smov 192
  %v205 = vld [vmem:[%s203] ss:$16 sm:%s204]
  %vm206 = vcmask 1047558
  %v207 = vsel %vm206, %v205, %v202
  %208 = vrot.lane.b32.xlu0 %v207, 96
  %v209 = vpop.permute.xlu0 %208
  %vm210 = vcmask 917248
  %s211 = scalar_lea.vmem %s1, 32
  %212 = vst.msk [vmem:[%s211] ss:$-24 sm:$0x3] %vm210, %v209
  %s213 = scalar_lea.vmem %s1, 7
  %214 = vst.msk [vmem:[%s213] sm:$0xfc] %vm210, %v209
  %s215 = scalar_lea.vmem %s0, 270
  %s216 = smov 3
  %v217 = vld [vmem:[%s215] ss:$-144 sm:%s216]
  %s218 = scalar_lea.vmem %s0, 102
  %s219 = smov 12
  %v220 = vld [vmem:[%s218] ss:$16 sm:%s219]
  %vm221 = vcmask 1043458
  %v222 = vsel %vm221, %v220, %v217
  %s223 = scalar_lea.vmem %s0, 102
  %s224 = smov 48
  %v225 = vld [vmem:[%s223] ss:$16 sm:%s224]
  %vm226 = vcmask 1045508
  %v227 = vsel %vm226, %v225, %v222
  %s228 = scalar_lea.vmem %s0, 102
  %s229 = smov 192
  %v230 = vld [vmem:[%s228] ss:$16 sm:%s229]
  %vm231 = vcmask 1047558
  %v232 = vsel %vm231, %v230, %v227
  %233 = vrot.lane.b32.xlu0 %v232, 96
  %v234 = vpop.permute.xlu0 %233
  %vm235 = vcmask 917248
  %s236 = scalar_lea.vmem %s1, 40
  %237 = vst.msk [vmem:[%s236] ss:$-25 sm:$0x3] %vm235, %v234
  %s238 = scalar_lea.vmem %s1, 14
  %239 = vst.msk [vmem:[%s238] sm:$0xfc] %vm235, %v234
  %s240 = scalar_lea.vmem %s0, 230
  %s241 = smov 3
  %v242 = vld [vmem:[%s240] ss:$16 sm:%s241]
  %s243 = scalar_lea.vmem %s0, 110
  %s244 = smov 12
  %v245 = vld [vmem:[%s243] ss:$16 sm:%s244]
  %vm246 = vcmask 1043458
  %v247 = vsel %vm246, %v245, %v242
  %s248 = scalar_lea.vmem %s0, 110
  %s249 = smov 48
  %v250 = vld [vmem:[%s248] ss:$16 sm:%s249]
  %vm251 = vcmask 1045508
  %v252 = vsel %vm251, %v250, %v247
  %s253 = scalar_lea.vmem %s0, 110
  %s254 = smov 192
  %v255 = vld [vmem:[%s253] ss:$16 sm:%s254]
  %vm256 = vcmask 1047558
  %v257 = vsel %vm256, %v255, %v252
  %258 = vrot.lane.b32.xlu0 %v257, 96
  %v259 = vpop.permute.xlu0 %258
  %vm260 = vcmask 917248
  %s261 = scalar_lea.vmem %s1, 22
  %262 = vst.msk [vmem:[%s261] sm:$0xff] %vm260, %v259
  %s263 = scalar_lea.vmem %s0, 238
  %s264 = smov 3
  %v265 = vld [vmem:[%s263] ss:$16 sm:%s264]
  %266 = vrot.lane.b32.xlu0 %v265, 96
  %v267 = vpop.permute.xlu0 %266
  %vm268 = vcmask 917248
  %s269 = scalar_lea.vmem %s1, 30
  %270 = vst.msk [vmem:[%s269] sm:$0x3] %vm268, %v267
  %s271 = scalar_lea.vmem %s0, 5
  %s272 = smov 3
  %v273 = vld [vmem:[%s271] ss:$16 sm:%s272]
  %s274 = scalar_lea.vmem %s0, 5
  %s275 = smov 12
  %v276 = vld [vmem:[%s274] ss:$16 sm:%s275]
  %vm277 = vcmask 1043458
  %v278 = vsel %vm277, %v276, %v273
  %s279 = scalar_lea.vmem %s0, 5
  %s280 = smov 48
  %v281 = vld [vmem:[%s279] ss:$16 sm:%s280]
  %vm282 = vcmask 1045508
  %v283 = vsel %vm282, %v281, %v278
  %s284 = scalar_lea.vmem %s0, 5
  %s285 = smov 192
  %v286 = vld [vmem:[%s284] ss:$16 sm:%s285]
  %vm287 = vcmask 1047558
  %v288 = vsel %vm287, %v286, %v283
  %289 = vrot.lane.b32.xlu0 %v288, 80
  %v290 = vpop.permute.xlu0 %289
  %vm291 = vcmask 786048
  %292 = vst.msk [vmem:[%s1] sm:$0xff] %vm291, %v290
  %s293 = scalar_lea.vmem %s0, 261
  %s294 = smov 3
  %v295 = vld [vmem:[%s293] ss:$-248 sm:%s294]
  %s296 = scalar_lea.vmem %s0, 4294967293
  %s297 = smov 12
  %v298 = vld [vmem:[%s296] ss:$16 sm:%s297]
  %vm299 = vcmask 1043458
  %v300 = vsel %vm299, %v298, %v295
  %s301 = scalar_lea.vmem %s0, 4294967293
  %s302 = smov 48
  %v303 = vld [vmem:[%s301] ss:$16 sm:%s302]
  %vm304 = vcmask 1045508
  %v305 = vsel %vm304, %v303, %v300
  %s306 = scalar_lea.vmem %s0, 4294967293
  %s307 = smov 192
  %v308 = vld [vmem:[%s306] ss:$16 sm:%s307]
  %vm309 = vcmask 1047558
  %v310 = vsel %vm309, %v308, %v305
  %311 = vrot.lane.b32.xlu0 %v310, 80
  %v312 = vpop.permute.xlu0 %311
  %vm313 = vcmask 786048
  %s314 = scalar_lea.vmem %s1, 32
  %315 = vst.msk [vmem:[%s314] ss:$-24 sm:$0x3] %vm313, %v312
  %s316 = scalar_lea.vmem %s1, 7
  %317 = vst.msk [vmem:[%s316] sm:$0xfc] %vm313, %v312
  %s318 = scalar_lea.vmem %s0, 269
  %s319 = smov 3
  %v320 = vld [vmem:[%s318] ss:$-144 sm:%s319]
  %s321 = scalar_lea.vmem %s0, 101
  %s322 = smov 12
  %v323 = vld [vmem:[%s321] ss:$16 sm:%s322]
  %vm324 = vcmask 1043458
  %v325 = vsel %vm324, %v323, %v320
  %s326 = scalar_lea.vmem %s0, 101
  %s327 = smov 48
  %v328 = vld [vmem:[%s326] ss:$16 sm:%s327]
  %vm329 = vcmask 1045508
  %v330 = vsel %vm329, %v328, %v325
  %s331 = scalar_lea.vmem %s0, 101
  %s332 = smov 192
  %v333 = vld [vmem:[%s331] ss:$16 sm:%s332]
  %vm334 = vcmask 1047558
  %v335 = vsel %vm334, %v333, %v330
  %336 = vrot.lane.b32.xlu0 %v335, 80
  %v337 = vpop.permute.xlu0 %336
  %vm338 = vcmask 786048
  %s339 = scalar_lea.vmem %s1, 40
  %340 = vst.msk [vmem:[%s339] ss:$-25 sm:$0x3] %vm338, %v337
  %s341 = scalar_lea.vmem %s1, 14
  %342 = vst.msk [vmem:[%s341] sm:$0xfc] %vm338, %v337
  %s343 = scalar_lea.vmem %s0, 229
  %s344 = smov 3
  %v345 = vld [vmem:[%s343] ss:$16 sm:%s344]
  %s346 = scalar_lea.vmem %s0, 109
  %s347 = smov 12
  %v348 = vld [vmem:[%s346] ss:$16 sm:%s347]
  %vm349 = vcmask 1043458
  %v350 = vsel %vm349, %v348, %v345
  %s351 = scalar_lea.vmem %s0, 109
  %s352 = smov 48
  %v353 = vld [vmem:[%s351] ss:$16 sm:%s352]
  %vm354 = vcmask 1045508
  %v355 = vsel %vm354, %v353, %v350
  %s356 = scalar_lea.vmem %s0, 109
  %s357 = smov 192
  %v358 = vld [vmem:[%s356] ss:$16 sm:%s357]
  %vm359 = vcmask 1047558
  %v360 = vsel %vm359, %v358, %v355
  %361 = vrot.lane.b32.xlu0 %v360, 80
  %v362 = vpop.permute.xlu0 %361
  %vm363 = vcmask 786048
  %s364 = scalar_lea.vmem %s1, 22
  %365 = vst.msk [vmem:[%s364] sm:$0xff] %vm363, %v362
  %s366 = scalar_lea.vmem %s0, 237
  %s367 = smov 3
  %v368 = vld [vmem:[%s366] ss:$16 sm:%s367]
  %369 = vrot.lane.b32.xlu0 %v368, 80
  %v370 = vpop.permute.xlu0 %369
  %vm371 = vcmask 786048
  %s372 = scalar_lea.vmem %s1, 30
  %373 = vst.msk [vmem:[%s372] sm:$0x3] %vm371, %v370
  %s374 = scalar_lea.vmem %s0, 4
  %s375 = smov 3
  %v376 = vld [vmem:[%s374] ss:$16 sm:%s375]
  %s377 = scalar_lea.vmem %s0, 4
  %s378 = smov 12
  %v379 = vld [vmem:[%s377] ss:$16 sm:%s378]
  %vm380 = vcmask 1043458
  %v381 = vsel %vm380, %v379, %v376
  %s382 = scalar_lea.vmem %s0, 4
  %s383 = smov 48
  %v384 = vld [vmem:[%s382] ss:$16 sm:%s383]
  %vm385 = vcmask 1045508
  %v386 = vsel %vm385, %v384, %v381
  %s387 = scalar_lea.vmem %s0, 4
  %s388 = smov 192
  %v389 = vld [vmem:[%s387] ss:$16 sm:%s388]
  %vm390 = vcmask 1047558
  %v391 = vsel %vm390, %v389, %v386
  %392 = vrot.lane.b32.xlu0 %v391, 64
  %v393 = vpop.permute.xlu0 %392
  %vm394 = vcmask 654848
  %395 = vst.msk [vmem:[%s1] sm:$0xff] %vm394, %v393
  %s396 = scalar_lea.vmem %s0, 260
  %s397 = smov 3
  %v398 = vld [vmem:[%s396] ss:$-248 sm:%s397]
  %s399 = scalar_lea.vmem %s0, 4294967292
  %s400 = smov 12
  %v401 = vld [vmem:[%s399] ss:$16 sm:%s400]
  %vm402 = vcmask 1043458
  %v403 = vsel %vm402, %v401, %v398
  %s404 = scalar_lea.vmem %s0, 4294967292
  %s405 = smov 48
  %v406 = vld [vmem:[%s404] ss:$16 sm:%s405]
  %vm407 = vcmask 1045508
  %v408 = vsel %vm407, %v406, %v403
  %s409 = scalar_lea.vmem %s0, 4294967292
  %s410 = smov 192
  %v411 = vld [vmem:[%s409] ss:$16 sm:%s410]
  %vm412 = vcmask 1047558
  %v413 = vsel %vm412, %v411, %v408
  %414 = vrot.lane.b32.xlu0 %v413, 64
  %v415 = vpop.permute.xlu0 %414
  %vm416 = vcmask 654848
  %s417 = scalar_lea.vmem %s1, 32
  %418 = vst.msk [vmem:[%s417] ss:$-24 sm:$0x3] %vm416, %v415
  %s419 = scalar_lea.vmem %s1, 7
  %420 = vst.msk [vmem:[%s419] sm:$0xfc] %vm416, %v415
  %s421 = scalar_lea.vmem %s0, 268
  %s422 = smov 3
  %v423 = vld [vmem:[%s421] ss:$-144 sm:%s422]
  %s424 = scalar_lea.vmem %s0, 100
  %s425 = smov 12
  %v426 = vld [vmem:[%s424] ss:$16 sm:%s425]
  %vm427 = vcmask 1043458
  %v428 = vsel %vm427, %v426, %v423
  %s429 = scalar_lea.vmem %s0, 100
  %s430 = smov 48
  %v431 = vld [vmem:[%s429] ss:$16 sm:%s430]
  %vm432 = vcmask 1045508
  %v433 = vsel %vm432, %v431, %v428
  %s434 = scalar_lea.vmem %s0, 100
  %s435 = smov 192
  %v436 = vld [vmem:[%s434] ss:$16 sm:%s435]
  %vm437 = vcmask 1047558
  %v438 = vsel %vm437, %v436, %v433
  %439 = vrot.lane.b32.xlu0 %v438, 64
  %v440 = vpop.permute.xlu0 %439
  %vm441 = vcmask 654848
  %s442 = scalar_lea.vmem %s1, 40
  %443 = vst.msk [vmem:[%s442] ss:$-25 sm:$0x3] %vm441, %v440
  %s444 = scalar_lea.vmem %s1, 14
  %445 = vst.msk [vmem:[%s444] sm:$0xfc] %vm441, %v440
  %s446 = scalar_lea.vmem %s0, 228
  %s447 = smov 3
  %v448 = vld [vmem:[%s446] ss:$16 sm:%s447]
  %s449 = scalar_lea.vmem %s0, 108
  %s450 = smov 12
  %v451 = vld [vmem:[%s449] ss:$16 sm:%s450]
  %vm452 = vcmask 1043458
  %v453 = vsel %vm452, %v451, %v448
  %s454 = scalar_lea.vmem %s0, 108
  %s455 = smov 48
  %v456 = vld [vmem:[%s454] ss:$16 sm:%s455]
  %vm457 = vcmask 1045508
  %v458 = vsel %vm457, %v456, %v453
  %s459 = scalar_lea.vmem %s0, 108
  %s460 = smov 192
  %v461 = vld [vmem:[%s459] ss:$16 sm:%s460]
  %vm462 = vcmask 1047558
  %v463 = vsel %vm462, %v461, %v458
  %464 = vrot.lane.b32.xlu0 %v463, 64
  %v465 = vpop.permute.xlu0 %464
  %vm466 = vcmask 654848
  %s467 = scalar_lea.vmem %s1, 22
  %468 = vst.msk [vmem:[%s467] sm:$0xff] %vm466, %v465
  %s469 = scalar_lea.vmem %s0, 236
  %s470 = smov 3
  %v471 = vld [vmem:[%s469] ss:$16 sm:%s470]
  %472 = vrot.lane.b32.xlu0 %v471, 64
  %v473 = vpop.permute.xlu0 %472
  %vm474 = vcmask 654848
  %s475 = scalar_lea.vmem %s1, 30
  %476 = vst.msk [vmem:[%s475] sm:$0x3] %vm474, %v473
  %s477 = scalar_lea.vmem %s0, 3
  %s478 = smov 3
  %v479 = vld [vmem:[%s477] ss:$16 sm:%s478]
  %s480 = scalar_lea.vmem %s0, 3
  %s481 = smov 12
  %v482 = vld [vmem:[%s480] ss:$16 sm:%s481]
  %vm483 = vcmask 1043458
  %v484 = vsel %vm483, %v482, %v479
  %s485 = scalar_lea.vmem %s0, 3
  %s486 = smov 48
  %v487 = vld [vmem:[%s485] ss:$16 sm:%s486]
  %vm488 = vcmask 1045508
  %v489 = vsel %vm488, %v487, %v484
  %s490 = scalar_lea.vmem %s0, 3
  %s491 = smov 192
  %v492 = vld [vmem:[%s490] ss:$16 sm:%s491]
  %vm493 = vcmask 1047558
  %v494 = vsel %vm493, %v492, %v489
  %495 = vrot.lane.b32.xlu0 %v494, 48
  %v496 = vpop.permute.xlu0 %495
  %vm497 = vcmask 523648
  %498 = vst.msk [vmem:[%s1] sm:$0xff] %vm497, %v496
  %s499 = scalar_lea.vmem %s0, 259
  %s500 = smov 3
  %v501 = vld [vmem:[%s499] ss:$-248 sm:%s500]
  %s502 = scalar_lea.vmem %s0, 4294967291
  %s503 = smov 12
  %v504 = vld [vmem:[%s502] ss:$16 sm:%s503]
  %vm505 = vcmask 1043458
  %v506 = vsel %vm505, %v504, %v501
  %s507 = scalar_lea.vmem %s0, 4294967291
  %s508 = smov 48
  %v509 = vld [vmem:[%s507] ss:$16 sm:%s508]
  %vm510 = vcmask 1045508
  %v511 = vsel %vm510, %v509, %v506
  %s512 = scalar_lea.vmem %s0, 4294967291
  %s513 = smov 192
  %v514 = vld [vmem:[%s512] ss:$16 sm:%s513]
  %vm515 = vcmask 1047558
  %v516 = vsel %vm515, %v514, %v511
  %517 = vrot.lane.b32.xlu0 %v516, 48
  %v518 = vpop.permute.xlu0 %517
  %vm519 = vcmask 523648
  %s520 = scalar_lea.vmem %s1, 32
  %521 = vst.msk [vmem:[%s520] ss:$-24 sm:$0x3] %vm519, %v518
  %s522 = scalar_lea.vmem %s1, 7
  %523 = vst.msk [vmem:[%s522] sm:$0xfc] %vm519, %v518
  %s524 = scalar_lea.vmem %s0, 267
  %s525 = smov 3
  %v526 = vld [vmem:[%s524] ss:$-144 sm:%s525]
  %s527 = scalar_lea.vmem %s0, 99
  %s528 = smov 12
  %v529 = vld [vmem:[%s527] ss:$16 sm:%s528]
  %vm530 = vcmask 1043458
  %v531 = vsel %vm530, %v529, %v526
  %s532 = scalar_lea.vmem %s0, 99
  %s533 = smov 48
  %v534 = vld [vmem:[%s532] ss:$16 sm:%s533]
  %vm535 = vcmask 1045508
  %v536 = vsel %vm535, %v534, %v531
  %s537 = scalar_lea.vmem %s0, 99
  %s538 = smov 192
  %v539 = vld [vmem:[%s537] ss:$16 sm:%s538]
  %vm540 = vcmask 1047558
  %v541 = vsel %vm540, %v539, %v536
  %542 = vrot.lane.b32.xlu0 %v541, 48
  %v543 = vpop.permute.xlu0 %542
  %vm544 = vcmask 523648
  %s545 = scalar_lea.vmem %s1, 40
  %546 = vst.msk [vmem:[%s545] ss:$-25 sm:$0x3] %vm544, %v543
  %s547 = scalar_lea.vmem %s1, 14
  %548 = vst.msk [vmem:[%s547] sm:$0xfc] %vm544, %v543
  %s549 = scalar_lea.vmem %s0, 227
  %s550 = smov 3
  %v551 = vld [vmem:[%s549] ss:$16 sm:%s550]
  %s552 = scalar_lea.vmem %s0, 107
  %s553 = smov 12
  %v554 = vld [vmem:[%s552] ss:$16 sm:%s553]
  %vm555 = vcmask 1043458
  %v556 = vsel %vm555, %v554, %v551
  %s557 = scalar_lea.vmem %s0, 107
  %s558 = smov 48
  %v559 = vld [vmem:[%s557] ss:$16 sm:%s558]
  %vm560 = vcmask 1045508
  %v561 = vsel %vm560, %v559, %v556
  %s562 = scalar_lea.vmem %s0, 107
  %s563 = smov 192
  %v564 = vld [vmem:[%s562] ss:$16 sm:%s563]
  %vm565 = vcmask 1047558
  %v566 = vsel %vm565, %v564, %v561
  %567 = vrot.lane.b32.xlu0 %v566, 48
  %v568 = vpop.permute.xlu0 %567
  %vm569 = vcmask 523648
  %s570 = scalar_lea.vmem %s1, 22
  %571 = vst.msk [vmem:[%s570] sm:$0xff] %vm569, %v568
  %s572 = scalar_lea.vmem %s0, 235
  %s573 = smov 3
  %v574 = vld [vmem:[%s572] ss:$16 sm:%s573]
  %575 = vrot.lane.b32.xlu0 %v574, 48
  %v576 = vpop.permute.xlu0 %575
  %vm577 = vcmask 523648
  %s578 = scalar_lea.vmem %s1, 30
  %579 = vst.msk [vmem:[%s578] sm:$0x3] %vm577, %v576
  %s580 = scalar_lea.vmem %s0, 2
  %s581 = smov 3
  %v582 = vld [vmem:[%s580] ss:$16 sm:%s581]
  %s583 = scalar_lea.vmem %s0, 2
  %s584 = smov 12
  %v585 = vld [vmem:[%s583] ss:$16 sm:%s584]
  %vm586 = vcmask 1043458
  %v587 = vsel %vm586, %v585, %v582
  %s588 = scalar_lea.vmem %s0, 2
  %s589 = smov 48
  %v590 = vld [vmem:[%s588] ss:$16 sm:%s589]
  %vm591 = vcmask 1045508
  %v592 = vsel %vm591, %v590, %v587
  %s593 = scalar_lea.vmem %s0, 2
  %s594 = smov 192
  %v595 = vld [vmem:[%s593] ss:$16 sm:%s594]
  %vm596 = vcmask 1047558
  %v597 = vsel %vm596, %v595, %v592
  %598 = vrot.lane.b32.xlu0 %v597, 32
  %v599 = vpop.permute.xlu0 %598
  %vm600 = vcmask 392448
  %601 = vst.msk [vmem:[%s1] sm:$0xff] %vm600, %v599
  %s602 = scalar_lea.vmem %s0, 258
  %s603 = smov 3
  %v604 = vld [vmem:[%s602] ss:$-248 sm:%s603]
  %s605 = scalar_lea.vmem %s0, 4294967290
  %s606 = smov 12
  %v607 = vld [vmem:[%s605] ss:$16 sm:%s606]
  %vm608 = vcmask 1043458
  %v609 = vsel %vm608, %v607, %v604
  %s610 = scalar_lea.vmem %s0, 4294967290
  %s611 = smov 48
  %v612 = vld [vmem:[%s610] ss:$16 sm:%s611]
  %vm613 = vcmask 1045508
  %v614 = vsel %vm613, %v612, %v609
  %s615 = scalar_lea.vmem %s0, 4294967290
  %s616 = smov 192
  %v617 = vld [vmem:[%s615] ss:$16 sm:%s616]
  %vm618 = vcmask 1047558
  %v619 = vsel %vm618, %v617, %v614
  %620 = vrot.lane.b32.xlu0 %v619, 32
  %v621 = vpop.permute.xlu0 %620
  %vm622 = vcmask 392448
  %s623 = scalar_lea.vmem %s1, 32
  %624 = vst.msk [vmem:[%s623] ss:$-24 sm:$0x3] %vm622, %v621
  %s625 = scalar_lea.vmem %s1, 7
  %626 = vst.msk [vmem:[%s625] sm:$0xfc] %vm622, %v621
  %s627 = scalar_lea.vmem %s0, 266
  %s628 = smov 3
  %v629 = vld [vmem:[%s627] ss:$-144 sm:%s628]
  %s630 = scalar_lea.vmem %s0, 98
  %s631 = smov 12
  %v632 = vld [vmem:[%s630] ss:$16 sm:%s631]
  %vm633 = vcmask 1043458
  %v634 = vsel %vm633, %v632, %v629
  %s635 = scalar_lea.vmem %s0, 98
  %s636 = smov 48
  %v637 = vld [vmem:[%s635] ss:$16 sm:%s636]
  %vm638 = vcmask 1045508
  %v639 = vsel %vm638, %v637, %v634
  %s640 = scalar_lea.vmem %s0, 98
  %s641 = smov 192
  %v642 = vld [vmem:[%s640] ss:$16 sm:%s641]
  %vm643 = vcmask 1047558
  %v644 = vsel %vm643, %v642, %v639
  %645 = vrot.lane.b32.xlu0 %v644, 32
  %v646 = vpop.permute.xlu0 %645
  %vm647 = vcmask 392448
  %s648 = scalar_lea.vmem %s1, 40
  %649 = vst.msk [vmem:[%s648] ss:$-25 sm:$0x3] %vm647, %v646
  %s650 = scalar_lea.vmem %s1, 14
  %651 = vst.msk [vmem:[%s650] sm:$0xfc] %vm647, %v646
  %s652 = scalar_lea.vmem %s0, 226
  %s653 = smov 3
  %v654 = vld [vmem:[%s652] ss:$16 sm:%s653]
  %s655 = scalar_lea.vmem %s0, 106
  %s656 = smov 12
  %v657 = vld [vmem:[%s655] ss:$16 sm:%s656]
  %vm658 = vcmask 1043458
  %v659 = vsel %vm658, %v657, %v654
  %s660 = scalar_lea.vmem %s0, 106
  %s661 = smov 48
  %v662 = vld [vmem:[%s660] ss:$16 sm:%s661]
  %vm663 = vcmask 1045508
  %v664 = vsel %vm663, %v662, %v659
  %s665 = scalar_lea.vmem %s0, 106
  %s666 = smov 192
  %v667 = vld [vmem:[%s665] ss:$16 sm:%s666]
  %vm668 = vcmask 1047558
  %v669 = vsel %vm668, %v667, %v664
  %670 = vrot.lane.b32.xlu0 %v669, 32
  %v671 = vpop.permute.xlu0 %670
  %vm672 = vcmask 392448
  %s673 = scalar_lea.vmem %s1, 22
  %674 = vst.msk [vmem:[%s673] sm:$0xff] %vm672, %v671
  %s675 = scalar_lea.vmem %s0, 234
  %s676 = smov 3
  %v677 = vld [vmem:[%s675] ss:$16 sm:%s676]
  %678 = vrot.lane.b32.xlu0 %v677, 32
  %v679 = vpop.permute.xlu0 %678
  %vm680 = vcmask 392448
  %s681 = scalar_lea.vmem %s1, 30
  %682 = vst.msk [vmem:[%s681] sm:$0x3] %vm680, %v679
  %s683 = scalar_lea.vmem %s0, 1
  %s684 = smov 3
  %v685 = vld [vmem:[%s683] ss:$16 sm:%s684]
  %s686 = scalar_lea.vmem %s0, 1
  %s687 = smov 12
  %v688 = vld [vmem:[%s686] ss:$16 sm:%s687]
  %vm689 = vcmask 1043458
  %v690 = vsel %vm689, %v688, %v685
  %s691 = scalar_lea.vmem %s0, 1
  %s692 = smov 48
  %v693 = vld [vmem:[%s691] ss:$16 sm:%s692]
  %vm694 = vcmask 1045508
  %v695 = vsel %vm694, %v693, %v690
  %s696 = scalar_lea.vmem %s0, 1
  %s697 = smov 192
  %v698 = vld [vmem:[%s696] ss:$16 sm:%s697]
  %vm699 = vcmask 1047558
  %v700 = vsel %vm699, %v698, %v695
  %701 = vrot.lane.b32.xlu0 %v700, 16
  %v702 = vpop.permute.xlu0 %701
  %vm703 = vcmask 261248
  %704 = vst.msk [vmem:[%s1] sm:$0xff] %vm703, %v702
  %s705 = scalar_lea.vmem %s0, 257
  %s706 = smov 3
  %v707 = vld [vmem:[%s705] ss:$-248 sm:%s706]
  %s708 = scalar_lea.vmem %s0, 4294967289
  %s709 = smov 12
  %v710 = vld [vmem:[%s708] ss:$16 sm:%s709]
  %vm711 = vcmask 1043458
  %v712 = vsel %vm711, %v710, %v707
  %s713 = scalar_lea.vmem %s0, 4294967289
  %s714 = smov 48
  %v715 = vld [vmem:[%s713] ss:$16 sm:%s714]
  %vm716 = vcmask 1045508
  %v717 = vsel %vm716, %v715, %v712
  %s718 = scalar_lea.vmem %s0, 4294967289
  %s719 = smov 192
  %v720 = vld [vmem:[%s718] ss:$16 sm:%s719]
  %vm721 = vcmask 1047558
  %v722 = vsel %vm721, %v720, %v717
  %723 = vrot.lane.b32.xlu0 %v722, 16
  %v724 = vpop.permute.xlu0 %723
  %vm725 = vcmask 261248
  %s726 = scalar_lea.vmem %s1, 32
  %727 = vst.msk [vmem:[%s726] ss:$-24 sm:$0x3] %vm725, %v724
  %s728 = scalar_lea.vmem %s1, 7
  %729 = vst.msk [vmem:[%s728] sm:$0xfc] %vm725, %v724
  %s730 = scalar_lea.vmem %s0, 265
  %s731 = smov 3
  %v732 = vld [vmem:[%s730] ss:$-144 sm:%s731]
  %s733 = scalar_lea.vmem %s0, 97
  %s734 = smov 12
  %v735 = vld [vmem:[%s733] ss:$16 sm:%s734]
  %vm736 = vcmask 1043458
  %v737 = vsel %vm736, %v735, %v732
  %s738 = scalar_lea.vmem %s0, 97
  %s739 = smov 48
  %v740 = vld [vmem:[%s738] ss:$16 sm:%s739]
  %vm741 = vcmask 1045508
  %v742 = vsel %vm741, %v740, %v737
  %s743 = scalar_lea.vmem %s0, 97
  %s744 = smov 192
  %v745 = vld [vmem:[%s743] ss:$16 sm:%s744]
  %vm746 = vcmask 1047558
  %v747 = vsel %vm746, %v745, %v742
  %748 = vrot.lane.b32.xlu0 %v747, 16
  %v749 = vpop.permute.xlu0 %748
  %vm750 = vcmask 261248
  %s751 = scalar_lea.vmem %s1, 40
  %752 = vst.msk [vmem:[%s751] ss:$-25 sm:$0x3] %vm750, %v749
  %s753 = scalar_lea.vmem %s1, 14
  %754 = vst.msk [vmem:[%s753] sm:$0xfc] %vm750, %v749
  %s755 = scalar_lea.vmem %s0, 225
  %s756 = smov 3
  %v757 = vld [vmem:[%s755] ss:$16 sm:%s756]
  %s758 = scalar_lea.vmem %s0, 105
  %s759 = smov 12
  %v760 = vld [vmem:[%s758] ss:$16 sm:%s759]
  %vm761 = vcmask 1043458
  %v762 = vsel %vm761, %v760, %v757
  %s763 = scalar_lea.vmem %s0, 105
  %s764 = smov 48
  %v765 = vld [vmem:[%s763] ss:$16 sm:%s764]
  %vm766 = vcmask 1045508
  %v767 = vsel %vm766, %v765, %v762
  %s768 = scalar_lea.vmem %s0, 105
  %s769 = smov 192
  %v770 = vld [vmem:[%s768] ss:$16 sm:%s769]
  %vm771 = vcmask 1047558
  %v772 = vsel %vm771, %v770, %v767
  %773 = vrot.lane.b32.xlu0 %v772, 16
  %v774 = vpop.permute.xlu0 %773
  %vm775 = vcmask 261248
  %s776 = scalar_lea.vmem %s1, 22
  %777 = vst.msk [vmem:[%s776] sm:$0xff] %vm775, %v774
  %s778 = scalar_lea.vmem %s0, 233
  %s779 = smov 3
  %v780 = vld [vmem:[%s778] ss:$16 sm:%s779]
  %781 = vrot.lane.b32.xlu0 %v780, 16
  %v782 = vpop.permute.xlu0 %781
  %vm783 = vcmask 261248
  %s784 = scalar_lea.vmem %s1, 30
  %785 = vst.msk [vmem:[%s784] sm:$0x3] %vm783, %v782

// kernel: forward.2
$region0: #{forward.2}
  #allocation0 [shape = 'u32[]', space=smem, size = 0x4, offset = 0x4, fixed_abs, tag = 'smem constant byte address 0x4 - core index']
  #allocation1 [shape = 'u32[144,128]{1,0:T(1,128)}', space=vmem, size = 0x12000, scoped, tag = 'internal scratch']
  %s0 = inlined_call_operand.vmem [shape: f32[4,2304], index: 0, kind: input, shape index: {}]
  %s1 = inlined_call_operand.vmem [shape: bf16[2304,384], index: 1, kind: input, shape index: {}]
  %s2 = inlined_call_operand.vmem [shape: f32[1,384], index: 2, kind: input, shape index: {}]
  %s3 = inlined_call_operand.vmem [shape: f32[4,384], index: 3, kind: output, shape index: {}]
  %s4 = sld [smem:[#allocation0]]
  $region22: #{forward.2} parent=0
    _
  %s6 = ssub.s32 1, %s4
  %s7 = scalar_select 0, %s6, %s4
  // Predicated region
  $region2: #{forward.2} parent=0 // pred_check
    _
  $region3: #{forward.2} parent=0 // pred_check_branch
    %9 = sbr.rel (0) target = $region5
  $region4: #{forward.2} parent=0 // pred_region
    _
  $region5: #{forward.2} parent=0 // pred_fallthru
    _
  // Predicated region
  $region6: #{forward.2} parent=0 // pred_check
    _
  $region7: #{forward.2} parent=0 // pred_check_branch
    %11 = sbr.rel (0) target = $region9
  $region8: #{forward.2} parent=0 // pred_region
    _
  $region9: #{forward.2} parent=0 // pred_fallthru
    _
  // Predicated region
  $region10: #{forward.2} parent=0 // pred_check
    _
  $region11: #{forward.2} parent=0 // pred_check_branch
    %13 = sbr.rel (0) target = $region13
  $region12: #{forward.2} parent=0 // pred_region
    _
  $region13: #{forward.2} parent=0 // pred_fallthru
    _
  %v15 = vld [vmem:[%s0] sm:$0xff]
  %v16 = vld [vmem:[%s0 + $0x8] sm:$0xff]
  %v17 = vld [vmem:[%s0 + $0x10] sm:$0xff]
  %v18 = vld [vmem:[%s0 + $0x18] sm:$0xff]
  %v19 = vld [vmem:[%s0 + $0x20] sm:$0xff]
  %v20 = vld [vmem:[%s0 + $0x28] sm:$0xff]
  %v21 = vld [vmem:[%s0 + $0x30] sm:$0xff]
  %v22 = vld [vmem:[%s0 + $0x38] sm:$0xff]
  %v23 = vld [vmem:[%s0 + $0x40] sm:$0xff]
  %v33 = vcombine.high %v15, %v15
  %v34 = vcombine.high %v16, %v16
  %v35 = vcombine.high %v17, %v17
  %v36 = vcombine.high %v18, %v18
  %v37 = vcombine.high %v19, %v19
  %v38 = vcombine.high %v20, %v20
  %v39 = vcombine.high %v21, %v21
  %v40 = vcombine.high %v22, %v22
  %v41 = vcombine.high %v23, %v23
  %v51 = vpack.c.bf16 %v15, %v15
  %v52 = vpack.c.bf16 %v33, %v33
  %v53 = vpack.c.bf16 %v16, %v16
  %v54 = vpack.c.bf16 %v34, %v34
  %v55 = vpack.c.bf16 %v17, %v17
  %v56 = vpack.c.bf16 %v35, %v35
  %v57 = vpack.c.bf16 %v18, %v18
  %v58 = vpack.c.bf16 %v36, %v36
  %v59 = vpack.c.bf16 %v19, %v19
  %v60 = vpack.c.bf16 %v37, %v37
  %v61 = vpack.c.bf16 %v20, %v20
  %v62 = vpack.c.bf16 %v38, %v38
  %v63 = vpack.c.bf16 %v21, %v21
  %v64 = vpack.c.bf16 %v39, %v39
  %v65 = vpack.c.bf16 %v22, %v22
  %v66 = vpack.c.bf16 %v40, %v40
  %v67 = vpack.c.bf16 %v23, %v23
  %v68 = vpack.c.bf16 %v41, %v41
  %v69 = vld [vmem:[%s1] sm:$0xff]
  %v70 = vld [vmem:[%s1 + $0x8] sm:$0xf]
  %v71 = vld [vmem:[%s1 + $0xc] sm:$0xff]
  %v72 = vld [vmem:[%s1 + $0x14] sm:$0xf]
  %v73 = vld [vmem:[%s1 + $0x18] sm:$0xff]
  %v74 = vld [vmem:[%s1 + $0x20] sm:$0xf]
  %v75 = vld [vmem:[%s1 + $0x24] sm:$0xff]
  %v76 = vld [vmem:[%s1 + $0x2c] sm:$0xf]
  %v77 = vld [vmem:[%s1 + $0x30] sm:$0xff]
  %v78 = vld [vmem:[%s1 + $0x38] sm:$0xf]
  %v79 = vld [vmem:[%s1 + $0x3c] sm:$0xff]
  %v80 = vld [vmem:[%s1 + $0x44] sm:$0xf]
  %v81 = vld [vmem:[%s1 + $0x48] sm:$0xff]
  %v82 = vld [vmem:[%s1 + $0x50] sm:$0xf]
  %v83 = vld [vmem:[%s1 + $0x54] sm:$0xff]
  %v84 = vld [vmem:[%s1 + $0x5c] sm:$0xf]
  %v85 = vld [vmem:[%s1 + $0x60] sm:$0xff]
  %v86 = vld [vmem:[%s1 + $0x68] sm:$0xf]
  %v87 = vld [vmem:[%s1 + $0x6c] sm:$0xff]
  %v88 = vld [vmem:[%s1 + $0x74] sm:$0xf]
  %v89 = vld [vmem:[%s1 + $0x78] sm:$0xff]
  %v90 = vld [vmem:[%s1 + $0x80] sm:$0xf]
  %v91 = vld [vmem:[%s1 + $0x84] sm:$0xff]
  %v92 = vld [vmem:[%s1 + $0x8c] sm:$0xf]
  %v93 = vld [vmem:[%s1 + $0x90] sm:$0xff]
  %v94 = vld [vmem:[%s1 + $0x98] sm:$0xf]
  %v95 = vld [vmem:[%s1 + $0x9c] sm:$0xff]
  %v96 = vld [vmem:[%s1 + $0xa4] sm:$0xf]
  %v97 = vld [vmem:[%s1 + $0xa8] sm:$0xff]
  %v98 = vld [vmem:[%s1 + $0xb0] sm:$0xf]
  %v99 = vld [vmem:[%s1 + $0xb4] sm:$0xff]
  %v100 = vld [vmem:[%s1 + $0xbc] sm:$0xf]
  %v101 = vld [vmem:[%s1 + $0xc0] sm:$0xff]
  %v102 = vld [vmem:[%s1 + $0xc8] sm:$0xf]
  %v103 = vld [vmem:[%s1 + $0xcc] sm:$0xff]
  %v104 = vld [vmem:[%s1 + $0xd4] sm:$0xf]
  %v105 = vld [vmem:[%s1 + $0xd8] sm:$0xff]
  %v106 = vld [vmem:[%s1 + $0xe0] sm:$0xf]
  %v107 = vld [vmem:[%s1 + $0xe4] sm:$0xff]
  %v108 = vld [vmem:[%s1 + $0xec] sm:$0xf]
  %v109 = vld [vmem:[%s1 + $0xf0] sm:$0xff]
  %v110 = vld [vmem:[%s1 + $0xf8] sm:$0xf]
  %v111 = vld [vmem:[%s1 + $0xfc] sm:$0xff]
  %v112 = vld [vmem:[%s1 + $0x104] sm:$0xf]
  %v113 = vld [vmem:[%s1 + $0x108] sm:$0xff]
  %v114 = vld [vmem:[%s1 + $0x110] sm:$0xf]
  %v115 = vld [vmem:[%s1 + $0x114] sm:$0xff]
  %v116 = vld [vmem:[%s1 + $0x11c] sm:$0xf]
  %v117 = vld [vmem:[%s1 + $0x120] sm:$0xff]
  %v118 = vld [vmem:[%s1 + $0x128] sm:$0xf]
  %v119 = vld [vmem:[%s1 + $0x12c] sm:$0xff]
  %v120 = vld [vmem:[%s1 + $0x134] sm:$0xf]
  %v121 = vld [vmem:[%s1 + $0x138] sm:$0xff]
  %v122 = vld [vmem:[%s1 + $0x140] sm:$0xf]
  %v123 = vld [vmem:[%s1 + $0x144] sm:$0xff]
  %v124 = vld [vmem:[%s1 + $0x14c] sm:$0xf]
  %v125 = vld [vmem:[%s1 + $0x150] sm:$0xff]
  %v126 = vld [vmem:[%s1 + $0x158] sm:$0xf]
  %v127 = vld [vmem:[%s1 + $0x15c] sm:$0xff]
  %v128 = vld [vmem:[%s1 + $0x164] sm:$0xf]
  %v129 = vld [vmem:[%s1 + $0x168] sm:$0xff]
  %v130 = vld [vmem:[%s1 + $0x170] sm:$0xf]
  %v131 = vld [vmem:[%s1 + $0x174] sm:$0xff]
  %v132 = vld [vmem:[%s1 + $0x17c] sm:$0xf]
  %v133 = vld [vmem:[%s1 + $0x180] sm:$0xff]
  %v134 = vld [vmem:[%s1 + $0x188] sm:$0xf]
  %v135 = vld [vmem:[%s1 + $0x18c] sm:$0xff]
  %v136 = vld [vmem:[%s1 + $0x194] sm:$0xf]
  %v137 = vld [vmem:[%s1 + $0x198] sm:$0xff]
  %v138 = vld [vmem:[%s1 + $0x1a0] sm:$0xf]
  %v139 = vld [vmem:[%s1 + $0x1a4] sm:$0xff]
  %v140 = vld [vmem:[%s1 + $0x1ac] sm:$0xf]
  %v141 = vld [vmem:[%s1 + $0x1b0] sm:$0xff]
  %v142 = vld [vmem:[%s1 + $0x1b8] sm:$0xf]
  %v143 = vld [vmem:[%s1 + $0x1bc] sm:$0xff]
  %v144 = vld [vmem:[%s1 + $0x1c4] sm:$0xf]
  %v145 = vld [vmem:[%s1 + $0x1c8] sm:$0xff]
  %v146 = vld [vmem:[%s1 + $0x1d0] sm:$0xf]
  %v147 = vld [vmem:[%s1 + $0x1d4] sm:$0xff]
  %v148 = vld [vmem:[%s1 + $0x1dc] sm:$0xf]
  %v149 = vld [vmem:[%s1 + $0x1e0] sm:$0xff]
  %v150 = vld [vmem:[%s1 + $0x1e8] sm:$0xf]
  %v151 = vld [vmem:[%s1 + $0x1ec] sm:$0xff]
  %v152 = vld [vmem:[%s1 + $0x1f4] sm:$0xf]
  %v153 = vld [vmem:[%s1 + $0x1f8] sm:$0xff]
  %v154 = vld [vmem:[%s1 + $0x200] sm:$0xf]
  %v155 = vld [vmem:[%s1 + $0x204] sm:$0xff]
  %v156 = vld [vmem:[%s1 + $0x20c] sm:$0xf]
  %v157 = vld [vmem:[%s1 + $0x210] sm:$0xff]
  %v158 = vld [vmem:[%s1 + $0x218] sm:$0xf]
  %v159 = vld [vmem:[%s1 + $0x21c] sm:$0xff]
  %v160 = vld [vmem:[%s1 + $0x224] sm:$0xf]
  %v161 = vld [vmem:[%s1 + $0x228] sm:$0xff]
  %v162 = vld [vmem:[%s1 + $0x230] sm:$0xf]
  %v163 = vld [vmem:[%s1 + $0x234] sm:$0xff]
  %v164 = vld [vmem:[%s1 + $0x23c] sm:$0xf]
  %v165 = vld [vmem:[%s1 + $0x240] sm:$0xff]
  %v166 = vld [vmem:[%s1 + $0x248] sm:$0xf]
  %v167 = vld [vmem:[%s1 + $0x24c] sm:$0xff]
  %v168 = vld [vmem:[%s1 + $0x254] sm:$0xf]
  %v169 = vld [vmem:[%s1 + $0x258] sm:$0xff]
  %v170 = vld [vmem:[%s1 + $0x260] sm:$0xf]
  %v171 = vld [vmem:[%s1 + $0x264] sm:$0xff]
  %v172 = vld [vmem:[%s1 + $0x26c] sm:$0xf]
  %v173 = vld [vmem:[%s1 + $0x270] sm:$0xff]
  %v174 = vld [vmem:[%s1 + $0x278] sm:$0xf]
  %v175 = vld [vmem:[%s1 + $0x27c] sm:$0xff]
  %v176 = vld [vmem:[%s1 + $0x284] sm:$0xf]
  %v177 = vld [vmem:[%s1 + $0x288] sm:$0xff]
  %v178 = vld [vmem:[%s1 + $0x290] sm:$0xf]
  %v179 = vld [vmem:[%s1 + $0x294] sm:$0xff]
  %v180 = vld [vmem:[%s1 + $0x29c] sm:$0xf]
  %v181 = vld [vmem:[%s1 + $0x2a0] sm:$0xff]
  %v182 = vld [vmem:[%s1 + $0x2a8] sm:$0xf]
  %v183 = vld [vmem:[%s1 + $0x2ac] sm:$0xff]
  %v184 = vld [vmem:[%s1 + $0x2b4] sm:$0xf]
  %v185 = vld [vmem:[%s1 + $0x2b8] sm:$0xff]
  %v186 = vld [vmem:[%s1 + $0x2c0] sm:$0xf]
  %v187 = vld [vmem:[%s1 + $0x2c4] sm:$0xff]
  %v188 = vld [vmem:[%s1 + $0x2cc] sm:$0xf]
  %v189 = vld [vmem:[%s1 + $0x2d0] sm:$0xff]
  %v190 = vld [vmem:[%s1 + $0x2d8] sm:$0xf]
  %v191 = vld [vmem:[%s1 + $0x2dc] sm:$0xff]
  %v192 = vld [vmem:[%s1 + $0x2e4] sm:$0xf]
  %v193 = vld [vmem:[%s1 + $0x2e8] sm:$0xff]
  %v194 = vld [vmem:[%s1 + $0x2f0] sm:$0xf]
  %v195 = vld [vmem:[%s1 + $0x2f4] sm:$0xff]
  %v196 = vld [vmem:[%s1 + $0x2fc] sm:$0xf]
  %v197 = vld [vmem:[%s1 + $0x300] sm:$0xff]
  %v198 = vld [vmem:[%s1 + $0x308] sm:$0xf]
  %v199 = vld [vmem:[%s1 + $0x30c] sm:$0xff]
  %v200 = vld [vmem:[%s1 + $0x314] sm:$0xf]
  %v201 = vld [vmem:[%s1 + $0x318] sm:$0xff]
  %v202 = vld [vmem:[%s1 + $0x320] sm:$0xf]
  %v203 = vld [vmem:[%s1 + $0x324] sm:$0xff]
  %v204 = vld [vmem:[%s1 + $0x32c] sm:$0xf]
  %v205 = vld [vmem:[%s1 + $0x330] sm:$0xff]
  %v206 = vld [vmem:[%s1 + $0x338] sm:$0xf]
  %v207 = vld [vmem:[%s1 + $0x33c] sm:$0xff]
  %v208 = vld [vmem:[%s1 + $0x344] sm:$0xf]
  %v209 = vld [vmem:[%s1 + $0x348] sm:$0xff]
  %v210 = vld [vmem:[%s1 + $0x350] sm:$0xf]
  %v211 = vld [vmem:[%s1 + $0x354] sm:$0xff]
  %v212 = vld [vmem:[%s1 + $0x35c] sm:$0xf]
  %v213 = vld [vmem:[%s1 + $0x360] sm:$0xff]
  %v214 = vld [vmem:[%s1 + $0x368] sm:$0xf]
  %v215 = vld [vmem:[%s1 + $0x36c] sm:$0xff]
  %v216 = vld [vmem:[%s1 + $0x374] sm:$0xf]
  %v217 = vld [vmem:[%s1 + $0x378] sm:$0xff]
  %v218 = vld [vmem:[%s1 + $0x380] sm:$0xf]
  %v219 = vld [vmem:[%s1 + $0x384] sm:$0xff]
  %v220 = vld [vmem:[%s1 + $0x38c] sm:$0xf]
  %v221 = vld [vmem:[%s1 + $0x390] sm:$0xff]
  %v222 = vld [vmem:[%s1 + $0x398] sm:$0xf]
  %v223 = vld [vmem:[%s1 + $0x39c] sm:$0xff]
  %v224 = vld [vmem:[%s1 + $0x3a4] sm:$0xf]
  %v225 = vld [vmem:[%s1 + $0x3a8] sm:$0xff]
  %v226 = vld [vmem:[%s1 + $0x3b0] sm:$0xf]
  %v227 = vld [vmem:[%s1 + $0x3b4] sm:$0xff]
  %v228 = vld [vmem:[%s1 + $0x3bc] sm:$0xf]
  %v229 = vld [vmem:[%s1 + $0x3c0] sm:$0xff]
  %v230 = vld [vmem:[%s1 + $0x3c8] sm:$0xf]
  %v231 = vld [vmem:[%s1 + $0x3cc] sm:$0xff]
  %v232 = vld [vmem:[%s1 + $0x3d4] sm:$0xf]
  %v233 = vld [vmem:[%s1 + $0x3d8] sm:$0xff]
  %v234 = vld [vmem:[%s1 + $0x3e0] sm:$0xf]
  %v235 = vld [vmem:[%s1 + $0x3e4] sm:$0xff]
  %v236 = vld [vmem:[%s1 + $0x3ec] sm:$0xf]
  %v237 = vld [vmem:[%s1 + $0x3f0] sm:$0xff]
  %v238 = vld [vmem:[%s1 + $0x3f8] sm:$0xf]
  %v239 = vld [vmem:[%s1 + $0x3fc] sm:$0xff]
  %v240 = vld [vmem:[%s1 + $0x404] sm:$0xf]
  %v241 = vld [vmem:[%s1 + $0x408] sm:$0xff]
  %v242 = vld [vmem:[%s1 + $0x410] sm:$0xf]
  %v243 = vld [vmem:[%s1 + $0x414] sm:$0xff]
  %v244 = vld [vmem:[%s1 + $0x41c] sm:$0xf]
  %v245 = vld [vmem:[%s1 + $0x420] sm:$0xff]
  %v246 = vld [vmem:[%s1 + $0x428] sm:$0xf]
  %v247 = vld [vmem:[%s1 + $0x42c] sm:$0xff]
  %v248 = vld [vmem:[%s1 + $0x434] sm:$0xf]
  %v249 = vld [vmem:[%s1 + $0x438] sm:$0xff]
  %v250 = vld [vmem:[%s1 + $0x440] sm:$0xf]
  %v251 = vld [vmem:[%s1 + $0x444] sm:$0xff]
  %v252 = vld [vmem:[%s1 + $0x44c] sm:$0xf]
  %v253 = vld [vmem:[%s1 + $0x450] sm:$0xff]
  %v254 = vld [vmem:[%s1 + $0x458] sm:$0xf]
  %v255 = vld [vmem:[%s1 + $0x45c] sm:$0xff]
  %v256 = vld [vmem:[%s1 + $0x464] sm:$0xf]
  %v257 = vld [vmem:[%s1 + $0x468] sm:$0xff]
  %v258 = vld [vmem:[%s1 + $0x470] sm:$0xf]
  %v259 = vld [vmem:[%s1 + $0x474] sm:$0xff]
  %v260 = vld [vmem:[%s1 + $0x47c] sm:$0xf]
  %v261 = vld [vmem:[%s1 + $0x480] sm:$0xff]
  %v262 = vld [vmem:[%s1 + $0x488] sm:$0xf]
  %v263 = vld [vmem:[%s1 + $0x48c] sm:$0xff]
  %v264 = vld [vmem:[%s1 + $0x494] sm:$0xf]
  %v265 = vld [vmem:[%s1 + $0x498] sm:$0xff]
  %v266 = vld [vmem:[%s1 + $0x4a0] sm:$0xf]
  %v267 = vld [vmem:[%s1 + $0x4a4] sm:$0xff]
  %v268 = vld [vmem:[%s1 + $0x4ac] sm:$0xf]
  %v269 = vld [vmem:[%s1 + $0x4b0] sm:$0xff]
  %v270 = vld [vmem:[%s1 + $0x4b8] sm:$0xf]
  %v271 = vld [vmem:[%s1 + $0x4bc] sm:$0xff]
  %v272 = vld [vmem:[%s1 + $0x4c4] sm:$0xf]
  %v273 = vld [vmem:[%s1 + $0x4c8] sm:$0xff]
  %v274 = vld [vmem:[%s1 + $0x4d0] sm:$0xf]
  %v275 = vld [vmem:[%s1 + $0x4d4] sm:$0xff]
  %v276 = vld [vmem:[%s1 + $0x4dc] sm:$0xf]
  %v277 = vld [vmem:[%s1 + $0x4e0] sm:$0xff]
  %v278 = vld [vmem:[%s1 + $0x4e8] sm:$0xf]
  %v279 = vld [vmem:[%s1 + $0x4ec] sm:$0xff]
  %v280 = vld [vmem:[%s1 + $0x4f4] sm:$0xf]
  %v281 = vld [vmem:[%s1 + $0x4f8] sm:$0xff]
  %v282 = vld [vmem:[%s1 + $0x500] sm:$0xf]
  %v283 = vld [vmem:[%s1 + $0x504] sm:$0xff]
  %v284 = vld [vmem:[%s1 + $0x50c] sm:$0xf]
  %v285 = vld [vmem:[%s1 + $0x510] sm:$0xff]
  %v286 = vld [vmem:[%s1 + $0x518] sm:$0xf]
  %v287 = vld [vmem:[%s1 + $0x51c] sm:$0xff]
  %v288 = vld [vmem:[%s1 + $0x524] sm:$0xf]
  %v289 = vld [vmem:[%s1 + $0x528] sm:$0xff]
  %v290 = vld [vmem:[%s1 + $0x530] sm:$0xf]
  %v291 = vld [vmem:[%s1 + $0x534] sm:$0xff]
  %v292 = vld [vmem:[%s1 + $0x53c] sm:$0xf]
  %v293 = vld [vmem:[%s1 + $0x540] sm:$0xff]
  %v294 = vld [vmem:[%s1 + $0x548] sm:$0xf]
  %v295 = vld [vmem:[%s1 + $0x54c] sm:$0xff]
  %v296 = vld [vmem:[%s1 + $0x554] sm:$0xf]
  %v297 = vld [vmem:[%s1 + $0x558] sm:$0xff]
  %v298 = vld [vmem:[%s1 + $0x560] sm:$0xf]
  %v299 = vld [vmem:[%s1 + $0x564] sm:$0xff]
  %v300 = vld [vmem:[%s1 + $0x56c] sm:$0xf]
  %v301 = vld [vmem:[%s1 + $0x570] sm:$0xff]
  %v302 = vld [vmem:[%s1 + $0x578] sm:$0xf]
  %v303 = vld [vmem:[%s1 + $0x57c] sm:$0xff]
  %v304 = vld [vmem:[%s1 + $0x584] sm:$0xf]
  %v305 = vld [vmem:[%s1 + $0x588] sm:$0xff]
  %v306 = vld [vmem:[%s1 + $0x590] sm:$0xf]
  %v307 = vld [vmem:[%s1 + $0x594] sm:$0xff]
  %v308 = vld [vmem:[%s1 + $0x59c] sm:$0xf]
  %v309 = vld [vmem:[%s1 + $0x5a0] sm:$0xff]
  %v310 = vld [vmem:[%s1 + $0x5a8] sm:$0xf]
  %v311 = vld [vmem:[%s1 + $0x5ac] sm:$0xff]
  %v312 = vld [vmem:[%s1 + $0x5b4] sm:$0xf]
  %v313 = vld [vmem:[%s1 + $0x5b8] sm:$0xff]
  %v314 = vld [vmem:[%s1 + $0x5c0] sm:$0xf]
  %v315 = vld [vmem:[%s1 + $0x5c4] sm:$0xff]
  %v316 = vld [vmem:[%s1 + $0x5cc] sm:$0xf]
  %v317 = vld [vmem:[%s1 + $0x5d0] sm:$0xff]
  %v318 = vld [vmem:[%s1 + $0x5d8] sm:$0xf]
  %v319 = vld [vmem:[%s1 + $0x5dc] sm:$0xff]
  %v320 = vld [vmem:[%s1 + $0x5e4] sm:$0xf]
  %v321 = vld [vmem:[%s1 + $0x5e8] sm:$0xff]
  %v322 = vld [vmem:[%s1 + $0x5f0] sm:$0xf]
  %v323 = vld [vmem:[%s1 + $0x5f4] sm:$0xff]
  %v324 = vld [vmem:[%s1 + $0x5fc] sm:$0xf]
  %v325 = vld [vmem:[%s1 + $0x600] sm:$0xff]
  %v326 = vld [vmem:[%s1 + $0x608] sm:$0xf]
  %v327 = vld [vmem:[%s1 + $0x60c] sm:$0xff]
  %v328 = vld [vmem:[%s1 + $0x614] sm:$0xf]
  %v329 = vld [vmem:[%s1 + $0x618] sm:$0xff]
  %v330 = vld [vmem:[%s1 + $0x620] sm:$0xf]
  %v331 = vld [vmem:[%s1 + $0x624] sm:$0xff]
  %v332 = vld [vmem:[%s1 + $0x62c] sm:$0xf]
  %v333 = vld [vmem:[%s1 + $0x630] sm:$0xff]
  %v334 = vld [vmem:[%s1 + $0x638] sm:$0xf]
  %v335 = vld [vmem:[%s1 + $0x63c] sm:$0xff]
  %v336 = vld [vmem:[%s1 + $0x644] sm:$0xf]
  %v337 = vld [vmem:[%s1 + $0x648] sm:$0xff]
  %v338 = vld [vmem:[%s1 + $0x650] sm:$0xf]
  %v339 = vld [vmem:[%s1 + $0x654] sm:$0xff]
  %v340 = vld [vmem:[%s1 + $0x65c] sm:$0xf]
  %v341 = vld [vmem:[%s1 + $0x660] sm:$0xff]
  %v342 = vld [vmem:[%s1 + $0x668] sm:$0xf]
  %v343 = vld [vmem:[%s1 + $0x66c] sm:$0xff]
  %v344 = vld [vmem:[%s1 + $0x674] sm:$0xf]
  %v345 = vld [vmem:[%s1 + $0x678] sm:$0xff]
  %v346 = vld [vmem:[%s1 + $0x680] sm:$0xf]
  %v347 = vld [vmem:[%s1 + $0x684] sm:$0xff]
  %v348 = vld [vmem:[%s1 + $0x68c] sm:$0xf]
  %v349 = vld [vmem:[%s1 + $0x690] sm:$0xff]
  %v350 = vld [vmem:[%s1 + $0x698] sm:$0xf]
  %v351 = vld [vmem:[%s1 + $0x69c] sm:$0xff]
  %v352 = vld [vmem:[%s1 + $0x6a4] sm:$0xf]
  %v353 = vld [vmem:[%s1 + $0x6a8] sm:$0xff]
  %v354 = vld [vmem:[%s1 + $0x6b0] sm:$0xf]
  %v355 = vld [vmem:[%s1 + $0x6b4] sm:$0xff]
  %v356 = vld [vmem:[%s1 + $0x6bc] sm:$0xf]
  %v357 = vld [vmem:[%s1 + $0x6c0] sm:$0xff]
  %v358 = vld [vmem:[%s1 + $0x6c8] sm:$0xf]
  %v359 = vld [vmem:[%s1 + $0x6cc] sm:$0xff]
  %v360 = vld [vmem:[%s1 + $0x6d4] sm:$0xf]
  %v361 = vld [vmem:[%s1 + $0x6d8] sm:$0xff]
  %v362 = vld [vmem:[%s1 + $0x6e0] sm:$0xf]
  %v363 = vld [vmem:[%s1 + $0x6e4] sm:$0xff]
  %v364 = vld [vmem:[%s1 + $0x6ec] sm:$0xf]
  %v365 = vld [vmem:[%s1 + $0x6f0] sm:$0xff]
  %v366 = vld [vmem:[%s1 + $0x6f8] sm:$0xf]
  %v367 = vld [vmem:[%s1 + $0x6fc] sm:$0xff]
  %v368 = vld [vmem:[%s1 + $0x704] sm:$0xf]
  %v369 = vld [vmem:[%s1 + $0x708] sm:$0xff]
  %v370 = vld [vmem:[%s1 + $0x710] sm:$0xf]
  %v371 = vld [vmem:[%s1 + $0x714] sm:$0xff]
  %v372 = vld [vmem:[%s1 + $0x71c] sm:$0xf]
  %v373 = vld [vmem:[%s1 + $0x720] sm:$0xff]
  %v374 = vld [vmem:[%s1 + $0x728] sm:$0xf]
  %v375 = vld [vmem:[%s1 + $0x72c] sm:$0xff]
  %v376 = vld [vmem:[%s1 + $0x734] sm:$0xf]
  %v377 = vld [vmem:[%s1 + $0x738] sm:$0xff]
  %v378 = vld [vmem:[%s1 + $0x740] sm:$0xf]
  %v379 = vld [vmem:[%s1 + $0x744] sm:$0xff]
  %v380 = vld [vmem:[%s1 + $0x74c] sm:$0xf]
  %v381 = vld [vmem:[%s1 + $0x750] sm:$0xff]
  %v382 = vld [vmem:[%s1 + $0x758] sm:$0xf]
  %v383 = vld [vmem:[%s1 + $0x75c] sm:$0xff]
  %v384 = vld [vmem:[%s1 + $0x764] sm:$0xf]
  %v385 = vld [vmem:[%s1 + $0x768] sm:$0xff]
  %v386 = vld [vmem:[%s1 + $0x770] sm:$0xf]
  %v387 = vld [vmem:[%s1 + $0x774] sm:$0xff]
  %v388 = vld [vmem:[%s1 + $0x77c] sm:$0xf]
  %v389 = vld [vmem:[%s1 + $0x780] sm:$0xff]
  %v390 = vld [vmem:[%s1 + $0x788] sm:$0xf]
  %v391 = vld [vmem:[%s1 + $0x78c] sm:$0xff]
  %v392 = vld [vmem:[%s1 + $0x794] sm:$0xf]
  %v393 = vld [vmem:[%s1 + $0x798] sm:$0xff]
  %v394 = vld [vmem:[%s1 + $0x7a0] sm:$0xf]
  %v395 = vld [vmem:[%s1 + $0x7a4] sm:$0xff]
  %v396 = vld [vmem:[%s1 + $0x7ac] sm:$0xf]
  %v397 = vld [vmem:[%s1 + $0x7b0] sm:$0xff]
  %v398 = vld [vmem:[%s1 + $0x7b8] sm:$0xf]
  %v399 = vld [vmem:[%s1 + $0x7bc] sm:$0xff]
  %v400 = vld [vmem:[%s1 + $0x7c4] sm:$0xf]
  %v401 = vld [vmem:[%s1 + $0x7c8] sm:$0xff]
  %v402 = vld [vmem:[%s1 + $0x7d0] sm:$0xf]
  %v403 = vld [vmem:[%s1 + $0x7d4] sm:$0xff]
  %v404 = vld [vmem:[%s1 + $0x7dc] sm:$0xf]
  %v405 = vld [vmem:[%s1 + $0x7e0] sm:$0xff]
  %v406 = vld [vmem:[%s1 + $0x7e8] sm:$0xf]
  %v407 = vld [vmem:[%s1 + $0x7ec] sm:$0xff]
  %v408 = vld [vmem:[%s1 + $0x7f4] sm:$0xf]
  %v409 = vld [vmem:[%s1 + $0x7f8] sm:$0xff]
  %v410 = vld [vmem:[%s1 + $0x800] sm:$0xf]
  %v411 = vld [vmem:[%s1 + $0x804] sm:$0xff]
  %v412 = vld [vmem:[%s1 + $0x80c] sm:$0xf]
  %v413 = vld [vmem:[%s1 + $0x810] sm:$0xff]
  %v414 = vld [vmem:[%s1 + $0x818] sm:$0xf]
  %v415 = vld [vmem:[%s1 + $0x81c] sm:$0xff]
  %v416 = vld [vmem:[%s1 + $0x824] sm:$0xf]
  %v417 = vld [vmem:[%s1 + $0x828] sm:$0xff]
  %v418 = vld [vmem:[%s1 + $0x830] sm:$0xf]
  %v419 = vld [vmem:[%s1 + $0x834] sm:$0xff]
  %v420 = vld [vmem:[%s1 + $0x83c] sm:$0xf]
  %v421 = vld [vmem:[%s1 + $0x840] sm:$0xff]
  %v422 = vld [vmem:[%s1 + $0x848] sm:$0xf]
  %v423 = vld [vmem:[%s1 + $0x84c] sm:$0xff]
  %v424 = vld [vmem:[%s1 + $0x854] sm:$0xf]
  %v425 = vld [vmem:[%s1 + $0x858] sm:$0xff]
  %v426 = vld [vmem:[%s1 + $0x860] sm:$0xf]
  %v427 = vld [vmem:[%s1 + $0x864] sm:$0xff]
  %v428 = vld [vmem:[%s1 + $0x86c] sm:$0xf]
  %v429 = vld [vmem:[%s1 + $0x870] sm:$0xff]
  %v430 = vld [vmem:[%s1 + $0x878] sm:$0xf]
  %v431 = vld [vmem:[%s1 + $0x87c] sm:$0xff]
  %v432 = vld [vmem:[%s1 + $0x884] sm:$0xf]
  %v433 = vld [vmem:[%s1 + $0x888] sm:$0xff]
  %v434 = vld [vmem:[%s1 + $0x890] sm:$0xf]
  %v435 = vld [vmem:[%s1 + $0x894] sm:$0xff]
  %v436 = vld [vmem:[%s1 + $0x89c] sm:$0xf]
  %v437 = vld [vmem:[%s1 + $0x8a0] sm:$0xff]
  %v438 = vld [vmem:[%s1 + $0x8a8] sm:$0xf]
  %v439 = vld [vmem:[%s1 + $0x8ac] sm:$0xff]
  %v440 = vld [vmem:[%s1 + $0x8b4] sm:$0xf]
  %v441 = vld [vmem:[%s1 + $0x8b8] sm:$0xff]
  %v442 = vld [vmem:[%s1 + $0x8c0] sm:$0xf]
  %v443 = vld [vmem:[%s1 + $0x8c4] sm:$0xff]
  %v444 = vld [vmem:[%s1 + $0x8cc] sm:$0xf]
  %v445 = vld [vmem:[%s1 + $0x8d0] sm:$0xff]
  %v446 = vld [vmem:[%s1 + $0x8d8] sm:$0xf]
  %v447 = vld [vmem:[%s1 + $0x8dc] sm:$0xff]
  %v448 = vld [vmem:[%s1 + $0x8e4] sm:$0xf]
  %v449 = vld [vmem:[%s1 + $0x8e8] sm:$0xff]
  %v450 = vld [vmem:[%s1 + $0x8f0] sm:$0xf]
  %v451 = vld [vmem:[%s1 + $0x8f4] sm:$0xff]
  %v452 = vld [vmem:[%s1 + $0x8fc] sm:$0xf]
  %v453 = vld [vmem:[%s1 + $0x900] sm:$0xff]
  %v454 = vld [vmem:[%s1 + $0x908] sm:$0xf]
  %v455 = vld [vmem:[%s1 + $0x90c] sm:$0xff]
  %v456 = vld [vmem:[%s1 + $0x914] sm:$0xf]
  %v457 = vld [vmem:[%s1 + $0x918] sm:$0xff]
  %v458 = vld [vmem:[%s1 + $0x920] sm:$0xf]
  %v459 = vld [vmem:[%s1 + $0x924] sm:$0xff]
  %v460 = vld [vmem:[%s1 + $0x92c] sm:$0xf]
  %v461 = vld [vmem:[%s1 + $0x930] sm:$0xff]
  %v462 = vld [vmem:[%s1 + $0x938] sm:$0xf]
  %v463 = vld [vmem:[%s1 + $0x93c] sm:$0xff]
  %v464 = vld [vmem:[%s1 + $0x944] sm:$0xf]
  %v465 = vld [vmem:[%s1 + $0x948] sm:$0xff]
  %v466 = vld [vmem:[%s1 + $0x950] sm:$0xf]
  %v467 = vld [vmem:[%s1 + $0x954] sm:$0xff]
  %v468 = vld [vmem:[%s1 + $0x95c] sm:$0xf]
  %v469 = vld [vmem:[%s1 + $0x960] sm:$0xff]
  %v470 = vld [vmem:[%s1 + $0x968] sm:$0xf]
  %v471 = vld [vmem:[%s1 + $0x96c] sm:$0xff]
  %v472 = vld [vmem:[%s1 + $0x974] sm:$0xf]
  %v473 = vld [vmem:[%s1 + $0x978] sm:$0xff]
  %v474 = vld [vmem:[%s1 + $0x980] sm:$0xf]
  %v475 = vld [vmem:[%s1 + $0x984] sm:$0xff]
  %v476 = vld [vmem:[%s1 + $0x98c] sm:$0xf]
  %v477 = vld [vmem:[%s1 + $0x990] sm:$0xff]
  %v478 = vld [vmem:[%s1 + $0x998] sm:$0xf]
  %v479 = vld [vmem:[%s1 + $0x99c] sm:$0xff]
  %v480 = vld [vmem:[%s1 + $0x9a4] sm:$0xf]
  %v481 = vld [vmem:[%s1 + $0x9a8] sm:$0xff]
  %v482 = vld [vmem:[%s1 + $0x9b0] sm:$0xf]
  %v483 = vld [vmem:[%s1 + $0x9b4] sm:$0xff]
  %v484 = vld [vmem:[%s1 + $0x9bc] sm:$0xf]
  %v485 = vld [vmem:[%s1 + $0x9c0] sm:$0xff]
  %v486 = vld [vmem:[%s1 + $0x9c8] sm:$0xf]
  %v487 = vld [vmem:[%s1 + $0x9cc] sm:$0xff]
  %v488 = vld [vmem:[%s1 + $0x9d4] sm:$0xf]
  %v489 = vld [vmem:[%s1 + $0x9d8] sm:$0xff]
  %v490 = vld [vmem:[%s1 + $0x9e0] sm:$0xf]
  %v491 = vld [vmem:[%s1 + $0x9e4] sm:$0xff]
  %v492 = vld [vmem:[%s1 + $0x9ec] sm:$0xf]
  %v493 = vld [vmem:[%s1 + $0x9f0] sm:$0xff]
  %v494 = vld [vmem:[%s1 + $0x9f8] sm:$0xf]
  %v495 = vld [vmem:[%s1 + $0x9fc] sm:$0xff]
  %v496 = vld [vmem:[%s1 + $0xa04] sm:$0xf]
  %v497 = vld [vmem:[%s1 + $0xa08] sm:$0xff]
  %v498 = vld [vmem:[%s1 + $0xa10] sm:$0xf]
  %v499 = vld [vmem:[%s1 + $0xa14] sm:$0xff]
  %v500 = vld [vmem:[%s1 + $0xa1c] sm:$0xf]
  %v501 = vld [vmem:[%s1 + $0xa20] sm:$0xff]
  %v502 = vld [vmem:[%s1 + $0xa28] sm:$0xf]
  %v503 = vld [vmem:[%s1 + $0xa2c] sm:$0xff]
  %v504 = vld [vmem:[%s1 + $0xa34] sm:$0xf]
  %v505 = vld [vmem:[%s1 + $0xa38] sm:$0xff]
  %v506 = vld [vmem:[%s1 + $0xa40] sm:$0xf]
  %v507 = vld [vmem:[%s1 + $0xa44] sm:$0xff]
  %v508 = vld [vmem:[%s1 + $0xa4c] sm:$0xf]
  %v509 = vld [vmem:[%s1 + $0xa50] sm:$0xff]
  %v510 = vld [vmem:[%s1 + $0xa58] sm:$0xf]
  %v511 = vld [vmem:[%s1 + $0xa5c] sm:$0xff]
  %v512 = vld [vmem:[%s1 + $0xa64] sm:$0xf]
  %v513 = vld [vmem:[%s1 + $0xa68] sm:$0xff]
  %v514 = vld [vmem:[%s1 + $0xa70] sm:$0xf]
  %v515 = vld [vmem:[%s1 + $0xa74] sm:$0xff]
  %v516 = vld [vmem:[%s1 + $0xa7c] sm:$0xf]
  %v517 = vld [vmem:[%s1 + $0xa80] sm:$0xff]
  %v518 = vld [vmem:[%s1 + $0xa88] sm:$0xf]
  %v519 = vld [vmem:[%s1 + $0xa8c] sm:$0xff]
  %v520 = vld [vmem:[%s1 + $0xa94] sm:$0xf]
  %v521 = vld [vmem:[%s1 + $0xa98] sm:$0xff]
  %v522 = vld [vmem:[%s1 + $0xaa0] sm:$0xf]
  %v523 = vld [vmem:[%s1 + $0xaa4] sm:$0xff]
  %v524 = vld [vmem:[%s1 + $0xaac] sm:$0xf]
  %v525 = vld [vmem:[%s1 + $0xab0] sm:$0xff]
  %v526 = vld [vmem:[%s1 + $0xab8] sm:$0xf]
  %v527 = vld [vmem:[%s1 + $0xabc] sm:$0xff]
  %v528 = vld [vmem:[%s1 + $0xac4] sm:$0xf]
  %v529 = vld [vmem:[%s1 + $0xac8] sm:$0xff]
  %v530 = vld [vmem:[%s1 + $0xad0] sm:$0xf]
  %v531 = vld [vmem:[%s1 + $0xad4] sm:$0xff]
  %v532 = vld [vmem:[%s1 + $0xadc] sm:$0xf]
  %v533 = vld [vmem:[%s1 + $0xae0] sm:$0xff]
  %v534 = vld [vmem:[%s1 + $0xae8] sm:$0xf]
  %v535 = vld [vmem:[%s1 + $0xaec] sm:$0xff]
  %v536 = vld [vmem:[%s1 + $0xaf4] sm:$0xf]
  %v537 = vld [vmem:[%s1 + $0xaf8] sm:$0xff]
  %v538 = vld [vmem:[%s1 + $0xb00] sm:$0xf]
  %v539 = vld [vmem:[%s1 + $0xb04] sm:$0xff]
  %v540 = vld [vmem:[%s1 + $0xb0c] sm:$0xf]
  %v541 = vld [vmem:[%s1 + $0xb10] sm:$0xff]
  %v542 = vld [vmem:[%s1 + $0xb18] sm:$0xf]
  %v543 = vld [vmem:[%s1 + $0xb1c] sm:$0xff]
  %v544 = vld [vmem:[%s1 + $0xb24] sm:$0xf]
  %v545 = vld [vmem:[%s1 + $0xb28] sm:$0xff]
  %v546 = vld [vmem:[%s1 + $0xb30] sm:$0xf]
  %v547 = vld [vmem:[%s1 + $0xb34] sm:$0xff]
  %v548 = vld [vmem:[%s1 + $0xb3c] sm:$0xf]
  %v549 = vld [vmem:[%s1 + $0xb40] sm:$0xff]
  %v550 = vld [vmem:[%s1 + $0xb48] sm:$0xf]
  %v551 = vld [vmem:[%s1 + $0xb4c] sm:$0xff]
  %v552 = vld [vmem:[%s1 + $0xb54] sm:$0xf]
  %v553 = vld [vmem:[%s1 + $0xb58] sm:$0xff]
  %v554 = vld [vmem:[%s1 + $0xb60] sm:$0xf]
  %v555 = vld [vmem:[%s1 + $0xb64] sm:$0xff]
  %v556 = vld [vmem:[%s1 + $0xb6c] sm:$0xf]
  %v557 = vld [vmem:[%s1 + $0xb70] sm:$0xff]
  %v558 = vld [vmem:[%s1 + $0xb78] sm:$0xf]
  %v559 = vld [vmem:[%s1 + $0xb7c] sm:$0xff]
  %v560 = vld [vmem:[%s1 + $0xb84] sm:$0xf]
  %v561 = vld [vmem:[%s1 + $0xb88] sm:$0xff]
  %v562 = vld [vmem:[%s1 + $0xb90] sm:$0xf]
  %v563 = vld [vmem:[%s1 + $0xb94] sm:$0xff]
  %v564 = vld [vmem:[%s1 + $0xb9c] sm:$0xf]
  %v565 = vld [vmem:[%s1 + $0xba0] sm:$0xff]
  %v566 = vld [vmem:[%s1 + $0xba8] sm:$0xf]
  %v567 = vld [vmem:[%s1 + $0xbac] sm:$0xff]
  %v568 = vld [vmem:[%s1 + $0xbb4] sm:$0xf]
  %v569 = vld [vmem:[%s1 + $0xbb8] sm:$0xff]
  %v570 = vld [vmem:[%s1 + $0xbc0] sm:$0xf]
  %v571 = vld [vmem:[%s1 + $0xbc4] sm:$0xff]
  %v572 = vld [vmem:[%s1 + $0xbcc] sm:$0xf]
  %v573 = vld [vmem:[%s1 + $0xbd0] sm:$0xff]
  %v574 = vld [vmem:[%s1 + $0xbd8] sm:$0xf]
  %v575 = vld [vmem:[%s1 + $0xbdc] sm:$0xff]
  %v576 = vld [vmem:[%s1 + $0xbe4] sm:$0xf]
  %v577 = vld [vmem:[%s1 + $0xbe8] sm:$0xff]
  %v578 = vld [vmem:[%s1 + $0xbf0] sm:$0xf]
  %v579 = vld [vmem:[%s1 + $0xbf4] sm:$0xff]
  %v580 = vld [vmem:[%s1 + $0xbfc] sm:$0xf]
  %v581 = vld [vmem:[%s1 + $0xc00] sm:$0xff]
  %v582 = vld [vmem:[%s1 + $0xc08] sm:$0xf]
  %v583 = vld [vmem:[%s1 + $0xc0c] sm:$0xff]
  %v584 = vld [vmem:[%s1 + $0xc14] sm:$0xf]
  %v585 = vld [vmem:[%s1 + $0xc18] sm:$0xff]
  %v586 = vld [vmem:[%s1 + $0xc20] sm:$0xf]
  %v587 = vld [vmem:[%s1 + $0xc24] sm:$0xff]
  %v588 = vld [vmem:[%s1 + $0xc2c] sm:$0xf]
  %v589 = vld [vmem:[%s1 + $0xc30] sm:$0xff]
  %v590 = vld [vmem:[%s1 + $0xc38] sm:$0xf]
  %v591 = vld [vmem:[%s1 + $0xc3c] sm:$0xff]
  %v592 = vld [vmem:[%s1 + $0xc44] sm:$0xf]
  %v593 = vld [vmem:[%s1 + $0xc48] sm:$0xff]
  %v594 = vld [vmem:[%s1 + $0xc50] sm:$0xf]
  %v595 = vld [vmem:[%s1 + $0xc54] sm:$0xff]
  %v596 = vld [vmem:[%s1 + $0xc5c] sm:$0xf]
  %v597 = vld [vmem:[%s1 + $0xc60] sm:$0xff]
  %v598 = vld [vmem:[%s1 + $0xc68] sm:$0xf]
  %v599 = vld [vmem:[%s1 + $0xc6c] sm:$0xff]
  %v600 = vld [vmem:[%s1 + $0xc74] sm:$0xf]
  %v601 = vld [vmem:[%s1 + $0xc78] sm:$0xff]
  %v602 = vld [vmem:[%s1 + $0xc80] sm:$0xf]
  %v603 = vld [vmem:[%s1 + $0xc84] sm:$0xff]
  %v604 = vld [vmem:[%s1 + $0xc8c] sm:$0xf]
  %v605 = vld [vmem:[%s1 + $0xc90] sm:$0xff]
  %v606 = vld [vmem:[%s1 + $0xc98] sm:$0xf]
  %v607 = vld [vmem:[%s1 + $0xc9c] sm:$0xff]
  %v608 = vld [vmem:[%s1 + $0xca4] sm:$0xf]
  %v609 = vld [vmem:[%s1 + $0xca8] sm:$0xff]
  %v610 = vld [vmem:[%s1 + $0xcb0] sm:$0xf]
  %v611 = vld [vmem:[%s1 + $0xcb4] sm:$0xff]
  %v612 = vld [vmem:[%s1 + $0xcbc] sm:$0xf]
  %v613 = vld [vmem:[%s1 + $0xcc0] sm:$0xff]
  %v614 = vld [vmem:[%s1 + $0xcc8] sm:$0xf]
  %v615 = vld [vmem:[%s1 + $0xccc] sm:$0xff]
  %v616 = vld [vmem:[%s1 + $0xcd4] sm:$0xf]
  %v617 = vld [vmem:[%s1 + $0xcd8] sm:$0xff]
  %v618 = vld [vmem:[%s1 + $0xce0] sm:$0xf]
  %v619 = vld [vmem:[%s1 + $0xce4] sm:$0xff]
  %v620 = vld [vmem:[%s1 + $0xcec] sm:$0xf]
  %v621 = vld [vmem:[%s1 + $0xcf0] sm:$0xff]
  %v622 = vld [vmem:[%s1 + $0xcf8] sm:$0xf]
  %v623 = vld [vmem:[%s1 + $0xcfc] sm:$0xff]
  %v624 = vld [vmem:[%s1 + $0xd04] sm:$0xf]
  %v625 = vld [vmem:[%s1 + $0xd08] sm:$0xff]
  %v626 = vld [vmem:[%s1 + $0xd10] sm:$0xf]
  %v627 = vld [vmem:[%s1 + $0xd14] sm:$0xff]
  %v628 = vld [vmem:[%s1 + $0xd1c] sm:$0xf]
  %v629 = vld [vmem:[%s1 + $0xd20] sm:$0xff]
  %v630 = vld [vmem:[%s1 + $0xd28] sm:$0xf]
  %v631 = vld [vmem:[%s1 + $0xd2c] sm:$0xff]
  %v632 = vld [vmem:[%s1 + $0xd34] sm:$0xf]
  %v633 = vld [vmem:[%s1 + $0xd38] sm:$0xff]
  %v634 = vld [vmem:[%s1 + $0xd40] sm:$0xf]
  %v635 = vld [vmem:[%s1 + $0xd44] sm:$0xff]
  %v636 = vld [vmem:[%s1 + $0xd4c] sm:$0xf]
  %v637 = vld [vmem:[%s1 + $0xd50] sm:$0xff]
  %v638 = vld [vmem:[%s1 + $0xd58] sm:$0xf]
  %v639 = vld [vmem:[%s1 + $0xd5c] sm:$0xff]
  %v640 = vld [vmem:[%s1 + $0xd64] sm:$0xf]
  %v641 = vld [vmem:[%s1 + $0xd68] sm:$0xff]
  %v642 = vld [vmem:[%s1 + $0xd70] sm:$0xf]
  %v643 = vld [vmem:[%s1 + $0xd74] sm:$0xff]
  %v644 = vld [vmem:[%s1 + $0xd7c] sm:$0xf]
  %v645 = vld [vmem:[%s2] sm:$0x7]
  %v647 = vlaneseq
  %v648 = vshrl.u32 %v647, 7
  %v649 = vsub.s32 0, %v648
  %v650 = vrot.slane %v645, %v649
  %v651 = vlaneseq
  %v652 = vshrl.u32 %v651, 7
  %v653 = vsub.s32 1, %v652
  %v654 = vrot.slane %v645, %v653
  %v655 = vlaneseq
  %v656 = vshrl.u32 %v655, 7
  %v657 = vsub.s32 2, %v656
  %v658 = vrot.slane %v645, %v657
  %v1238 = vunpack.c.l.b16 %v69
  %v1239 = vunpack.c.h.b16 %v69
  %v1240 = vunpack.c.l.b16 %v70
  %v1241 = vunpack.c.l.b16 %v71
  %v1242 = vunpack.c.h.b16 %v71
  %v1243 = vunpack.c.l.b16 %v72
  %v1244 = vunpack.c.l.b16 %v73
  %v1245 = vunpack.c.h.b16 %v73
  %v1246 = vunpack.c.l.b16 %v74
  %v1247 = vunpack.c.l.b16 %v75
  %v1248 = vunpack.c.h.b16 %v75
  %v1249 = vunpack.c.l.b16 %v76
  %v1250 = vunpack.c.l.b16 %v77
  %v1251 = vunpack.c.h.b16 %v77
  %v1252 = vunpack.c.l.b16 %v78
  %v1253 = vunpack.c.l.b16 %v79
  %v1254 = vunpack.c.h.b16 %v79
  %v1255 = vunpack.c.l.b16 %v80
  %v1256 = vunpack.c.l.b16 %v81
  %v1257 = vunpack.c.h.b16 %v81
  %v1258 = vunpack.c.l.b16 %v82
  %v1259 = vunpack.c.l.b16 %v83
  %v1260 = vunpack.c.h.b16 %v83
  %v1261 = vunpack.c.l.b16 %v84
  %v1262 = vunpack.c.l.b16 %v85
  %v1263 = vunpack.c.h.b16 %v85
  %v1264 = vunpack.c.l.b16 %v86
  %v1265 = vunpack.c.l.b16 %v87
  %v1266 = vunpack.c.h.b16 %v87
  %v1267 = vunpack.c.l.b16 %v88
  %v1268 = vunpack.c.l.b16 %v89
  %v1269 = vunpack.c.h.b16 %v89
  %v1270 = vunpack.c.l.b16 %v90
  %v1271 = vunpack.c.l.b16 %v91
  %v1272 = vunpack.c.h.b16 %v91
  %v1273 = vunpack.c.l.b16 %v92
  %v1274 = vunpack.c.l.b16 %v93
  %v1275 = vunpack.c.h.b16 %v93
  %v1276 = vunpack.c.l.b16 %v94
  %v1277 = vunpack.c.l.b16 %v95
  %v1278 = vunpack.c.h.b16 %v95
  %v1279 = vunpack.c.l.b16 %v96
  %v1280 = vunpack.c.l.b16 %v97
  %v1281 = vunpack.c.h.b16 %v97
  %v1282 = vunpack.c.l.b16 %v98
  %v1283 = vunpack.c.l.b16 %v99
  %v1284 = vunpack.c.h.b16 %v99
  %v1285 = vunpack.c.l.b16 %v100
  %v1286 = vunpack.c.l.b16 %v101
  %v1287 = vunpack.c.h.b16 %v101
  %v1288 = vunpack.c.l.b16 %v102
  %v1289 = vunpack.c.l.b16 %v103
  %v1290 = vunpack.c.h.b16 %v103
  %v1291 = vunpack.c.l.b16 %v104
  %v1292 = vunpack.c.l.b16 %v105
  %v1293 = vunpack.c.h.b16 %v105
  %v1294 = vunpack.c.l.b16 %v106
  %v1295 = vunpack.c.l.b16 %v107
  %v1296 = vunpack.c.h.b16 %v107
  %v1297 = vunpack.c.l.b16 %v108
  %v1298 = vunpack.c.l.b16 %v109
  %v1299 = vunpack.c.h.b16 %v109
  %v1300 = vunpack.c.l.b16 %v110
  %v1301 = vunpack.c.l.b16 %v111
  %v1302 = vunpack.c.h.b16 %v111
  %v1303 = vunpack.c.l.b16 %v112
  %v1304 = vunpack.c.l.b16 %v113
  %v1305 = vunpack.c.h.b16 %v113
  %v1306 = vunpack.c.l.b16 %v114
  %v1307 = vunpack.c.l.b16 %v115
  %v1308 = vunpack.c.h.b16 %v115
  %v1309 = vunpack.c.l.b16 %v116
  %v1310 = vunpack.c.l.b16 %v117
  %v1311 = vunpack.c.h.b16 %v117
  %v1312 = vunpack.c.l.b16 %v118
  %v1313 = vunpack.c.l.b16 %v119
  %v1314 = vunpack.c.h.b16 %v119
  %v1315 = vunpack.c.l.b16 %v120
  %v1316 = vunpack.c.l.b16 %v121
  %v1317 = vunpack.c.h.b16 %v121
  %v1318 = vunpack.c.l.b16 %v122
  %v1319 = vunpack.c.l.b16 %v123
  %v1320 = vunpack.c.h.b16 %v123
  %v1321 = vunpack.c.l.b16 %v124
  %v1322 = vunpack.c.l.b16 %v125
  %v1323 = vunpack.c.h.b16 %v125
  %v1324 = vunpack.c.l.b16 %v126
  %v1325 = vunpack.c.l.b16 %v127
  %v1326 = vunpack.c.h.b16 %v127
  %v1327 = vunpack.c.l.b16 %v128
  %v1328 = vunpack.c.l.b16 %v129
  %v1329 = vunpack.c.h.b16 %v129
  %v1330 = vunpack.c.l.b16 %v130
  %v1331 = vunpack.c.l.b16 %v131
  %v1332 = vunpack.c.h.b16 %v131
  %v1333 = vunpack.c.l.b16 %v132
  %v1334 = vunpack.c.l.b16 %v133
  %v1335 = vunpack.c.h.b16 %v133
  %v1336 = vunpack.c.l.b16 %v134
  %v1337 = vunpack.c.l.b16 %v135
  %v1338 = vunpack.c.h.b16 %v135
  %v1339 = vunpack.c.l.b16 %v136
  %v1340 = vunpack.c.l.b16 %v137
  %v1341 = vunpack.c.h.b16 %v137
  %v1342 = vunpack.c.l.b16 %v138
  %v1343 = vunpack.c.l.b16 %v139
  %v1344 = vunpack.c.h.b16 %v139
  %v1345 = vunpack.c.l.b16 %v140
  %v1346 = vunpack.c.l.b16 %v141
  %v1347 = vunpack.c.h.b16 %v141
  %v1348 = vunpack.c.l.b16 %v142
  %v1349 = vunpack.c.l.b16 %v143
  %v1350 = vunpack.c.h.b16 %v143
  %v1351 = vunpack.c.l.b16 %v144
  %v1352 = vunpack.c.l.b16 %v145
  %v1353 = vunpack.c.h.b16 %v145
  %v1354 = vunpack.c.l.b16 %v146
  %v1355 = vunpack.c.l.b16 %v147
  %v1356 = vunpack.c.h.b16 %v147
  %v1357 = vunpack.c.l.b16 %v148
  %v1358 = vunpack.c.l.b16 %v149
  %v1359 = vunpack.c.h.b16 %v149
  %v1360 = vunpack.c.l.b16 %v150
  %v1361 = vunpack.c.l.b16 %v151
  %v1362 = vunpack.c.h.b16 %v151
  %v1363 = vunpack.c.l.b16 %v152
  %v1364 = vunpack.c.l.b16 %v153
  %v1365 = vunpack.c.h.b16 %v153
  %v1366 = vunpack.c.l.b16 %v154
  %v1367 = vunpack.c.l.b16 %v155
  %v1368 = vunpack.c.h.b16 %v155
  %v1369 = vunpack.c.l.b16 %v156
  %v1370 = vunpack.c.l.b16 %v157
  %v1371 = vunpack.c.h.b16 %v157
  %v1372 = vunpack.c.l.b16 %v158
  %v1373 = vunpack.c.l.b16 %v159
  %v1374 = vunpack.c.h.b16 %v159
  %v1375 = vunpack.c.l.b16 %v160
  %v1376 = vunpack.c.l.b16 %v161
  %v1377 = vunpack.c.h.b16 %v161
  %v1378 = vunpack.c.l.b16 %v162
  %v1379 = vunpack.c.l.b16 %v163
  %v1380 = vunpack.c.h.b16 %v163
  %v1381 = vunpack.c.l.b16 %v164
  %v1382 = vunpack.c.l.b16 %v165
  %v1383 = vunpack.c.h.b16 %v165
  %v1384 = vunpack.c.l.b16 %v166
  %v1385 = vunpack.c.l.b16 %v167
  %v1386 = vunpack.c.h.b16 %v167
  %v1387 = vunpack.c.l.b16 %v168
  %v1388 = vunpack.c.l.b16 %v169
  %v1389 = vunpack.c.h.b16 %v169
  %v1390 = vunpack.c.l.b16 %v170
  %v1391 = vunpack.c.l.b16 %v171
  %v1392 = vunpack.c.h.b16 %v171
  %v1393 = vunpack.c.l.b16 %v172
  %v1394 = vunpack.c.l.b16 %v173
  %v1395 = vunpack.c.h.b16 %v173
  %v1396 = vunpack.c.l.b16 %v174
  %v1397 = vunpack.c.l.b16 %v175
  %v1398 = vunpack.c.h.b16 %v175
  %v1399 = vunpack.c.l.b16 %v176
  %v1400 = vunpack.c.l.b16 %v177
  %v1401 = vunpack.c.h.b16 %v177
  %v1402 = vunpack.c.l.b16 %v178
  %v1403 = vunpack.c.l.b16 %v179
  %v1404 = vunpack.c.h.b16 %v179
  %v1405 = vunpack.c.l.b16 %v180
  %v1406 = vunpack.c.l.b16 %v181
  %v1407 = vunpack.c.h.b16 %v181
  %v1408 = vunpack.c.l.b16 %v182
  %v1409 = vunpack.c.l.b16 %v183
  %v1410 = vunpack.c.h.b16 %v183
  %v1411 = vunpack.c.l.b16 %v184
  %v1412 = vunpack.c.l.b16 %v185
  %v1413 = vunpack.c.h.b16 %v185
  %v1414 = vunpack.c.l.b16 %v186
  %v1415 = vunpack.c.l.b16 %v187
  %v1416 = vunpack.c.h.b16 %v187
  %v1417 = vunpack.c.l.b16 %v188
  %v1418 = vunpack.c.l.b16 %v189
  %v1419 = vunpack.c.h.b16 %v189
  %v1420 = vunpack.c.l.b16 %v190
  %v1421 = vunpack.c.l.b16 %v191
  %v1422 = vunpack.c.h.b16 %v191
  %v1423 = vunpack.c.l.b16 %v192
  %v1424 = vunpack.c.l.b16 %v193
  %v1425 = vunpack.c.h.b16 %v193
  %v1426 = vunpack.c.l.b16 %v194
  %v1427 = vunpack.c.l.b16 %v195
  %v1428 = vunpack.c.h.b16 %v195
  %v1429 = vunpack.c.l.b16 %v196
  %v1430 = vunpack.c.l.b16 %v197
  %v1431 = vunpack.c.h.b16 %v197
  %v1432 = vunpack.c.l.b16 %v198
  %v1433 = vunpack.c.l.b16 %v199
  %v1434 = vunpack.c.h.b16 %v199
  %v1435 = vunpack.c.l.b16 %v200
  %v1436 = vunpack.c.l.b16 %v201
  %v1437 = vunpack.c.h.b16 %v201
  %v1438 = vunpack.c.l.b16 %v202
  %v1439 = vunpack.c.l.b16 %v203
  %v1440 = vunpack.c.h.b16 %v203
  %v1441 = vunpack.c.l.b16 %v204
  %v1442 = vunpack.c.l.b16 %v205
  %v1443 = vunpack.c.h.b16 %v205
  %v1444 = vunpack.c.l.b16 %v206
  %v1445 = vunpack.c.l.b16 %v207
  %v1446 = vunpack.c.h.b16 %v207
  %v1447 = vunpack.c.l.b16 %v208
  %v1448 = vunpack.c.l.b16 %v209
  %v1449 = vunpack.c.h.b16 %v209
  %v1450 = vunpack.c.l.b16 %v210
  %v1451 = vunpack.c.l.b16 %v211
  %v1452 = vunpack.c.h.b16 %v211
  %v1453 = vunpack.c.l.b16 %v212
  %v1454 = vunpack.c.l.b16 %v213
  %v1455 = vunpack.c.h.b16 %v213
  %v1456 = vunpack.c.l.b16 %v214
  %v1457 = vunpack.c.l.b16 %v215
  %v1458 = vunpack.c.h.b16 %v215
  %v1459 = vunpack.c.l.b16 %v216
  %v1460 = vunpack.c.l.b16 %v217
  %v1461 = vunpack.c.h.b16 %v217
  %v1462 = vunpack.c.l.b16 %v218
  %v1463 = vunpack.c.l.b16 %v219
  %v1464 = vunpack.c.h.b16 %v219
  %v1465 = vunpack.c.l.b16 %v220
  %v1466 = vunpack.c.l.b16 %v221
  %v1467 = vunpack.c.h.b16 %v221
  %v1468 = vunpack.c.l.b16 %v222
  %v1469 = vunpack.c.l.b16 %v223
  %v1470 = vunpack.c.h.b16 %v223
  %v1471 = vunpack.c.l.b16 %v224
  %v1472 = vunpack.c.l.b16 %v225
  %v1473 = vunpack.c.h.b16 %v225
  %v1474 = vunpack.c.l.b16 %v226
  %v1475 = vunpack.c.l.b16 %v227
  %v1476 = vunpack.c.h.b16 %v227
  %v1477 = vunpack.c.l.b16 %v228
  %v1478 = vunpack.c.l.b16 %v229
  %v1479 = vunpack.c.h.b16 %v229
  %v1480 = vunpack.c.l.b16 %v230
  %v1481 = vunpack.c.l.b16 %v231
  %v1482 = vunpack.c.h.b16 %v231
  %v1483 = vunpack.c.l.b16 %v232
  %v1484 = vunpack.c.l.b16 %v233
  %v1485 = vunpack.c.h.b16 %v233
  %v1486 = vunpack.c.l.b16 %v234
  %v1487 = vunpack.c.l.b16 %v235
  %v1488 = vunpack.c.h.b16 %v235
  %v1489 = vunpack.c.l.b16 %v236
  %v1490 = vunpack.c.l.b16 %v237
  %v1491 = vunpack.c.h.b16 %v237
  %v1492 = vunpack.c.l.b16 %v238
  %v1493 = vunpack.c.l.b16 %v239
  %v1494 = vunpack.c.h.b16 %v239
  %v1495 = vunpack.c.l.b16 %v240
  %v1496 = vunpack.c.l.b16 %v241
  %v1497 = vunpack.c.h.b16 %v241
  %v1498 = vunpack.c.l.b16 %v242
  %v1499 = vunpack.c.l.b16 %v243
  %v1500 = vunpack.c.h.b16 %v243
  %v1501 = vunpack.c.l.b16 %v244
  %v1502 = vunpack.c.l.b16 %v245
  %v1503 = vunpack.c.h.b16 %v245
  %v1504 = vunpack.c.l.b16 %v246
  %v1505 = vunpack.c.l.b16 %v247
  %v1506 = vunpack.c.h.b16 %v247
  %v1507 = vunpack.c.l.b16 %v248
  %v1508 = vunpack.c.l.b16 %v249
  %v1509 = vunpack.c.h.b16 %v249
  %v1510 = vunpack.c.l.b16 %v250
  %v1511 = vunpack.c.l.b16 %v251
  %v1512 = vunpack.c.h.b16 %v251
  %v1513 = vunpack.c.l.b16 %v252
  %v1514 = vunpack.c.l.b16 %v253
  %v1515 = vunpack.c.h.b16 %v253
  %v1516 = vunpack.c.l.b16 %v254
  %v1517 = vunpack.c.l.b16 %v255
  %v1518 = vunpack.c.h.b16 %v255
  %v1519 = vunpack.c.l.b16 %v256
  %v1520 = vunpack.c.l.b16 %v257
  %v1521 = vunpack.c.h.b16 %v257
  %v1522 = vunpack.c.l.b16 %v258
  %v1523 = vunpack.c.l.b16 %v259
  %v1524 = vunpack.c.h.b16 %v259
  %v1525 = vunpack.c.l.b16 %v260
  %v1526 = vunpack.c.l.b16 %v261
  %v1527 = vunpack.c.h.b16 %v261
  %v1528 = vunpack.c.l.b16 %v262
  %v1529 = vunpack.c.l.b16 %v263
  %v1530 = vunpack.c.h.b16 %v263
  %v1531 = vunpack.c.l.b16 %v264
  %v1532 = vunpack.c.l.b16 %v265
  %v1533 = vunpack.c.h.b16 %v265
  %v1534 = vunpack.c.l.b16 %v266
  %v1535 = vunpack.c.l.b16 %v267
  %v1536 = vunpack.c.h.b16 %v267
  %v1537 = vunpack.c.l.b16 %v268
  %v1538 = vunpack.c.l.b16 %v269
  %v1539 = vunpack.c.h.b16 %v269
  %v1540 = vunpack.c.l.b16 %v270
  %v1541 = vunpack.c.l.b16 %v271
  %v1542 = vunpack.c.h.b16 %v271
  %v1543 = vunpack.c.l.b16 %v272
  %v1544 = vunpack.c.l.b16 %v273
  %v1545 = vunpack.c.h.b16 %v273
  %v1546 = vunpack.c.l.b16 %v274
  %v1547 = vunpack.c.l.b16 %v275
  %v1548 = vunpack.c.h.b16 %v275
  %v1549 = vunpack.c.l.b16 %v276
  %v1550 = vunpack.c.l.b16 %v277
  %v1551 = vunpack.c.h.b16 %v277
  %v1552 = vunpack.c.l.b16 %v278
  %v1553 = vunpack.c.l.b16 %v279
  %v1554 = vunpack.c.h.b16 %v279
  %v1555 = vunpack.c.l.b16 %v280
  %v1556 = vunpack.c.l.b16 %v281
  %v1557 = vunpack.c.h.b16 %v281
  %v1558 = vunpack.c.l.b16 %v282
  %v1559 = vunpack.c.l.b16 %v283
  %v1560 = vunpack.c.h.b16 %v283
  %v1561 = vunpack.c.l.b16 %v284
  %v1562 = vunpack.c.l.b16 %v285
  %v1563 = vunpack.c.h.b16 %v285
  %v1564 = vunpack.c.l.b16 %v286
  %v1565 = vunpack.c.l.b16 %v287
  %v1566 = vunpack.c.h.b16 %v287
  %v1567 = vunpack.c.l.b16 %v288
  %v1568 = vunpack.c.l.b16 %v289
  %v1569 = vunpack.c.h.b16 %v289
  %v1570 = vunpack.c.l.b16 %v290
  %v1571 = vunpack.c.l.b16 %v291
  %v1572 = vunpack.c.h.b16 %v291
  %v1573 = vunpack.c.l.b16 %v292
  %v1574 = vunpack.c.l.b16 %v293
  %v1575 = vunpack.c.h.b16 %v293
  %v1576 = vunpack.c.l.b16 %v294
  %v1577 = vunpack.c.l.b16 %v295
  %v1578 = vunpack.c.h.b16 %v295
  %v1579 = vunpack.c.l.b16 %v296
  %v1580 = vunpack.c.l.b16 %v297
  %v1581 = vunpack.c.h.b16 %v297
  %v1582 = vunpack.c.l.b16 %v298
  %v1583 = vunpack.c.l.b16 %v299
  %v1584 = vunpack.c.h.b16 %v299
  %v1585 = vunpack.c.l.b16 %v300
  %v1586 = vunpack.c.l.b16 %v301
  %v1587 = vunpack.c.h.b16 %v301
  %v1588 = vunpack.c.l.b16 %v302
  %v1589 = vunpack.c.l.b16 %v303
  %v1590 = vunpack.c.h.b16 %v303
  %v1591 = vunpack.c.l.b16 %v304
  %v1592 = vunpack.c.l.b16 %v305
  %v1593 = vunpack.c.h.b16 %v305
  %v1594 = vunpack.c.l.b16 %v306
  %v1595 = vunpack.c.l.b16 %v307
  %v1596 = vunpack.c.h.b16 %v307
  %v1597 = vunpack.c.l.b16 %v308
  %v1598 = vunpack.c.l.b16 %v309
  %v1599 = vunpack.c.h.b16 %v309
  %v1600 = vunpack.c.l.b16 %v310
  %v1601 = vunpack.c.l.b16 %v311
  %v1602 = vunpack.c.h.b16 %v311
  %v1603 = vunpack.c.l.b16 %v312
  %v1604 = vunpack.c.l.b16 %v313
  %v1605 = vunpack.c.h.b16 %v313
  %v1606 = vunpack.c.l.b16 %v314
  %v1607 = vunpack.c.l.b16 %v315
  %v1608 = vunpack.c.h.b16 %v315
  %v1609 = vunpack.c.l.b16 %v316
  %v1610 = vunpack.c.l.b16 %v317
  %v1611 = vunpack.c.h.b16 %v317
  %v1612 = vunpack.c.l.b16 %v318
  %v1613 = vunpack.c.l.b16 %v319
  %v1614 = vunpack.c.h.b16 %v319
  %v1615 = vunpack.c.l.b16 %v320
  %v1616 = vunpack.c.l.b16 %v321
  %v1617 = vunpack.c.h.b16 %v321
  %v1618 = vunpack.c.l.b16 %v322
  %v1619 = vunpack.c.l.b16 %v323
  %v1620 = vunpack.c.h.b16 %v323
  %v1621 = vunpack.c.l.b16 %v324
  %v1622 = vunpack.c.l.b16 %v325
  %v1623 = vunpack.c.h.b16 %v325
  %v1624 = vunpack.c.l.b16 %v326
  %v1625 = vunpack.c.l.b16 %v327
  %v1626 = vunpack.c.h.b16 %v327
  %v1627 = vunpack.c.l.b16 %v328
  %v1628 = vunpack.c.l.b16 %v329
  %v1629 = vunpack.c.h.b16 %v329
  %v1630 = vunpack.c.l.b16 %v330
  %v1631 = vunpack.c.l.b16 %v331
  %v1632 = vunpack.c.h.b16 %v331
  %v1633 = vunpack.c.l.b16 %v332
  %v1634 = vunpack.c.l.b16 %v333
  %v1635 = vunpack.c.h.b16 %v333
  %v1636 = vunpack.c.l.b16 %v334
  %v1637 = vunpack.c.l.b16 %v335
  %v1638 = vunpack.c.h.b16 %v335
  %v1639 = vunpack.c.l.b16 %v336
  %v1640 = vunpack.c.l.b16 %v337
  %v1641 = vunpack.c.h.b16 %v337
  %v1642 = vunpack.c.l.b16 %v338
  %v1643 = vunpack.c.l.b16 %v339
  %v1644 = vunpack.c.h.b16 %v339
  %v1645 = vunpack.c.l.b16 %v340
  %v1646 = vunpack.c.l.b16 %v341
  %v1647 = vunpack.c.h.b16 %v341
  %v1648 = vunpack.c.l.b16 %v342
  %v1649 = vunpack.c.l.b16 %v343
  %v1650 = vunpack.c.h.b16 %v343
  %v1651 = vunpack.c.l.b16 %v344
  %v1652 = vunpack.c.l.b16 %v345
  %v1653 = vunpack.c.h.b16 %v345
  %v1654 = vunpack.c.l.b16 %v346
  %v1655 = vunpack.c.l.b16 %v347
  %v1656 = vunpack.c.h.b16 %v347
  %v1657 = vunpack.c.l.b16 %v348
  %v1658 = vunpack.c.l.b16 %v349
  %v1659 = vunpack.c.h.b16 %v349
  %v1660 = vunpack.c.l.b16 %v350
  %v1661 = vunpack.c.l.b16 %v351
  %v1662 = vunpack.c.h.b16 %v351
  %v1663 = vunpack.c.l.b16 %v352
  %v1664 = vunpack.c.l.b16 %v353
  %v1665 = vunpack.c.h.b16 %v353
  %v1666 = vunpack.c.l.b16 %v354
  %v1667 = vunpack.c.l.b16 %v355
  %v1668 = vunpack.c.h.b16 %v355
  %v1669 = vunpack.c.l.b16 %v356
  %v1670 = vunpack.c.l.b16 %v357
  %v1671 = vunpack.c.h.b16 %v357
  %v1672 = vunpack.c.l.b16 %v358
  %v1673 = vunpack.c.l.b16 %v359
  %v1674 = vunpack.c.h.b16 %v359
  %v1675 = vunpack.c.l.b16 %v360
  %v1676 = vunpack.c.l.b16 %v361
  %v1677 = vunpack.c.h.b16 %v361
  %v1678 = vunpack.c.l.b16 %v362
  %v1679 = vunpack.c.l.b16 %v363
  %v1680 = vunpack.c.h.b16 %v363
  %v1681 = vunpack.c.l.b16 %v364
  %v1682 = vunpack.c.l.b16 %v365
  %v1683 = vunpack.c.h.b16 %v365
  %v1684 = vunpack.c.l.b16 %v366
  %v1685 = vunpack.c.l.b16 %v367
  %v1686 = vunpack.c.h.b16 %v367
  %v1687 = vunpack.c.l.b16 %v368
  %v1688 = vunpack.c.l.b16 %v369
  %v1689 = vunpack.c.h.b16 %v369
  %v1690 = vunpack.c.l.b16 %v370
  %v1691 = vunpack.c.l.b16 %v371
  %v1692 = vunpack.c.h.b16 %v371
  %v1693 = vunpack.c.l.b16 %v372
  %v1694 = vunpack.c.l.b16 %v373
  %v1695 = vunpack.c.h.b16 %v373
  %v1696 = vunpack.c.l.b16 %v374
  %v1697 = vunpack.c.l.b16 %v375
  %v1698 = vunpack.c.h.b16 %v375
  %v1699 = vunpack.c.l.b16 %v376
  %v1700 = vunpack.c.l.b16 %v377
  %v1701 = vunpack.c.h.b16 %v377
  %v1702 = vunpack.c.l.b16 %v378
  %v1703 = vunpack.c.l.b16 %v379
  %v1704 = vunpack.c.h.b16 %v379
  %v1705 = vunpack.c.l.b16 %v380
  %v1706 = vunpack.c.l.b16 %v381
  %v1707 = vunpack.c.h.b16 %v381
  %v1708 = vunpack.c.l.b16 %v382
  %v1709 = vunpack.c.l.b16 %v383
  %v1710 = vunpack.c.h.b16 %v383
  %v1711 = vunpack.c.l.b16 %v384
  %v1712 = vunpack.c.l.b16 %v385
  %v1713 = vunpack.c.h.b16 %v385
  %v1714 = vunpack.c.l.b16 %v386
  %v1715 = vunpack.c.l.b16 %v387
  %v1716 = vunpack.c.h.b16 %v387
  %v1717 = vunpack.c.l.b16 %v388
  %v1718 = vunpack.c.l.b16 %v389
  %v1719 = vunpack.c.h.b16 %v389
  %v1720 = vunpack.c.l.b16 %v390
  %v1721 = vunpack.c.l.b16 %v391
  %v1722 = vunpack.c.h.b16 %v391
  %v1723 = vunpack.c.l.b16 %v392
  %v1724 = vunpack.c.l.b16 %v393
  %v1725 = vunpack.c.h.b16 %v393
  %v1726 = vunpack.c.l.b16 %v394
  %v1727 = vunpack.c.l.b16 %v395
  %v1728 = vunpack.c.h.b16 %v395
  %v1729 = vunpack.c.l.b16 %v396
  %v1730 = vunpack.c.l.b16 %v397
  %v1731 = vunpack.c.h.b16 %v397
  %v1732 = vunpack.c.l.b16 %v398
  %v1733 = vunpack.c.l.b16 %v399
  %v1734 = vunpack.c.h.b16 %v399
  %v1735 = vunpack.c.l.b16 %v400
  %v1736 = vunpack.c.l.b16 %v401
  %v1737 = vunpack.c.h.b16 %v401
  %v1738 = vunpack.c.l.b16 %v402
  %v1739 = vunpack.c.l.b16 %v403
  %v1740 = vunpack.c.h.b16 %v403
  %v1741 = vunpack.c.l.b16 %v404
  %v1742 = vunpack.c.l.b16 %v405
  %v1743 = vunpack.c.h.b16 %v405
  %v1744 = vunpack.c.l.b16 %v406
  %v1745 = vunpack.c.l.b16 %v407
  %v1746 = vunpack.c.h.b16 %v407
  %v1747 = vunpack.c.l.b16 %v408
  %v1748 = vunpack.c.l.b16 %v409
  %v1749 = vunpack.c.h.b16 %v409
  %v1750 = vunpack.c.l.b16 %v410
  %v1751 = vunpack.c.l.b16 %v411
  %v1752 = vunpack.c.h.b16 %v411
  %v1753 = vunpack.c.l.b16 %v412
  %v1754 = vunpack.c.l.b16 %v413
  %v1755 = vunpack.c.h.b16 %v413
  %v1756 = vunpack.c.l.b16 %v414
  %v1757 = vunpack.c.l.b16 %v415
  %v1758 = vunpack.c.h.b16 %v415
  %v1759 = vunpack.c.l.b16 %v416
  %v1760 = vunpack.c.l.b16 %v417
  %v1761 = vunpack.c.h.b16 %v417
  %v1762 = vunpack.c.l.b16 %v418
  %v1763 = vunpack.c.l.b16 %v419
  %v1764 = vunpack.c.h.b16 %v419
  %v1765 = vunpack.c.l.b16 %v420
  %v1766 = vunpack.c.l.b16 %v421
  %v1767 = vunpack.c.h.b16 %v421
  %v1768 = vunpack.c.l.b16 %v422
  %v1769 = vunpack.c.l.b16 %v423
  %v1770 = vunpack.c.h.b16 %v423
  %v1771 = vunpack.c.l.b16 %v424
  %v1772 = vunpack.c.l.b16 %v425
  %v1773 = vunpack.c.h.b16 %v425
  %v1774 = vunpack.c.l.b16 %v426
  %v1775 = vunpack.c.l.b16 %v427
  %v1776 = vunpack.c.h.b16 %v427
  %v1777 = vunpack.c.l.b16 %v428
  %v1778 = vunpack.c.l.b16 %v429
  %v1779 = vunpack.c.h.b16 %v429
  %v1780 = vunpack.c.l.b16 %v430
  %v1781 = vunpack.c.l.b16 %v431
  %v1782 = vunpack.c.h.b16 %v431
  %v1783 = vunpack.c.l.b16 %v432
  %v1784 = vunpack.c.l.b16 %v433
  %v1785 = vunpack.c.h.b16 %v433
  %v1786 = vunpack.c.l.b16 %v434
  %v1787 = vunpack.c.l.b16 %v435
  %v1788 = vunpack.c.h.b16 %v435
  %v1789 = vunpack.c.l.b16 %v436
  %v1790 = vunpack.c.l.b16 %v437
  %v1791 = vunpack.c.h.b16 %v437
  %v1792 = vunpack.c.l.b16 %v438
  %v1793 = vunpack.c.l.b16 %v439
  %v1794 = vunpack.c.h.b16 %v439
  %v1795 = vunpack.c.l.b16 %v440
  %v1796 = vunpack.c.l.b16 %v441
  %v1797 = vunpack.c.h.b16 %v441
  %v1798 = vunpack.c.l.b16 %v442
  %v1799 = vunpack.c.l.b16 %v443
  %v1800 = vunpack.c.h.b16 %v443
  %v1801 = vunpack.c.l.b16 %v444
  %v1802 = vunpack.c.l.b16 %v445
  %v1803 = vunpack.c.h.b16 %v445
  %v1804 = vunpack.c.l.b16 %v446
  %v1805 = vunpack.c.l.b16 %v447
  %v1806 = vunpack.c.h.b16 %v447
  %v1807 = vunpack.c.l.b16 %v448
  %v1808 = vunpack.c.l.b16 %v449
  %v1809 = vunpack.c.h.b16 %v449
  %v1810 = vunpack.c.l.b16 %v450
  %v1811 = vunpack.c.l.b16 %v451
  %v1812 = vunpack.c.h.b16 %v451
  %v1813 = vunpack.c.l.b16 %v452
  %v1814 = vunpack.c.l.b16 %v453
  %v1815 = vunpack.c.h.b16 %v453
  %v1816 = vunpack.c.l.b16 %v454
  %v1817 = vunpack.c.l.b16 %v455
  %v1818 = vunpack.c.h.b16 %v455
  %v1819 = vunpack.c.l.b16 %v456
  %v1820 = vunpack.c.l.b16 %v457
  %v1821 = vunpack.c.h.b16 %v457
  %v1822 = vunpack.c.l.b16 %v458
  %v1823 = vunpack.c.l.b16 %v459
  %v1824 = vunpack.c.h.b16 %v459
  %v1825 = vunpack.c.l.b16 %v460
  %v1826 = vunpack.c.l.b16 %v461
  %v1827 = vunpack.c.h.b16 %v461
  %v1828 = vunpack.c.l.b16 %v462
  %v1829 = vunpack.c.l.b16 %v463
  %v1830 = vunpack.c.h.b16 %v463
  %v1831 = vunpack.c.l.b16 %v464
  %v1832 = vunpack.c.l.b16 %v465
  %v1833 = vunpack.c.h.b16 %v465
  %v1834 = vunpack.c.l.b16 %v466
  %v1835 = vunpack.c.l.b16 %v467
  %v1836 = vunpack.c.h.b16 %v467
  %v1837 = vunpack.c.l.b16 %v468
  %v1838 = vunpack.c.l.b16 %v469
  %v1839 = vunpack.c.h.b16 %v469
  %v1840 = vunpack.c.l.b16 %v470
  %v1841 = vunpack.c.l.b16 %v471
  %v1842 = vunpack.c.h.b16 %v471
  %v1843 = vunpack.c.l.b16 %v472
  %v1844 = vunpack.c.l.b16 %v473
  %v1845 = vunpack.c.h.b16 %v473
  %v1846 = vunpack.c.l.b16 %v474
  %v1847 = vunpack.c.l.b16 %v475
  %v1848 = vunpack.c.h.b16 %v475
  %v1849 = vunpack.c.l.b16 %v476
  %v1850 = vunpack.c.l.b16 %v477
  %v1851 = vunpack.c.h.b16 %v477
  %v1852 = vunpack.c.l.b16 %v478
  %v1853 = vunpack.c.l.b16 %v479
  %v1854 = vunpack.c.h.b16 %v479
  %v1855 = vunpack.c.l.b16 %v480
  %v1856 = vunpack.c.l.b16 %v481
  %v1857 = vunpack.c.h.b16 %v481
  %v1858 = vunpack.c.l.b16 %v482
  %v1859 = vunpack.c.l.b16 %v483
  %v1860 = vunpack.c.h.b16 %v483
  %v1861 = vunpack.c.l.b16 %v484
  %v1862 = vunpack.c.l.b16 %v485
  %v1863 = vunpack.c.h.b16 %v485
  %v1864 = vunpack.c.l.b16 %v486
  %v1865 = vunpack.c.l.b16 %v487
  %v1866 = vunpack.c.h.b16 %v487
  %v1867 = vunpack.c.l.b16 %v488
  %v1868 = vunpack.c.l.b16 %v489
  %v1869 = vunpack.c.h.b16 %v489
  %v1870 = vunpack.c.l.b16 %v490
  %v1871 = vunpack.c.l.b16 %v491
  %v1872 = vunpack.c.h.b16 %v491
  %v1873 = vunpack.c.l.b16 %v492
  %v1874 = vunpack.c.l.b16 %v493
  %v1875 = vunpack.c.h.b16 %v493
  %v1876 = vunpack.c.l.b16 %v494
  %v1877 = vunpack.c.l.b16 %v495
  %v1878 = vunpack.c.h.b16 %v495
  %v1879 = vunpack.c.l.b16 %v496
  %v1880 = vunpack.c.l.b16 %v497
  %v1881 = vunpack.c.h.b16 %v497
  %v1882 = vunpack.c.l.b16 %v498
  %v1883 = vunpack.c.l.b16 %v499
  %v1884 = vunpack.c.h.b16 %v499
  %v1885 = vunpack.c.l.b16 %v500
  %v1886 = vunpack.c.l.b16 %v501
  %v1887 = vunpack.c.h.b16 %v501
  %v1888 = vunpack.c.l.b16 %v502
  %v1889 = vunpack.c.l.b16 %v503
  %v1890 = vunpack.c.h.b16 %v503
  %v1891 = vunpack.c.l.b16 %v504
  %v1892 = vunpack.c.l.b16 %v505
  %v1893 = vunpack.c.h.b16 %v505
  %v1894 = vunpack.c.l.b16 %v506
  %v1895 = vunpack.c.l.b16 %v507
  %v1896 = vunpack.c.h.b16 %v507
  %v1897 = vunpack.c.l.b16 %v508
  %v1898 = vunpack.c.l.b16 %v509
  %v1899 = vunpack.c.h.b16 %v509
  %v1900 = vunpack.c.l.b16 %v510
  %v1901 = vunpack.c.l.b16 %v511
  %v1902 = vunpack.c.h.b16 %v511
  %v1903 = vunpack.c.l.b16 %v512
  %v1904 = vunpack.c.l.b16 %v513
  %v1905 = vunpack.c.h.b16 %v513
  %v1906 = vunpack.c.l.b16 %v514
  %v1907 = vunpack.c.l.b16 %v515
  %v1908 = vunpack.c.h.b16 %v515
  %v1909 = vunpack.c.l.b16 %v516
  %v1910 = vunpack.c.l.b16 %v517
  %v1911 = vunpack.c.h.b16 %v517
  %v1912 = vunpack.c.l.b16 %v518
  %v1913 = vunpack.c.l.b16 %v519
  %v1914 = vunpack.c.h.b16 %v519
  %v1915 = vunpack.c.l.b16 %v520
  %v1916 = vunpack.c.l.b16 %v521
  %v1917 = vunpack.c.h.b16 %v521
  %v1918 = vunpack.c.l.b16 %v522
  %v1919 = vunpack.c.l.b16 %v523
  %v1920 = vunpack.c.h.b16 %v523
  %v1921 = vunpack.c.l.b16 %v524
  %v1922 = vunpack.c.l.b16 %v525
  %v1923 = vunpack.c.h.b16 %v525
  %v1924 = vunpack.c.l.b16 %v526
  %v1925 = vunpack.c.l.b16 %v527
  %v1926 = vunpack.c.h.b16 %v527
  %v1927 = vunpack.c.l.b16 %v528
  %v1928 = vunpack.c.l.b16 %v529
  %v1929 = vunpack.c.h.b16 %v529
  %v1930 = vunpack.c.l.b16 %v530
  %v1931 = vunpack.c.l.b16 %v531
  %v1932 = vunpack.c.h.b16 %v531
  %v1933 = vunpack.c.l.b16 %v532
  %v1934 = vunpack.c.l.b16 %v533
  %v1935 = vunpack.c.h.b16 %v533
  %v1936 = vunpack.c.l.b16 %v534
  %v1937 = vunpack.c.l.b16 %v535
  %v1938 = vunpack.c.h.b16 %v535
  %v1939 = vunpack.c.l.b16 %v536
  %v1940 = vunpack.c.l.b16 %v537
  %v1941 = vunpack.c.h.b16 %v537
  %v1942 = vunpack.c.l.b16 %v538
  %v1943 = vunpack.c.l.b16 %v539
  %v1944 = vunpack.c.h.b16 %v539
  %v1945 = vunpack.c.l.b16 %v540
  %v1946 = vunpack.c.l.b16 %v541
  %v1947 = vunpack.c.h.b16 %v541
  %v1948 = vunpack.c.l.b16 %v542
  %v1949 = vunpack.c.l.b16 %v543
  %v1950 = vunpack.c.h.b16 %v543
  %v1951 = vunpack.c.l.b16 %v544
  %v1952 = vunpack.c.l.b16 %v545
  %v1953 = vunpack.c.h.b16 %v545
  %v1954 = vunpack.c.l.b16 %v546
  %v1955 = vunpack.c.l.b16 %v547
  %v1956 = vunpack.c.h.b16 %v547
  %v1957 = vunpack.c.l.b16 %v548
  %v1958 = vunpack.c.l.b16 %v549
  %v1959 = vunpack.c.h.b16 %v549
  %v1960 = vunpack.c.l.b16 %v550
  %v1961 = vunpack.c.l.b16 %v551
  %v1962 = vunpack.c.h.b16 %v551
  %v1963 = vunpack.c.l.b16 %v552
  %v1964 = vunpack.c.l.b16 %v553
  %v1965 = vunpack.c.h.b16 %v553
  %v1966 = vunpack.c.l.b16 %v554
  %v1967 = vunpack.c.l.b16 %v555
  %v1968 = vunpack.c.h.b16 %v555
  %v1969 = vunpack.c.l.b16 %v556
  %v1970 = vunpack.c.l.b16 %v557
  %v1971 = vunpack.c.h.b16 %v557
  %v1972 = vunpack.c.l.b16 %v558
  %v1973 = vunpack.c.l.b16 %v559
  %v1974 = vunpack.c.h.b16 %v559
  %v1975 = vunpack.c.l.b16 %v560
  %v1976 = vunpack.c.l.b16 %v561
  %v1977 = vunpack.c.h.b16 %v561
  %v1978 = vunpack.c.l.b16 %v562
  %v1979 = vunpack.c.l.b16 %v563
  %v1980 = vunpack.c.h.b16 %v563
  %v1981 = vunpack.c.l.b16 %v564
  %v1982 = vunpack.c.l.b16 %v565
  %v1983 = vunpack.c.h.b16 %v565
  %v1984 = vunpack.c.l.b16 %v566
  %v1985 = vunpack.c.l.b16 %v567
  %v1986 = vunpack.c.h.b16 %v567
  %v1987 = vunpack.c.l.b16 %v568
  %v1988 = vunpack.c.l.b16 %v569
  %v1989 = vunpack.c.h.b16 %v569
  %v1990 = vunpack.c.l.b16 %v570
  %v1991 = vunpack.c.l.b16 %v571
  %v1992 = vunpack.c.h.b16 %v571
  %v1993 = vunpack.c.l.b16 %v572
  %v1994 = vunpack.c.l.b16 %v573
  %v1995 = vunpack.c.h.b16 %v573
  %v1996 = vunpack.c.l.b16 %v574
  %v1997 = vunpack.c.l.b16 %v575
  %v1998 = vunpack.c.h.b16 %v575
  %v1999 = vunpack.c.l.b16 %v576
  %v2000 = vunpack.c.l.b16 %v577
  %v2001 = vunpack.c.h.b16 %v577
  %v2002 = vunpack.c.l.b16 %v578
  %v2003 = vunpack.c.l.b16 %v579
  %v2004 = vunpack.c.h.b16 %v579
  %v2005 = vunpack.c.l.b16 %v580
  %v2006 = vunpack.c.l.b16 %v581
  %v2007 = vunpack.c.h.b16 %v581
  %v2008 = vunpack.c.l.b16 %v582
  %v2009 = vunpack.c.l.b16 %v583
  %v2010 = vunpack.c.h.b16 %v583
  %v2011 = vunpack.c.l.b16 %v584
  %v2012 = vunpack.c.l.b16 %v585
  %v2013 = vunpack.c.h.b16 %v585
  %v2014 = vunpack.c.l.b16 %v586
  %v2015 = vunpack.c.l.b16 %v587
  %v2016 = vunpack.c.h.b16 %v587
  %v2017 = vunpack.c.l.b16 %v588
  %v2018 = vunpack.c.l.b16 %v589
  %v2019 = vunpack.c.h.b16 %v589
  %v2020 = vunpack.c.l.b16 %v590
  %v2021 = vunpack.c.l.b16 %v591
  %v2022 = vunpack.c.h.b16 %v591
  %v2023 = vunpack.c.l.b16 %v592
  %v2024 = vunpack.c.l.b16 %v593
  %v2025 = vunpack.c.h.b16 %v593
  %v2026 = vunpack.c.l.b16 %v594
  %v2027 = vunpack.c.l.b16 %v595
  %v2028 = vunpack.c.h.b16 %v595
  %v2029 = vunpack.c.l.b16 %v596
  %v2030 = vunpack.c.l.b16 %v597
  %v2031 = vunpack.c.h.b16 %v597
  %v2032 = vunpack.c.l.b16 %v598
  %v2033 = vunpack.c.l.b16 %v599
  %v2034 = vunpack.c.h.b16 %v599
  %v2035 = vunpack.c.l.b16 %v600
  %v2036 = vunpack.c.l.b16 %v601
  %v2037 = vunpack.c.h.b16 %v601
  %v2038 = vunpack.c.l.b16 %v602
  %v2039 = vunpack.c.l.b16 %v603
  %v2040 = vunpack.c.h.b16 %v603
  %v2041 = vunpack.c.l.b16 %v604
  %v2042 = vunpack.c.l.b16 %v605
  %v2043 = vunpack.c.h.b16 %v605
  %v2044 = vunpack.c.l.b16 %v606
  %v2045 = vunpack.c.l.b16 %v607
  %v2046 = vunpack.c.h.b16 %v607
  %v2047 = vunpack.c.l.b16 %v608
  %v2048 = vunpack.c.l.b16 %v609
  %v2049 = vunpack.c.h.b16 %v609
  %v2050 = vunpack.c.l.b16 %v610
  %v2051 = vunpack.c.l.b16 %v611
  %v2052 = vunpack.c.h.b16 %v611
  %v2053 = vunpack.c.l.b16 %v612
  %v2054 = vunpack.c.l.b16 %v613
  %v2055 = vunpack.c.h.b16 %v613
  %v2056 = vunpack.c.l.b16 %v614
  %v2057 = vunpack.c.l.b16 %v615
  %v2058 = vunpack.c.h.b16 %v615
  %v2059 = vunpack.c.l.b16 %v616
  %v2060 = vunpack.c.l.b16 %v617
  %v2061 = vunpack.c.h.b16 %v617
  %v2062 = vunpack.c.l.b16 %v618
  %v2063 = vunpack.c.l.b16 %v619
  %v2064 = vunpack.c.h.b16 %v619
  %v2065 = vunpack.c.l.b16 %v620
  %v2066 = vunpack.c.l.b16 %v621
  %v2067 = vunpack.c.h.b16 %v621
  %v2068 = vunpack.c.l.b16 %v622
  %v2069 = vunpack.c.l.b16 %v623
  %v2070 = vunpack.c.h.b16 %v623
  %v2071 = vunpack.c.l.b16 %v624
  %v2072 = vunpack.c.l.b16 %v625
  %v2073 = vunpack.c.h.b16 %v625
  %v2074 = vunpack.c.l.b16 %v626
  %v2075 = vunpack.c.l.b16 %v627
  %v2076 = vunpack.c.h.b16 %v627
  %v2077 = vunpack.c.l.b16 %v628
  %v2078 = vunpack.c.l.b16 %v629
  %v2079 = vunpack.c.h.b16 %v629
  %v2080 = vunpack.c.l.b16 %v630
  %v2081 = vunpack.c.l.b16 %v631
  %v2082 = vunpack.c.h.b16 %v631
  %v2083 = vunpack.c.l.b16 %v632
  %v2084 = vunpack.c.l.b16 %v633
  %v2085 = vunpack.c.h.b16 %v633
  %v2086 = vunpack.c.l.b16 %v634
  %v2087 = vunpack.c.l.b16 %v635
  %v2088 = vunpack.c.h.b16 %v635
  %v2089 = vunpack.c.l.b16 %v636
  %v2090 = vunpack.c.l.b16 %v637
  %v2091 = vunpack.c.h.b16 %v637
  %v2092 = vunpack.c.l.b16 %v638
  %v2093 = vunpack.c.l.b16 %v639
  %v2094 = vunpack.c.h.b16 %v639
  %v2095 = vunpack.c.l.b16 %v640
  %v2096 = vunpack.c.l.b16 %v641
  %v2097 = vunpack.c.h.b16 %v641
  %v2098 = vunpack.c.l.b16 %v642
  %v2099 = vunpack.c.l.b16 %v643
  %v2100 = vunpack.c.h.b16 %v643
  %v2101 = vunpack.c.l.b16 %v644
  %v2102 = vpack.c.b16 %v1241, %v1238
  %v2103 = vpack.c.b16 %v1242, %v1239
  %v2104 = vpack.c.b16 %v1243, %v1240
  %v2105 = vpack.c.b16 %v1247, %v1244
  %v2106 = vpack.c.b16 %v1248, %v1245
  %v2107 = vpack.c.b16 %v1249, %v1246
  %v2108 = vpack.c.b16 %v1253, %v1250
  %v2109 = vpack.c.b16 %v1254, %v1251
  %v2110 = vpack.c.b16 %v1255, %v1252
  %v2111 = vpack.c.b16 %v1259, %v1256
  %v2112 = vpack.c.b16 %v1260, %v1257
  %v2113 = vpack.c.b16 %v1261, %v1258
  %v2114 = vpack.c.b16 %v1265, %v1262
  %v2115 = vpack.c.b16 %v1266, %v1263
  %v2116 = vpack.c.b16 %v1267, %v1264
  %v2117 = vpack.c.b16 %v1271, %v1268
  %v2118 = vpack.c.b16 %v1272, %v1269
  %v2119 = vpack.c.b16 %v1273, %v1270
  %v2120 = vpack.c.b16 %v1277, %v1274
  %v2121 = vpack.c.b16 %v1278, %v1275
  %v2122 = vpack.c.b16 %v1279, %v1276
  %v2123 = vpack.c.b16 %v1283, %v1280
  %v2124 = vpack.c.b16 %v1284, %v1281
  %v2125 = vpack.c.b16 %v1285, %v1282
  %v2126 = vpack.c.b16 %v1289, %v1286
  %v2127 = vpack.c.b16 %v1290, %v1287
  %v2128 = vpack.c.b16 %v1291, %v1288
  %v2129 = vpack.c.b16 %v1295, %v1292
  %v2130 = vpack.c.b16 %v1296, %v1293
  %v2131 = vpack.c.b16 %v1297, %v1294
  %v2132 = vpack.c.b16 %v1301, %v1298
  %v2133 = vpack.c.b16 %v1302, %v1299
  %v2134 = vpack.c.b16 %v1303, %v1300
  %v2135 = vpack.c.b16 %v1307, %v1304
  %v2136 = vpack.c.b16 %v1308, %v1305
  %v2137 = vpack.c.b16 %v1309, %v1306
  %v2138 = vpack.c.b16 %v1313, %v1310
  %v2139 = vpack.c.b16 %v1314, %v1311
  %v2140 = vpack.c.b16 %v1315, %v1312
  %v2141 = vpack.c.b16 %v1319, %v1316
  %v2142 = vpack.c.b16 %v1320, %v1317
  %v2143 = vpack.c.b16 %v1321, %v1318
  %v2144 = vpack.c.b16 %v1325, %v1322
  %v2145 = vpack.c.b16 %v1326, %v1323
  %v2146 = vpack.c.b16 %v1327, %v1324
  %v2147 = vpack.c.b16 %v1331, %v1328
  %v2148 = vpack.c.b16 %v1332, %v1329
  %v2149 = vpack.c.b16 %v1333, %v1330
  %v2150 = vpack.c.b16 %v1337, %v1334
  %v2151 = vpack.c.b16 %v1338, %v1335
  %v2152 = vpack.c.b16 %v1339, %v1336
  %v2153 = vpack.c.b16 %v1343, %v1340
  %v2154 = vpack.c.b16 %v1344, %v1341
  %v2155 = vpack.c.b16 %v1345, %v1342
  %v2156 = vpack.c.b16 %v1349, %v1346
  %v2157 = vpack.c.b16 %v1350, %v1347
  %v2158 = vpack.c.b16 %v1351, %v1348
  %v2159 = vpack.c.b16 %v1355, %v1352
  %v2160 = vpack.c.b16 %v1356, %v1353
  %v2161 = vpack.c.b16 %v1357, %v1354
  %v2162 = vpack.c.b16 %v1361, %v1358
  %v2163 = vpack.c.b16 %v1362, %v1359
  %v2164 = vpack.c.b16 %v1363, %v1360
  %v2165 = vpack.c.b16 %v1367, %v1364
  %v2166 = vpack.c.b16 %v1368, %v1365
  %v2167 = vpack.c.b16 %v1369, %v1366
  %v2168 = vpack.c.b16 %v1373, %v1370
  %v2169 = vpack.c.b16 %v1374, %v1371
  %v2170 = vpack.c.b16 %v1375, %v1372
  %v2171 = vpack.c.b16 %v1379, %v1376
  %v2172 = vpack.c.b16 %v1380, %v1377
  %v2173 = vpack.c.b16 %v1381, %v1378
  %v2174 = vpack.c.b16 %v1385, %v1382
  %v2175 = vpack.c.b16 %v1386, %v1383
  %v2176 = vpack.c.b16 %v1387, %v1384
  %v2177 = vpack.c.b16 %v1391, %v1388
  %v2178 = vpack.c.b16 %v1392, %v1389
  %v2179 = vpack.c.b16 %v1393, %v1390
  %v2180 = vpack.c.b16 %v1397, %v1394
  %v2181 = vpack.c.b16 %v1398, %v1395
  %v2182 = vpack.c.b16 %v1399, %v1396
  %v2183 = vpack.c.b16 %v1403, %v1400
  %v2184 = vpack.c.b16 %v1404, %v1401
  %v2185 = vpack.c.b16 %v1405, %v1402
  %v2186 = vpack.c.b16 %v1409, %v1406
  %v2187 = vpack.c.b16 %v1410, %v1407
  %v2188 = vpack.c.b16 %v1411, %v1408
  %v2189 = vpack.c.b16 %v1415, %v1412
  %v2190 = vpack.c.b16 %v1416, %v1413
  %v2191 = vpack.c.b16 %v1417, %v1414
  %v2192 = vpack.c.b16 %v1421, %v1418
  %v2193 = vpack.c.b16 %v1422, %v1419
  %v2194 = vpack.c.b16 %v1423, %v1420
  %v2195 = vpack.c.b16 %v1427, %v1424
  %v2196 = vpack.c.b16 %v1428, %v1425
  %v2197 = vpack.c.b16 %v1429, %v1426
  %v2198 = vpack.c.b16 %v1433, %v1430
  %v2199 = vpack.c.b16 %v1434, %v1431
  %v2200 = vpack.c.b16 %v1435, %v1432
  %v2201 = vpack.c.b16 %v1439, %v1436
  %v2202 = vpack.c.b16 %v1440, %v1437
  %v2203 = vpack.c.b16 %v1441, %v1438
  %v2204 = vpack.c.b16 %v1445, %v1442
  %v2205 = vpack.c.b16 %v1446, %v1443
  %v2206 = vpack.c.b16 %v1447, %v1444
  %v2207 = vpack.c.b16 %v1451, %v1448
  %v2208 = vpack.c.b16 %v1452, %v1449
  %v2209 = vpack.c.b16 %v1453, %v1450
  %v2210 = vpack.c.b16 %v1457, %v1454
  %v2211 = vpack.c.b16 %v1458, %v1455
  %v2212 = vpack.c.b16 %v1459, %v1456
  %v2213 = vpack.c.b16 %v1463, %v1460
  %v2214 = vpack.c.b16 %v1464, %v1461
  %v2215 = vpack.c.b16 %v1465, %v1462
  %v2216 = vpack.c.b16 %v1469, %v1466
  %v2217 = vpack.c.b16 %v1470, %v1467
  %v2218 = vpack.c.b16 %v1471, %v1468
  %v2219 = vpack.c.b16 %v1475, %v1472
  %v2220 = vpack.c.b16 %v1476, %v1473
  %v2221 = vpack.c.b16 %v1477, %v1474
  %v2222 = vpack.c.b16 %v1481, %v1478
  %v2223 = vpack.c.b16 %v1482, %v1479
  %v2224 = vpack.c.b16 %v1483, %v1480
  %v2225 = vpack.c.b16 %v1487, %v1484
  %v2226 = vpack.c.b16 %v1488, %v1485
  %v2227 = vpack.c.b16 %v1489, %v1486
  %v2228 = vpack.c.b16 %v1493, %v1490
  %v2229 = vpack.c.b16 %v1494, %v1491
  %v2230 = vpack.c.b16 %v1495, %v1492
  %v2231 = vpack.c.b16 %v1499, %v1496
  %v2232 = vpack.c.b16 %v1500, %v1497
  %v2233 = vpack.c.b16 %v1501, %v1498
  %v2234 = vpack.c.b16 %v1505, %v1502
  %v2235 = vpack.c.b16 %v1506, %v1503
  %v2236 = vpack.c.b16 %v1507, %v1504
  %v2237 = vpack.c.b16 %v1511, %v1508
  %v2238 = vpack.c.b16 %v1512, %v1509
  %v2239 = vpack.c.b16 %v1513, %v1510
  %v2240 = vpack.c.b16 %v1517, %v1514
  %v2241 = vpack.c.b16 %v1518, %v1515
  %v2242 = vpack.c.b16 %v1519, %v1516
  %v2243 = vpack.c.b16 %v1523, %v1520
  %v2244 = vpack.c.b16 %v1524, %v1521
  %v2245 = vpack.c.b16 %v1525, %v1522
  %v2246 = vpack.c.b16 %v1529, %v1526
  %v2247 = vpack.c.b16 %v1530, %v1527
  %v2248 = vpack.c.b16 %v1531, %v1528
  %v2249 = vpack.c.b16 %v1535, %v1532
  %v2250 = vpack.c.b16 %v1536, %v1533
  %v2251 = vpack.c.b16 %v1537, %v1534
  %v2252 = vpack.c.b16 %v1541, %v1538
  %v2253 = vpack.c.b16 %v1542, %v1539
  %v2254 = vpack.c.b16 %v1543, %v1540
  %v2255 = vpack.c.b16 %v1547, %v1544
  %v2256 = vpack.c.b16 %v1548, %v1545
  %v2257 = vpack.c.b16 %v1549, %v1546
  %v2258 = vpack.c.b16 %v1553, %v1550
  %v2259 = vpack.c.b16 %v1554, %v1551
  %v2260 = vpack.c.b16 %v1555, %v1552
  %v2261 = vpack.c.b16 %v1559, %v1556
  %v2262 = vpack.c.b16 %v1560, %v1557
  %v2263 = vpack.c.b16 %v1561, %v1558
  %v2264 = vpack.c.b16 %v1565, %v1562
  %v2265 = vpack.c.b16 %v1566, %v1563
  %v2266 = vpack.c.b16 %v1567, %v1564
  %v2267 = vpack.c.b16 %v1571, %v1568
  %v2268 = vpack.c.b16 %v1572, %v1569
  %v2269 = vpack.c.b16 %v1573, %v1570
  %v2270 = vpack.c.b16 %v1577, %v1574
  %v2271 = vpack.c.b16 %v1578, %v1575
  %v2272 = vpack.c.b16 %v1579, %v1576
  %v2273 = vpack.c.b16 %v1583, %v1580
  %v2274 = vpack.c.b16 %v1584, %v1581
  %v2275 = vpack.c.b16 %v1585, %v1582
  %v2276 = vpack.c.b16 %v1589, %v1586
  %v2277 = vpack.c.b16 %v1590, %v1587
  %v2278 = vpack.c.b16 %v1591, %v1588
  %v2279 = vpack.c.b16 %v1595, %v1592
  %v2280 = vpack.c.b16 %v1596, %v1593
  %v2281 = vpack.c.b16 %v1597, %v1594
  %v2282 = vpack.c.b16 %v1601, %v1598
  %v2283 = vpack.c.b16 %v1602, %v1599
  %v2284 = vpack.c.b16 %v1603, %v1600
  %v2285 = vpack.c.b16 %v1607, %v1604
  %v2286 = vpack.c.b16 %v1608, %v1605
  %v2287 = vpack.c.b16 %v1609, %v1606
  %v2288 = vpack.c.b16 %v1613, %v1610
  %v2289 = vpack.c.b16 %v1614, %v1611
  %v2290 = vpack.c.b16 %v1615, %v1612
  %v2291 = vpack.c.b16 %v1619, %v1616
  %v2292 = vpack.c.b16 %v1620, %v1617
  %v2293 = vpack.c.b16 %v1621, %v1618
  %v2294 = vpack.c.b16 %v1625, %v1622
  %v2295 = vpack.c.b16 %v1626, %v1623
  %v2296 = vpack.c.b16 %v1627, %v1624
  %v2297 = vpack.c.b16 %v1631, %v1628
  %v2298 = vpack.c.b16 %v1632, %v1629
  %v2299 = vpack.c.b16 %v1633, %v1630
  %v2300 = vpack.c.b16 %v1637, %v1634
  %v2301 = vpack.c.b16 %v1638, %v1635
  %v2302 = vpack.c.b16 %v1639, %v1636
  %v2303 = vpack.c.b16 %v1643, %v1640
  %v2304 = vpack.c.b16 %v1644, %v1641
  %v2305 = vpack.c.b16 %v1645, %v1642
  %v2306 = vpack.c.b16 %v1649, %v1646
  %v2307 = vpack.c.b16 %v1650, %v1647
  %v2308 = vpack.c.b16 %v1651, %v1648
  %v2309 = vpack.c.b16 %v1655, %v1652
  %v2310 = vpack.c.b16 %v1656, %v1653
  %v2311 = vpack.c.b16 %v1657, %v1654
  %v2312 = vpack.c.b16 %v1661, %v1658
  %v2313 = vpack.c.b16 %v1662, %v1659
  %v2314 = vpack.c.b16 %v1663, %v1660
  %v2315 = vpack.c.b16 %v1667, %v1664
  %v2316 = vpack.c.b16 %v1668, %v1665
  %v2317 = vpack.c.b16 %v1669, %v1666
  %v2318 = vpack.c.b16 %v1673, %v1670
  %v2319 = vpack.c.b16 %v1674, %v1671
  %v2320 = vpack.c.b16 %v1675, %v1672
  %v2321 = vpack.c.b16 %v1679, %v1676
  %v2322 = vpack.c.b16 %v1680, %v1677
  %v2323 = vpack.c.b16 %v1681, %v1678
  %v2324 = vpack.c.b16 %v1685, %v1682
  %v2325 = vpack.c.b16 %v1686, %v1683
  %v2326 = vpack.c.b16 %v1687, %v1684
  %v2327 = vpack.c.b16 %v1691, %v1688
  %v2328 = vpack.c.b16 %v1692, %v1689
  %v2329 = vpack.c.b16 %v1693, %v1690
  %v2330 = vpack.c.b16 %v1697, %v1694
  %v2331 = vpack.c.b16 %v1698, %v1695
  %v2332 = vpack.c.b16 %v1699, %v1696
  %v2333 = vpack.c.b16 %v1703, %v1700
  %v2334 = vpack.c.b16 %v1704, %v1701
  %v2335 = vpack.c.b16 %v1705, %v1702
  %v2336 = vpack.c.b16 %v1709, %v1706
  %v2337 = vpack.c.b16 %v1710, %v1707
  %v2338 = vpack.c.b16 %v1711, %v1708
  %v2339 = vpack.c.b16 %v1715, %v1712
  %v2340 = vpack.c.b16 %v1716, %v1713
  %v2341 = vpack.c.b16 %v1717, %v1714
  %v2342 = vpack.c.b16 %v1721, %v1718
  %v2343 = vpack.c.b16 %v1722, %v1719
  %v2344 = vpack.c.b16 %v1723, %v1720
  %v2345 = vpack.c.b16 %v1727, %v1724
  %v2346 = vpack.c.b16 %v1728, %v1725
  %v2347 = vpack.c.b16 %v1729, %v1726
  %v2348 = vpack.c.b16 %v1733, %v1730
  %v2349 = vpack.c.b16 %v1734, %v1731
  %v2350 = vpack.c.b16 %v1735, %v1732
  %v2351 = vpack.c.b16 %v1739, %v1736
  %v2352 = vpack.c.b16 %v1740, %v1737
  %v2353 = vpack.c.b16 %v1741, %v1738
  %v2354 = vpack.c.b16 %v1745, %v1742
  %v2355 = vpack.c.b16 %v1746, %v1743
  %v2356 = vpack.c.b16 %v1747, %v1744
  %v2357 = vpack.c.b16 %v1751, %v1748
  %v2358 = vpack.c.b16 %v1752, %v1749
  %v2359 = vpack.c.b16 %v1753, %v1750
  %v2360 = vpack.c.b16 %v1757, %v1754
  %v2361 = vpack.c.b16 %v1758, %v1755
  %v2362 = vpack.c.b16 %v1759, %v1756
  %v2363 = vpack.c.b16 %v1763, %v1760
  %v2364 = vpack.c.b16 %v1764, %v1761
  %v2365 = vpack.c.b16 %v1765, %v1762
  %v2366 = vpack.c.b16 %v1769, %v1766
  %v2367 = vpack.c.b16 %v1770, %v1767
  %v2368 = vpack.c.b16 %v1771, %v1768
  %v2369 = vpack.c.b16 %v1775, %v1772
  %v2370 = vpack.c.b16 %v1776, %v1773
  %v2371 = vpack.c.b16 %v1777, %v1774
  %v2372 = vpack.c.b16 %v1781, %v1778
  %v2373 = vpack.c.b16 %v1782, %v1779
  %v2374 = vpack.c.b16 %v1783, %v1780
  %v2375 = vpack.c.b16 %v1787, %v1784
  %v2376 = vpack.c.b16 %v1788, %v1785
  %v2377 = vpack.c.b16 %v1789, %v1786
  %v2378 = vpack.c.b16 %v1793, %v1790
  %v2379 = vpack.c.b16 %v1794, %v1791
  %v2380 = vpack.c.b16 %v1795, %v1792
  %v2381 = vpack.c.b16 %v1799, %v1796
  %v2382 = vpack.c.b16 %v1800, %v1797
  %v2383 = vpack.c.b16 %v1801, %v1798
  %v2384 = vpack.c.b16 %v1805, %v1802
  %v2385 = vpack.c.b16 %v1806, %v1803
  %v2386 = vpack.c.b16 %v1807, %v1804
  %v2387 = vpack.c.b16 %v1811, %v1808
  %v2388 = vpack.c.b16 %v1812, %v1809
  %v2389 = vpack.c.b16 %v1813, %v1810
  %v2390 = vpack.c.b16 %v1817, %v1814
  %v2391 = vpack.c.b16 %v1818, %v1815
  %v2392 = vpack.c.b16 %v1819, %v1816
  %v2393 = vpack.c.b16 %v1823, %v1820
  %v2394 = vpack.c.b16 %v1824, %v1821
  %v2395 = vpack.c.b16 %v1825, %v1822
  %v2396 = vpack.c.b16 %v1829, %v1826
  %v2397 = vpack.c.b16 %v1830, %v1827
  %v2398 = vpack.c.b16 %v1831, %v1828
  %v2399 = vpack.c.b16 %v1835, %v1832
  %v2400 = vpack.c.b16 %v1836, %v1833
  %v2401 = vpack.c.b16 %v1837, %v1834
  %v2402 = vpack.c.b16 %v1841, %v1838
  %v2403 = vpack.c.b16 %v1842, %v1839
  %v2404 = vpack.c.b16 %v1843, %v1840
  %v2405 = vpack.c.b16 %v1847, %v1844
  %v2406 = vpack.c.b16 %v1848, %v1845
  %v2407 = vpack.c.b16 %v1849, %v1846
  %v2408 = vpack.c.b16 %v1853, %v1850
  %v2409 = vpack.c.b16 %v1854, %v1851
  %v2410 = vpack.c.b16 %v1855, %v1852
  %v2411 = vpack.c.b16 %v1859, %v1856
  %v2412 = vpack.c.b16 %v1860, %v1857
  %v2413 = vpack.c.b16 %v1861, %v1858
  %v2414 = vpack.c.b16 %v1865, %v1862
  %v2415 = vpack.c.b16 %v1866, %v1863
  %v2416 = vpack.c.b16 %v1867, %v1864
  %v2417 = vpack.c.b16 %v1871, %v1868
  %v2418 = vpack.c.b16 %v1872, %v1869
  %v2419 = vpack.c.b16 %v1873, %v1870
  %v2420 = vpack.c.b16 %v1877, %v1874
  %v2421 = vpack.c.b16 %v1878, %v1875
  %v2422 = vpack.c.b16 %v1879, %v1876
  %v2423 = vpack.c.b16 %v1883, %v1880
  %v2424 = vpack.c.b16 %v1884, %v1881
  %v2425 = vpack.c.b16 %v1885, %v1882
  %v2426 = vpack.c.b16 %v1889, %v1886
  %v2427 = vpack.c.b16 %v1890, %v1887
  %v2428 = vpack.c.b16 %v1891, %v1888
  %v2429 = vpack.c.b16 %v1895, %v1892
  %v2430 = vpack.c.b16 %v1896, %v1893
  %v2431 = vpack.c.b16 %v1897, %v1894
  %v2432 = vpack.c.b16 %v1901, %v1898
  %v2433 = vpack.c.b16 %v1902, %v1899
  %v2434 = vpack.c.b16 %v1903, %v1900
  %v2435 = vpack.c.b16 %v1907, %v1904
  %v2436 = vpack.c.b16 %v1908, %v1905
  %v2437 = vpack.c.b16 %v1909, %v1906
  %v2438 = vpack.c.b16 %v1913, %v1910
  %v2439 = vpack.c.b16 %v1914, %v1911
  %v2440 = vpack.c.b16 %v1915, %v1912
  %v2441 = vpack.c.b16 %v1919, %v1916
  %v2442 = vpack.c.b16 %v1920, %v1917
  %v2443 = vpack.c.b16 %v1921, %v1918
  %v2444 = vpack.c.b16 %v1925, %v1922
  %v2445 = vpack.c.b16 %v1926, %v1923
  %v2446 = vpack.c.b16 %v1927, %v1924
  %v2447 = vpack.c.b16 %v1931, %v1928
  %v2448 = vpack.c.b16 %v1932, %v1929
  %v2449 = vpack.c.b16 %v1933, %v1930
  %v2450 = vpack.c.b16 %v1937, %v1934
  %v2451 = vpack.c.b16 %v1938, %v1935
  %v2452 = vpack.c.b16 %v1939, %v1936
  %v2453 = vpack.c.b16 %v1943, %v1940
  %v2454 = vpack.c.b16 %v1944, %v1941
  %v2455 = vpack.c.b16 %v1945, %v1942
  %v2456 = vpack.c.b16 %v1949, %v1946
  %v2457 = vpack.c.b16 %v1950, %v1947
  %v2458 = vpack.c.b16 %v1951, %v1948
  %v2459 = vpack.c.b16 %v1955, %v1952
  %v2460 = vpack.c.b16 %v1956, %v1953
  %v2461 = vpack.c.b16 %v1957, %v1954
  %v2462 = vpack.c.b16 %v1961, %v1958
  %v2463 = vpack.c.b16 %v1962, %v1959
  %v2464 = vpack.c.b16 %v1963, %v1960
  %v2465 = vpack.c.b16 %v1967, %v1964
  %v2466 = vpack.c.b16 %v1968, %v1965
  %v2467 = vpack.c.b16 %v1969, %v1966
  %v2468 = vpack.c.b16 %v1973, %v1970
  %v2469 = vpack.c.b16 %v1974, %v1971
  %v2470 = vpack.c.b16 %v1975, %v1972
  %v2471 = vpack.c.b16 %v1979, %v1976
  %v2472 = vpack.c.b16 %v1980, %v1977
  %v2473 = vpack.c.b16 %v1981, %v1978
  %v2474 = vpack.c.b16 %v1985, %v1982
  %v2475 = vpack.c.b16 %v1986, %v1983
  %v2476 = vpack.c.b16 %v1987, %v1984
  %v2477 = vpack.c.b16 %v1991, %v1988
  %v2478 = vpack.c.b16 %v1992, %v1989
  %v2479 = vpack.c.b16 %v1993, %v1990
  %v2480 = vpack.c.b16 %v1997, %v1994
  %v2481 = vpack.c.b16 %v1998, %v1995
  %v2482 = vpack.c.b16 %v1999, %v1996
  %v2483 = vpack.c.b16 %v2003, %v2000
  %v2484 = vpack.c.b16 %v2004, %v2001
  %v2485 = vpack.c.b16 %v2005, %v2002
  %v2486 = vpack.c.b16 %v2009, %v2006
  %v2487 = vpack.c.b16 %v2010, %v2007
  %v2488 = vpack.c.b16 %v2011, %v2008
  %v2489 = vpack.c.b16 %v2015, %v2012
  %v2490 = vpack.c.b16 %v2016, %v2013
  %v2491 = vpack.c.b16 %v2017, %v2014
  %v2492 = vpack.c.b16 %v2021, %v2018
  %v2493 = vpack.c.b16 %v2022, %v2019
  %v2494 = vpack.c.b16 %v2023, %v2020
  %v2495 = vpack.c.b16 %v2027, %v2024
  %v2496 = vpack.c.b16 %v2028, %v2025
  %v2497 = vpack.c.b16 %v2029, %v2026
  %v2498 = vpack.c.b16 %v2033, %v2030
  %v2499 = vpack.c.b16 %v2034, %v2031
  %v2500 = vpack.c.b16 %v2035, %v2032
  %v2501 = vpack.c.b16 %v2039, %v2036
  %v2502 = vpack.c.b16 %v2040, %v2037
  %v2503 = vpack.c.b16 %v2041, %v2038
  %v2504 = vpack.c.b16 %v2045, %v2042
  %v2505 = vpack.c.b16 %v2046, %v2043
  %v2506 = vpack.c.b16 %v2047, %v2044
  %v2507 = vpack.c.b16 %v2051, %v2048
  %v2508 = vpack.c.b16 %v2052, %v2049
  %v2509 = vpack.c.b16 %v2053, %v2050
  %v2510 = vpack.c.b16 %v2057, %v2054
  %v2511 = vpack.c.b16 %v2058, %v2055
  %v2512 = vpack.c.b16 %v2059, %v2056
  %v2513 = vpack.c.b16 %v2063, %v2060
  %v2514 = vpack.c.b16 %v2064, %v2061
  %v2515 = vpack.c.b16 %v2065, %v2062
  %v2516 = vpack.c.b16 %v2069, %v2066
  %v2517 = vpack.c.b16 %v2070, %v2067
  %v2518 = vpack.c.b16 %v2071, %v2068
  %v2519 = vpack.c.b16 %v2075, %v2072
  %v2520 = vpack.c.b16 %v2076, %v2073
  %v2521 = vpack.c.b16 %v2077, %v2074
  %v2522 = vpack.c.b16 %v2081, %v2078
  %v2523 = vpack.c.b16 %v2082, %v2079
  %v2524 = vpack.c.b16 %v2083, %v2080
  %v2525 = vpack.c.b16 %v2087, %v2084
  %v2526 = vpack.c.b16 %v2088, %v2085
  %v2527 = vpack.c.b16 %v2089, %v2086
  %v2528 = vpack.c.b16 %v2093, %v2090
  %v2529 = vpack.c.b16 %v2094, %v2091
  %v2530 = vpack.c.b16 %v2095, %v2092
  %v2531 = vpack.c.b16 %v2099, %v2096
  %v2532 = vpack.c.b16 %v2100, %v2097
  %v2533 = vpack.c.b16 %v2101, %v2098
  %2966 = vmatprep.subr.bf16.mxu0 %v2103
  %2967 = vmatpush1.bf16.msra.mxu0 %v2102
  %2968 = vmatprep.subr.bf16.mxu0 %v2106
  %2969 = vmatpush1.bf16.msra.mxu0 %v2105
  %2970 = vmatprep.subr.bf16.mxu0 %v2109
  %2971 = vmatpush1.bf16.msra.mxu0 %v2108
  %2972 = vmatprep.subr.bf16.mxu0 %v2112
  %2973 = vmatpush1.bf16.msra.mxu0 %v2111
  %2974 = vmatprep.subr.bf16.mxu0 %v2115
  %2975 = vmatpush1.bf16.msra.mxu0 %v2114
  %2976 = vmatprep.subr.bf16.mxu0 %v2118
  %2977 = vmatpush1.bf16.msra.mxu0 %v2117
  %2978 = vmatprep.subr.bf16.mxu0 %v2121
  %2979 = vmatpush1.bf16.msra.mxu0 %v2120
  %2980 = vmatprep.subr.bf16.mxu0 %v2124
  %2981 = vmatpush1.bf16.msra.mxu0 %v2123
  %2982 = vmatprep.subr.bf16.mxu0 %v2127
  %2983 = vmatpush1.bf16.msra.mxu0 %v2126
  %2984 = vmatprep.subr.bf16.mxu0 %v2130
  %2985 = vmatpush1.bf16.msra.mxu0 %v2129
  %2986 = vmatprep.subr.bf16.mxu0 %v2133
  %2987 = vmatpush1.bf16.msra.mxu0 %v2132
  %2988 = vmatprep.subr.bf16.mxu0 %v2136
  %2989 = vmatpush1.bf16.msra.mxu0 %v2135
  %2990 = vmatprep.subr.bf16.mxu0 %v2139
  %2991 = vmatpush1.bf16.msra.mxu0 %v2138
  %2992 = vmatprep.subr.bf16.mxu0 %v2142
  %2993 = vmatpush1.bf16.msra.mxu0 %v2141
  %2994 = vmatprep.subr.bf16.mxu0 %v2145
  %2995 = vmatpush1.bf16.msra.mxu0 %v2144
  %2996 = vmatprep.subr.bf16.mxu0 %v2148
  %2997 = vmatpush1.bf16.msra.mxu0 %v2147
  %2998 = vmatprep.mubr.bf16.mxu0 %v52
  %2999 = vmatmul.mubr.bf16.gmra.mrb[0].mxu0 %v51
  %v3000 = vpop.f32.mrb[0].mxu0
  %v3001 = vadd.f32 %v650, %v3000
  %v3002 = vpop.f32.mrb[0].mxu0
  %v3003 = vadd.f32 %v654, %v3002
  %v3004 = vpop.f32.mrb[0].mxu0
  %v3005 = vpop.f32.mrb[0].mxu0
  %3006 = vdwg.mxu0
  %3007 = vmatprep.subr.bf16.mxu0 %v2151
  %3008 = vmatpush1.bf16.msra.mxu0 %v2150
  %3009 = vmatprep.subr.bf16.mxu0 %v2154
  %3010 = vmatpush1.bf16.msra.mxu0 %v2153
  %3011 = vmatprep.subr.bf16.mxu0 %v2157
  %3012 = vmatpush1.bf16.msra.mxu0 %v2156
  %3013 = vmatprep.subr.bf16.mxu0 %v2160
  %3014 = vmatpush1.bf16.msra.mxu0 %v2159
  %3015 = vmatprep.subr.bf16.mxu0 %v2163
  %3016 = vmatpush1.bf16.msra.mxu0 %v2162
  %3017 = vmatprep.subr.bf16.mxu0 %v2166
  %3018 = vmatpush1.bf16.msra.mxu0 %v2165
  %3019 = vmatprep.subr.bf16.mxu0 %v2169
  %3020 = vmatpush1.bf16.msra.mxu0 %v2168
  %3021 = vmatprep.subr.bf16.mxu0 %v2172
  %3022 = vmatpush1.bf16.msra.mxu0 %v2171
  %3023 = vmatprep.subr.bf16.mxu0 %v2175
  %3024 = vmatpush1.bf16.msra.mxu0 %v2174
  %3025 = vmatprep.subr.bf16.mxu0 %v2178
  %3026 = vmatpush1.bf16.msra.mxu0 %v2177
  %3027 = vmatprep.subr.bf16.mxu0 %v2181
  %3028 = vmatpush1.bf16.msra.mxu0 %v2180
  %3029 = vmatprep.subr.bf16.mxu0 %v2184
  %3030 = vmatpush1.bf16.msra.mxu0 %v2183
  %3031 = vmatprep.subr.bf16.mxu0 %v2187
  %3032 = vmatpush1.bf16.msra.mxu0 %v2186
  %3033 = vmatprep.subr.bf16.mxu0 %v2190
  %3034 = vmatpush1.bf16.msra.mxu0 %v2189
  %3035 = vmatprep.subr.bf16.mxu0 %v2193
  %3036 = vmatpush1.bf16.msra.mxu0 %v2192
  %3037 = vmatprep.subr.bf16.mxu0 %v2196
  %3038 = vmatpush1.bf16.msra.mxu0 %v2195
  %3039 = vmatprep.mubr.bf16.mxu0 %v54
  %3040 = vmatmul.mubr.bf16.gmra.mrb[0].mxu0 %v53
  %v3041 = vpop.f32.mrb[0].mxu0
  %v3042 = vadd.f32 %v3001, %v3041
  %v3043 = vpop.f32.mrb[0].mxu0
  %v3044 = vadd.f32 %v3003, %v3043
  %v3045 = vpop.f32.mrb[0].mxu0
  %v3046 = vpop.f32.mrb[0].mxu0
  %3047 = vdwg.mxu0
  %3048 = vmatprep.subr.bf16.mxu0 %v2199
  %3049 = vmatpush1.bf16.msra.mxu0 %v2198
  %3050 = vmatprep.subr.bf16.mxu0 %v2202
  %3051 = vmatpush1.bf16.msra.mxu0 %v2201
  %3052 = vmatprep.subr.bf16.mxu0 %v2205
  %3053 = vmatpush1.bf16.msra.mxu0 %v2204
  %3054 = vmatprep.subr.bf16.mxu0 %v2208
  %3055 = vmatpush1.bf16.msra.mxu0 %v2207
  %3056 = vmatprep.subr.bf16.mxu0 %v2211
  %3057 = vmatpush1.bf16.msra.mxu0 %v2210
  %3058 = vmatprep.subr.bf16.mxu0 %v2214
  %3059 = vmatpush1.bf16.msra.mxu0 %v2213
  %3060 = vmatprep.subr.bf16.mxu0 %v2217
  %3061 = vmatpush1.bf16.msra.mxu0 %v2216
  %3062 = vmatprep.subr.bf16.mxu0 %v2220
  %3063 = vmatpush1.bf16.msra.mxu0 %v2219
  %3064 = vmatprep.subr.bf16.mxu0 %v2223
  %3065 = vmatpush1.bf16.msra.mxu0 %v2222
  %3066 = vmatprep.subr.bf16.mxu0 %v2226
  %3067 = vmatpush1.bf16.msra.mxu0 %v2225
  %3068 = vmatprep.subr.bf16.mxu0 %v2229
  %3069 = vmatpush1.bf16.msra.mxu0 %v2228
  %3070 = vmatprep.subr.bf16.mxu0 %v2232
  %3071 = vmatpush1.bf16.msra.mxu0 %v2231
  %3072 = vmatprep.subr.bf16.mxu0 %v2235
  %3073 = vmatpush1.bf16.msra.mxu0 %v2234
  %3074 = vmatprep.subr.bf16.mxu0 %v2238
  %3075 = vmatpush1.bf16.msra.mxu0 %v2237
  %3076 = vmatprep.subr.bf16.mxu0 %v2241
  %3077 = vmatpush1.bf16.msra.mxu0 %v2240
  %3078 = vmatprep.subr.bf16.mxu0 %v2244
  %3079 = vmatpush1.bf16.msra.mxu0 %v2243
  %3080 = vmatprep.mubr.bf16.mxu0 %v56
  %3081 = vmatmul.mubr.bf16.gmra.mrb[0].mxu0 %v55
  %v3082 = vpop.f32.mrb[0].mxu0
  %v3083 = vadd.f32 %v3042, %v3082
  %v3084 = vpop.f32.mrb[0].mxu0
  %v3085 = vadd.f32 %v3044, %v3084
  %v3086 = vpop.f32.mrb[0].mxu0
  %v3087 = vpop.f32.mrb[0].mxu0
  %3088 = vdwg.mxu0
  %3089 = vmatprep.subr.bf16.mxu0 %v2247
  %3090 = vmatpush1.bf16.msra.mxu0 %v2246
  %3091 = vmatprep.subr.bf16.mxu0 %v2250
  %3092 = vmatpush1.bf16.msra.mxu0 %v2249
  %3093 = vmatprep.subr.bf16.mxu0 %v2253
  %3094 = vmatpush1.bf16.msra.mxu0 %v2252
  %3095 = vmatprep.subr.bf16.mxu0 %v2256
  %3096 = vmatpush1.bf16.msra.mxu0 %v2255
  %3097 = vmatprep.subr.bf16.mxu0 %v2259
  %3098 = vmatpush1.bf16.msra.mxu0 %v2258
  %3099 = vmatprep.subr.bf16.mxu0 %v2262
  %3100 = vmatpush1.bf16.msra.mxu0 %v2261
  %3101 = vmatprep.subr.bf16.mxu0 %v2265
  %3102 = vmatpush1.bf16.msra.mxu0 %v2264
  %3103 = vmatprep.subr.bf16.mxu0 %v2268
  %3104 = vmatpush1.bf16.msra.mxu0 %v2267
  %3105 = vmatprep.subr.bf16.mxu0 %v2271
  %3106 = vmatpush1.bf16.msra.mxu0 %v2270
  %3107 = vmatprep.subr.bf16.mxu0 %v2274
  %3108 = vmatpush1.bf16.msra.mxu0 %v2273
  %3109 = vmatprep.subr.bf16.mxu0 %v2277
  %3110 = vmatpush1.bf16.msra.mxu0 %v2276
  %3111 = vmatprep.subr.bf16.mxu0 %v2280
  %3112 = vmatpush1.bf16.msra.mxu0 %v2279
  %3113 = vmatprep.subr.bf16.mxu0 %v2283
  %3114 = vmatpush1.bf16.msra.mxu0 %v2282
  %3115 = vmatprep.subr.bf16.mxu0 %v2286
  %3116 = vmatpush1.bf16.msra.mxu0 %v2285
  %3117 = vmatprep.subr.bf16.mxu0 %v2289
  %3118 = vmatpush1.bf16.msra.mxu0 %v2288
  %3119 = vmatprep.subr.bf16.mxu0 %v2292
  %3120 = vmatpush1.bf16.msra.mxu0 %v2291
  %3121 = vmatprep.mubr.bf16.mxu0 %v58
  %3122 = vmatmul.mubr.bf16.gmra.mrb[0].mxu0 %v57
  %v3123 = vpop.f32.mrb[0].mxu0
  %v3124 = vadd.f32 %v3083, %v3123
  %v3125 = vpop.f32.mrb[0].mxu0
  %v3126 = vadd.f32 %v3085, %v3125
  %v3127 = vpop.f32.mrb[0].mxu0
  %v3128 = vpop.f32.mrb[0].mxu0
  %3129 = vdwg.mxu0
  %3130 = vmatprep.subr.bf16.mxu0 %v2295
  %3131 = vmatpush1.bf16.msra.mxu0 %v2294
  %3132 = vmatprep.subr.bf16.mxu0 %v2298
  %3133 = vmatpush1.bf16.msra.mxu0 %v2297
  %3134 = vmatprep.subr.bf16.mxu0 %v2301
  %3135 = vmatpush1.bf16.msra.mxu0 %v2300
  %3136 = vmatprep.subr.bf16.mxu0 %v2304
  %3137 = vmatpush1.bf16.msra.mxu0 %v2303
  %3138 = vmatprep.subr.bf16.mxu0 %v2307
  %3139 = vmatpush1.bf16.msra.mxu0 %v2306
  %3140 = vmatprep.subr.bf16.mxu0 %v2310
  %3141 = vmatpush1.bf16.msra.mxu0 %v2309
  %3142 = vmatprep.subr.bf16.mxu0 %v2313
  %3143 = vmatpush1.bf16.msra.mxu0 %v2312
  %3144 = vmatprep.subr.bf16.mxu0 %v2316
  %3145 = vmatpush1.bf16.msra.mxu0 %v2315
  %3146 = vmatprep.subr.bf16.mxu0 %v2319
  %3147 = vmatpush1.bf16.msra.mxu0 %v2318
  %3148 = vmatprep.subr.bf16.mxu0 %v2322
  %3149 = vmatpush1.bf16.msra.mxu0 %v2321
  %3150 = vmatprep.subr.bf16.mxu0 %v2325
  %3151 = vmatpush1.bf16.msra.mxu0 %v2324
  %3152 = vmatprep.subr.bf16.mxu0 %v2328
  %3153 = vmatpush1.bf16.msra.mxu0 %v2327
  %3154 = vmatprep.subr.bf16.mxu0 %v2331
  %3155 = vmatpush1.bf16.msra.mxu0 %v2330
  %3156 = vmatprep.subr.bf16.mxu0 %v2334
  %3157 = vmatpush1.bf16.msra.mxu0 %v2333
  %3158 = vmatprep.subr.bf16.mxu0 %v2337
  %3159 = vmatpush1.bf16.msra.mxu0 %v2336
  %3160 = vmatprep.subr.bf16.mxu0 %v2340
  %3161 = vmatpush1.bf16.msra.mxu0 %v2339
  %3162 = vmatprep.mubr.bf16.mxu0 %v60
  %3163 = vmatmul.mubr.bf16.gmra.mrb[0].mxu0 %v59
  %v3164 = vpop.f32.mrb[0].mxu0
  %v3165 = vadd.f32 %v3124, %v3164
  %v3166 = vpop.f32.mrb[0].mxu0
  %v3167 = vadd.f32 %v3126, %v3166
  %v3168 = vpop.f32.mrb[0].mxu0
  %v3169 = vpop.f32.mrb[0].mxu0
  %3170 = vdwg.mxu0
  %3171 = vmatprep.subr.bf16.mxu0 %v2343
  %3172 = vmatpush1.bf16.msra.mxu0 %v2342
  %3173 = vmatprep.subr.bf16.mxu0 %v2346
  %3174 = vmatpush1.bf16.msra.mxu0 %v2345
  %3175 = vmatprep.subr.bf16.mxu0 %v2349
  %3176 = vmatpush1.bf16.msra.mxu0 %v2348
  %3177 = vmatprep.subr.bf16.mxu0 %v2352
  %3178 = vmatpush1.bf16.msra.mxu0 %v2351
  %3179 = vmatprep.subr.bf16.mxu0 %v2355
  %3180 = vmatpush1.bf16.msra.mxu0 %v2354
  %3181 = vmatprep.subr.bf16.mxu0 %v2358
  %3182 = vmatpush1.bf16.msra.mxu0 %v2357
  %3183 = vmatprep.subr.bf16.mxu0 %v2361
  %3184 = vmatpush1.bf16.msra.mxu0 %v2360
  %3185 = vmatprep.subr.bf16.mxu0 %v2364
  %3186 = vmatpush1.bf16.msra.mxu0 %v2363
  %3187 = vmatprep.subr.bf16.mxu0 %v2367
  %3188 = vmatpush1.bf16.msra.mxu0 %v2366
  %3189 = vmatprep.subr.bf16.mxu0 %v2370
  %3190 = vmatpush1.bf16.msra.mxu0 %v2369
  %3191 = vmatprep.subr.bf16.mxu0 %v2373
  %3192 = vmatpush1.bf16.msra.mxu0 %v2372
  %3193 = vmatprep.subr.bf16.mxu0 %v2376
  %3194 = vmatpush1.bf16.msra.mxu0 %v2375
  %3195 = vmatprep.subr.bf16.mxu0 %v2379
  %3196 = vmatpush1.bf16.msra.mxu0 %v2378
  %3197 = vmatprep.subr.bf16.mxu0 %v2382
  %3198 = vmatpush1.bf16.msra.mxu0 %v2381
  %3199 = vmatprep.subr.bf16.mxu0 %v2385
  %3200 = vmatpush1.bf16.msra.mxu0 %v2384
  %3201 = vmatprep.subr.bf16.mxu0 %v2388
  %3202 = vmatpush1.bf16.msra.mxu0 %v2387
  %3203 = vmatprep.mubr.bf16.mxu0 %v62
  %3204 = vmatmul.mubr.bf16.gmra.mrb[0].mxu0 %v61
  %v3205 = vpop.f32.mrb[0].mxu0
  %v3206 = vadd.f32 %v3165, %v3205
  %v3207 = vpop.f32.mrb[0].mxu0
  %v3208 = vadd.f32 %v3167, %v3207
  %v3209 = vpop.f32.mrb[0].mxu0
  %v3210 = vpop.f32.mrb[0].mxu0
  %3211 = vdwg.mxu0
  %3212 = vmatprep.subr.bf16.mxu0 %v2391
  %3213 = vmatpush1.bf16.msra.mxu0 %v2390
  %3214 = vmatprep.subr.bf16.mxu0 %v2394
  %3215 = vmatpush1.bf16.msra.mxu0 %v2393
  %3216 = vmatprep.subr.bf16.mxu0 %v2397
  %3217 = vmatpush1.bf16.msra.mxu0 %v2396
  %3218 = vmatprep.subr.bf16.mxu0 %v2400
  %3219 = vmatpush1.bf16.msra.mxu0 %v2399
  %3220 = vmatprep.subr.bf16.mxu0 %v2403
  %3221 = vmatpush1.bf16.msra.mxu0 %v2402
  %3222 = vmatprep.subr.bf16.mxu0 %v2406
  %3223 = vmatpush1.bf16.msra.mxu0 %v2405
  %3224 = vmatprep.subr.bf16.mxu0 %v2409
  %3225 = vmatpush1.bf16.msra.mxu0 %v2408
  %3226 = vmatprep.subr.bf16.mxu0 %v2412
  %3227 = vmatpush1.bf16.msra.mxu0 %v2411
  %3228 = vmatprep.subr.bf16.mxu0 %v2415
  %3229 = vmatpush1.bf16.msra.mxu0 %v2414
  %3230 = vmatprep.subr.bf16.mxu0 %v2418
  %3231 = vmatpush1.bf16.msra.mxu0 %v2417
  %3232 = vmatprep.subr.bf16.mxu0 %v2421
  %3233 = vmatpush1.bf16.msra.mxu0 %v2420
  %3234 = vmatprep.subr.bf16.mxu0 %v2424
  %3235 = vmatpush1.bf16.msra.mxu0 %v2423
  %3236 = vmatprep.subr.bf16.mxu0 %v2427
  %3237 = vmatpush1.bf16.msra.mxu0 %v2426
  %3238 = vmatprep.subr.bf16.mxu0 %v2430
  %3239 = vmatpush1.bf16.msra.mxu0 %v2429
  %3240 = vmatprep.subr.bf16.mxu0 %v2433
  %3241 = vmatpush1.bf16.msra.mxu0 %v2432
  %3242 = vmatprep.subr.bf16.mxu0 %v2436
  %3243 = vmatpush1.bf16.msra.mxu0 %v2435
  %3244 = vmatprep.mubr.bf16.mxu0 %v64
  %3245 = vmatmul.mubr.bf16.gmra.mrb[0].mxu0 %v63
  %v3246 = vpop.f32.mrb[0].mxu0
  %v3247 = vadd.f32 %v3206, %v3246
  %v3248 = vpop.f32.mrb[0].mxu0
  %v3249 = vadd.f32 %v3208, %v3248
  %v3250 = vpop.f32.mrb[0].mxu0
  %v3251 = vpop.f32.mrb[0].mxu0
  %3252 = vdwg.mxu0
  %3253 = vmatprep.subr.bf16.mxu0 %v2439
  %3254 = vmatpush1.bf16.msra.mxu0 %v2438
  %3255 = vmatprep.subr.bf16.mxu0 %v2442
  %3256 = vmatpush1.bf16.msra.mxu0 %v2441
  %3257 = vmatprep.subr.bf16.mxu0 %v2445
  %3258 = vmatpush1.bf16.msra.mxu0 %v2444
  %3259 = vmatprep.subr.bf16.mxu0 %v2448
  %3260 = vmatpush1.bf16.msra.mxu0 %v2447
  %3261 = vmatprep.subr.bf16.mxu0 %v2451
  %3262 = vmatpush1.bf16.msra.mxu0 %v2450
  %3263 = vmatprep.subr.bf16.mxu0 %v2454
  %3264 = vmatpush1.bf16.msra.mxu0 %v2453
  %3265 = vmatprep.subr.bf16.mxu0 %v2457
  %3266 = vmatpush1.bf16.msra.mxu0 %v2456
  %3267 = vmatprep.subr.bf16.mxu0 %v2460
  %3268 = vmatpush1.bf16.msra.mxu0 %v2459
  %3269 = vmatprep.subr.bf16.mxu0 %v2463
  %3270 = vmatpush1.bf16.msra.mxu0 %v2462
  %3271 = vmatprep.subr.bf16.mxu0 %v2466
  %3272 = vmatpush1.bf16.msra.mxu0 %v2465
  %3273 = vmatprep.subr.bf16.mxu0 %v2469
  %3274 = vmatpush1.bf16.msra.mxu0 %v2468
  %3275 = vmatprep.subr.bf16.mxu0 %v2472
  %3276 = vmatpush1.bf16.msra.mxu0 %v2471
  %3277 = vmatprep.subr.bf16.mxu0 %v2475
  %3278 = vmatpush1.bf16.msra.mxu0 %v2474
  %3279 = vmatprep.subr.bf16.mxu0 %v2478
  %3280 = vmatpush1.bf16.msra.mxu0 %v2477
  %3281 = vmatprep.subr.bf16.mxu0 %v2481
  %3282 = vmatpush1.bf16.msra.mxu0 %v2480
  %3283 = vmatprep.subr.bf16.mxu0 %v2484
  %3284 = vmatpush1.bf16.msra.mxu0 %v2483
  %3285 = vmatprep.mubr.bf16.mxu0 %v66
  %3286 = vmatmul.mubr.bf16.gmra.mrb[0].mxu0 %v65
  %v3287 = vpop.f32.mrb[0].mxu0
  %v3288 = vadd.f32 %v3247, %v3287
  %v3289 = vpop.f32.mrb[0].mxu0
  %v3290 = vadd.f32 %v3249, %v3289
  %v3291 = vpop.f32.mrb[0].mxu0
  %v3292 = vpop.f32.mrb[0].mxu0
  %3293 = vdwg.mxu0
  %3294 = vmatprep.subr.bf16.mxu0 %v2487
  %3295 = vmatpush1.bf16.msra.mxu0 %v2486
  %3296 = vmatprep.subr.bf16.mxu0 %v2490
  %3297 = vmatpush1.bf16.msra.mxu0 %v2489
  %3298 = vmatprep.subr.bf16.mxu0 %v2493
  %3299 = vmatpush1.bf16.msra.mxu0 %v2492
  %3300 = vmatprep.subr.bf16.mxu0 %v2496
  %3301 = vmatpush1.bf16.msra.mxu0 %v2495
  %3302 = vmatprep.subr.bf16.mxu0 %v2499
  %3303 = vmatpush1.bf16.msra.mxu0 %v2498
  %3304 = vmatprep.subr.bf16.mxu0 %v2502
  %3305 = vmatpush1.bf16.msra.mxu0 %v2501
  %3306 = vmatprep.subr.bf16.mxu0 %v2505
  %3307 = vmatpush1.bf16.msra.mxu0 %v2504
  %3308 = vmatprep.subr.bf16.mxu0 %v2508
  %3309 = vmatpush1.bf16.msra.mxu0 %v2507
  %3310 = vmatprep.subr.bf16.mxu0 %v2511
  %3311 = vmatpush1.bf16.msra.mxu0 %v2510
  %3312 = vmatprep.subr.bf16.mxu0 %v2514
  %3313 = vmatpush1.bf16.msra.mxu0 %v2513
  %3314 = vmatprep.subr.bf16.mxu0 %v2517
  %3315 = vmatpush1.bf16.msra.mxu0 %v2516
  %3316 = vmatprep.subr.bf16.mxu0 %v2520
  %3317 = vmatpush1.bf16.msra.mxu0 %v2519
  %3318 = vmatprep.subr.bf16.mxu0 %v2523
  %3319 = vmatpush1.bf16.msra.mxu0 %v2522
  %3320 = vmatprep.subr.bf16.mxu0 %v2526
  %3321 = vmatpush1.bf16.msra.mxu0 %v2525
  %3322 = vmatprep.subr.bf16.mxu0 %v2529
  %3323 = vmatpush1.bf16.msra.mxu0 %v2528
  %3324 = vmatprep.subr.bf16.mxu0 %v2532
  %3325 = vmatpush1.bf16.msra.mxu0 %v2531
  %3326 = vmatprep.mubr.bf16.mxu0 %v68
  %3327 = vmatmul.mubr.bf16.gmra.mrb[0].mxu0 %v67
  %v3328 = vpop.f32.mrb[0].mxu0
  %v3329 = vadd.f32 %v3288, %v3328
  %v3330 = vpop.f32.mrb[0].mxu0
  %v3331 = vadd.f32 %v3290, %v3330
  %v3332 = vpop.f32.mrb[0].mxu0
  %v3333 = vpop.f32.mrb[0].mxu0
  %3334 = vdwg.mxu0
  %3335 = vmatprep.subr.bf16.mxu0 0
  %3336 = vmatpush1.bf16.msra.mxu0 %v2104
  %3337 = vmatprep.subr.bf16.mxu0 0
  %3338 = vmatpush1.bf16.msra.mxu0 %v2107
  %3339 = vmatprep.subr.bf16.mxu0 0
  %3340 = vmatpush1.bf16.msra.mxu0 %v2110
  %3341 = vmatprep.subr.bf16.mxu0 0
  %3342 = vmatpush1.bf16.msra.mxu0 %v2113
  %3343 = vmatprep.subr.bf16.mxu0 0
  %3344 = vmatpush1.bf16.msra.mxu0 %v2116
  %3345 = vmatprep.subr.bf16.mxu0 0
  %3346 = vmatpush1.bf16.msra.mxu0 %v2119
  %3347 = vmatprep.subr.bf16.mxu0 0
  %3348 = vmatpush1.bf16.msra.mxu0 %v2122
  %3349 = vmatprep.subr.bf16.mxu0 0
  %3350 = vmatpush1.bf16.msra.mxu0 %v2125
  %3351 = vmatprep.subr.bf16.mxu0 0
  %3352 = vmatpush1.bf16.msra.mxu0 %v2128
  %3353 = vmatprep.subr.bf16.mxu0 0
  %3354 = vmatpush1.bf16.msra.mxu0 %v2131
  %3355 = vmatprep.subr.bf16.mxu0 0
  %3356 = vmatpush1.bf16.msra.mxu0 %v2134
  %3357 = vmatprep.subr.bf16.mxu0 0
  %3358 = vmatpush1.bf16.msra.mxu0 %v2137
  %3359 = vmatprep.subr.bf16.mxu0 0
  %3360 = vmatpush1.bf16.msra.mxu0 %v2140
  %3361 = vmatprep.subr.bf16.mxu0 0
  %3362 = vmatpush1.bf16.msra.mxu0 %v2143
  %3363 = vmatprep.subr.bf16.mxu0 0
  %3364 = vmatpush1.bf16.msra.mxu0 %v2146
  %3365 = vmatprep.subr.bf16.mxu0 0
  %3366 = vmatpush1.bf16.msra.mxu0 %v2149
  %3367 = vmatprep.mubr.bf16.mxu0 %v52
  %3368 = vmatmul.mubr.bf16.gmra.mrb[0].mxu0 %v51
  %v3369 = vpop.f32.mrb[0].mxu0
  %v3370 = vadd.f32 %v658, %v3369
  %v3371 = vpop.f32.mrb[0].mxu0
  %v3372 = vpop.f32.mrb[0].mxu0
  %v3373 = vpop.f32.mrb[0].mxu0
  %3374 = vdwg.mxu0
  %3375 = vmatprep.subr.bf16.mxu0 0
  %3376 = vmatpush1.bf16.msra.mxu0 %v2152
  %3377 = vmatprep.subr.bf16.mxu0 0
  %3378 = vmatpush1.bf16.msra.mxu0 %v2155
  %3379 = vmatprep.subr.bf16.mxu0 0
  %3380 = vmatpush1.bf16.msra.mxu0 %v2158
  %3381 = vmatprep.subr.bf16.mxu0 0
  %3382 = vmatpush1.bf16.msra.mxu0 %v2161
  %3383 = vmatprep.subr.bf16.mxu0 0
  %3384 = vmatpush1.bf16.msra.mxu0 %v2164
  %3385 = vmatprep.subr.bf16.mxu0 0
  %3386 = vmatpush1.bf16.msra.mxu0 %v2167
  %3387 = vmatprep.subr.bf16.mxu0 0
  %3388 = vmatpush1.bf16.msra.mxu0 %v2170
  %3389 = vmatprep.subr.bf16.mxu0 0
  %3390 = vmatpush1.bf16.msra.mxu0 %v2173
  %3391 = vmatprep.subr.bf16.mxu0 0
  %3392 = vmatpush1.bf16.msra.mxu0 %v2176
  %3393 = vmatprep.subr.bf16.mxu0 0
  %3394 = vmatpush1.bf16.msra.mxu0 %v2179
  %3395 = vmatprep.subr.bf16.mxu0 0
  %3396 = vmatpush1.bf16.msra.mxu0 %v2182
  %3397 = vmatprep.subr.bf16.mxu0 0
  %3398 = vmatpush1.bf16.msra.mxu0 %v2185
  %3399 = vmatprep.subr.bf16.mxu0 0
  %3400 = vmatpush1.bf16.msra.mxu0 %v2188
  %3401 = vmatprep.subr.bf16.mxu0 0
  %3402 = vmatpush1.bf16.msra.mxu0 %v2191
  %3403 = vmatprep.subr.bf16.mxu0 0
  %3404 = vmatpush1.bf16.msra.mxu0 %v2194
  %3405 = vmatprep.subr.bf16.mxu0 0
  %3406 = vmatpush1.bf16.msra.mxu0 %v2197
  %3407 = vmatprep.mubr.bf16.mxu0 %v54
  %3408 = vmatmul.mubr.bf16.gmra.mrb[0].mxu0 %v53
  %v3409 = vpop.f32.mrb[0].mxu0
  %v3410 = vadd.f32 %v3370, %v3409
  %v3411 = vpop.f32.mrb[0].mxu0
  %v3412 = vpop.f32.mrb[0].mxu0
  %v3413 = vpop.f32.mrb[0].mxu0
  %3414 = vdwg.mxu0
  %3415 = vmatprep.subr.bf16.mxu0 0
  %3416 = vmatpush1.bf16.msra.mxu0 %v2200
  %3417 = vmatprep.subr.bf16.mxu0 0
  %3418 = vmatpush1.bf16.msra.mxu0 %v2203
  %3419 = vmatprep.subr.bf16.mxu0 0
  %3420 = vmatpush1.bf16.msra.mxu0 %v2206
  %3421 = vmatprep.subr.bf16.mxu0 0
  %3422 = vmatpush1.bf16.msra.mxu0 %v2209
  %3423 = vmatprep.subr.bf16.mxu0 0
  %3424 = vmatpush1.bf16.msra.mxu0 %v2212
  %3425 = vmatprep.subr.bf16.mxu0 0
  %3426 = vmatpush1.bf16.msra.mxu0 %v2215
  %3427 = vmatprep.subr.bf16.mxu0 0
  %3428 = vmatpush1.bf16.msra.mxu0 %v2218
  %3429 = vmatprep.subr.bf16.mxu0 0
  %3430 = vmatpush1.bf16.msra.mxu0 %v2221
  %3431 = vmatprep.subr.bf16.mxu0 0
  %3432 = vmatpush1.bf16.msra.mxu0 %v2224
  %3433 = vmatprep.subr.bf16.mxu0 0
  %3434 = vmatpush1.bf16.msra.mxu0 %v2227
  %3435 = vmatprep.subr.bf16.mxu0 0
  %3436 = vmatpush1.bf16.msra.mxu0 %v2230
  %3437 = vmatprep.subr.bf16.mxu0 0
  %3438 = vmatpush1.bf16.msra.mxu0 %v2233
  %3439 = vmatprep.subr.bf16.mxu0 0
  %3440 = vmatpush1.bf16.msra.mxu0 %v2236
  %3441 = vmatprep.subr.bf16.mxu0 0
  %3442 = vmatpush1.bf16.msra.mxu0 %v2239
  %3443 = vmatprep.subr.bf16.mxu0 0
  %3444 = vmatpush1.bf16.msra.mxu0 %v2242
  %3445 = vmatprep.subr.bf16.mxu0 0
  %3446 = vmatpush1.bf16.msra.mxu0 %v2245
  %3447 = vmatprep.mubr.bf16.mxu0 %v56
  %3448 = vmatmul.mubr.bf16.gmra.mrb[0].mxu0 %v55
  %v3449 = vpop.f32.mrb[0].mxu0
  %v3450 = vadd.f32 %v3410, %v3449
  %v3451 = vpop.f32.mrb[0].mxu0
  %v3452 = vpop.f32.mrb[0].mxu0
  %v3453 = vpop.f32.mrb[0].mxu0
  %3454 = vdwg.mxu0
  %3455 = vmatprep.subr.bf16.mxu0 0
  %3456 = vmatpush1.bf16.msra.mxu0 %v2248
  %3457 = vmatprep.subr.bf16.mxu0 0
  %3458 = vmatpush1.bf16.msra.mxu0 %v2251
  %3459 = vmatprep.subr.bf16.mxu0 0
  %3460 = vmatpush1.bf16.msra.mxu0 %v2254
  %3461 = vmatprep.subr.bf16.mxu0 0
  %3462 = vmatpush1.bf16.msra.mxu0 %v2257
  %3463 = vmatprep.subr.bf16.mxu0 0
  %3464 = vmatpush1.bf16.msra.mxu0 %v2260
  %3465 = vmatprep.subr.bf16.mxu0 0
  %3466 = vmatpush1.bf16.msra.mxu0 %v2263
  %3467 = vmatprep.subr.bf16.mxu0 0
  %3468 = vmatpush1.bf16.msra.mxu0 %v2266
  %3469 = vmatprep.subr.bf16.mxu0 0
  %3470 = vmatpush1.bf16.msra.mxu0 %v2269
  %3471 = vmatprep.subr.bf16.mxu0 0
  %3472 = vmatpush1.bf16.msra.mxu0 %v2272
  %3473 = vmatprep.subr.bf16.mxu0 0
  %3474 = vmatpush1.bf16.msra.mxu0 %v2275
  %3475 = vmatprep.subr.bf16.mxu0 0
  %3476 = vmatpush1.bf16.msra.mxu0 %v2278
  %3477 = vmatprep.subr.bf16.mxu0 0
  %3478 = vmatpush1.bf16.msra.mxu0 %v2281
  %3479 = vmatprep.subr.bf16.mxu0 0
  %3480 = vmatpush1.bf16.msra.mxu0 %v2284
  %3481 = vmatprep.subr.bf16.mxu0 0
  %3482 = vmatpush1.bf16.msra.mxu0 %v2287
  %3483 = vmatprep.subr.bf16.mxu0 0
  %3484 = vmatpush1.bf16.msra.mxu0 %v2290
  %3485 = vmatprep.subr.bf16.mxu0 0
  %3486 = vmatpush1.bf16.msra.mxu0 %v2293
  %3487 = vmatprep.mubr.bf16.mxu0 %v58
  %3488 = vmatmul.mubr.bf16.gmra.mrb[0].mxu0 %v57
  %v3489 = vpop.f32.mrb[0].mxu0
  %v3490 = vadd.f32 %v3450, %v3489
  %v3491 = vpop.f32.mrb[0].mxu0
  %v3492 = vpop.f32.mrb[0].mxu0
  %v3493 = vpop.f32.mrb[0].mxu0
  %3494 = vdwg.mxu0
  %3495 = vmatprep.subr.bf16.mxu0 0
  %3496 = vmatpush1.bf16.msra.mxu0 %v2296
  %3497 = vmatprep.subr.bf16.mxu0 0
  %3498 = vmatpush1.bf16.msra.mxu0 %v2299
  %3499 = vmatprep.subr.bf16.mxu0 0
  %3500 = vmatpush1.bf16.msra.mxu0 %v2302
  %3501 = vmatprep.subr.bf16.mxu0 0
  %3502 = vmatpush1.bf16.msra.mxu0 %v2305
  %3503 = vmatprep.subr.bf16.mxu0 0
  %3504 = vmatpush1.bf16.msra.mxu0 %v2308
  %3505 = vmatprep.subr.bf16.mxu0 0
  %3506 = vmatpush1.bf16.msra.mxu0 %v2311
  %3507 = vmatprep.subr.bf16.mxu0 0
  %3508 = vmatpush1.bf16.msra.mxu0 %v2314
  %3509 = vmatprep.subr.bf16.mxu0 0
  %3510 = vmatpush1.bf16.msra.mxu0 %v2317
  %3511 = vmatprep.subr.bf16.mxu0 0
  %3512 = vmatpush1.bf16.msra.mxu0 %v2320
  %3513 = vmatprep.subr.bf16.mxu0 0
  %3514 = vmatpush1.bf16.msra.mxu0 %v2323
  %3515 = vmatprep.subr.bf16.mxu0 0
  %3516 = vmatpush1.bf16.msra.mxu0 %v2326
  %3517 = vmatprep.subr.bf16.mxu0 0
  %3518 = vmatpush1.bf16.msra.mxu0 %v2329
  %3519 = vmatprep.subr.bf16.mxu0 0
  %3520 = vmatpush1.bf16.msra.mxu0 %v2332
  %3521 = vmatprep.subr.bf16.mxu0 0
  %3522 = vmatpush1.bf16.msra.mxu0 %v2335
  %3523 = vmatprep.subr.bf16.mxu0 0
  %3524 = vmatpush1.bf16.msra.mxu0 %v2338
  %3525 = vmatprep.subr.bf16.mxu0 0
  %3526 = vmatpush1.bf16.msra.mxu0 %v2341
  %3527 = vmatprep.mubr.bf16.mxu0 %v60
  %3528 = vmatmul.mubr.bf16.gmra.mrb[0].mxu0 %v59
  %v3529 = vpop.f32.mrb[0].mxu0
  %v3530 = vadd.f32 %v3490, %v3529
  %v3531 = vpop.f32.mrb[0].mxu0
  %v3532 = vpop.f32.mrb[0].mxu0
  %v3533 = vpop.f32.mrb[0].mxu0
  %3534 = vdwg.mxu0
  %3535 = vmatprep.subr.bf16.mxu0 0
  %3536 = vmatpush1.bf16.msra.mxu0 %v2344
  %3537 = vmatprep.subr.bf16.mxu0 0
  %3538 = vmatpush1.bf16.msra.mxu0 %v2347
  %3539 = vmatprep.subr.bf16.mxu0 0
  %3540 = vmatpush1.bf16.msra.mxu0 %v2350
  %3541 = vmatprep.subr.bf16.mxu0 0
  %3542 = vmatpush1.bf16.msra.mxu0 %v2353
  %3543 = vmatprep.subr.bf16.mxu0 0
  %3544 = vmatpush1.bf16.msra.mxu0 %v2356
  %3545 = vmatprep.subr.bf16.mxu0 0
  %3546 = vmatpush1.bf16.msra.mxu0 %v2359
  %3547 = vmatprep.subr.bf16.mxu0 0
  %3548 = vmatpush1.bf16.msra.mxu0 %v2362
  %3549 = vmatprep.subr.bf16.mxu0 0
  %3550 = vmatpush1.bf16.msra.mxu0 %v2365
  %3551 = vmatprep.subr.bf16.mxu0 0
  %3552 = vmatpush1.bf16.msra.mxu0 %v2368
  %3553 = vmatprep.subr.bf16.mxu0 0
  %3554 = vmatpush1.bf16.msra.mxu0 %v2371
  %3555 = vmatprep.subr.bf16.mxu0 0
  %3556 = vmatpush1.bf16.msra.mxu0 %v2374
  %3557 = vmatprep.subr.bf16.mxu0 0
  %3558 = vmatpush1.bf16.msra.mxu0 %v2377
  %3559 = vmatprep.subr.bf16.mxu0 0
  %3560 = vmatpush1.bf16.msra.mxu0 %v2380
  %3561 = vmatprep.subr.bf16.mxu0 0
  %3562 = vmatpush1.bf16.msra.mxu0 %v2383
  %3563 = vmatprep.subr.bf16.mxu0 0
  %3564 = vmatpush1.bf16.msra.mxu0 %v2386
  %3565 = vmatprep.subr.bf16.mxu0 0
  %3566 = vmatpush1.bf16.msra.mxu0 %v2389
  %3567 = vmatprep.mubr.bf16.mxu0 %v62
  %3568 = vmatmul.mubr.bf16.gmra.mrb[0].mxu0 %v61
  %v3569 = vpop.f32.mrb[0].mxu0
  %v3570 = vadd.f32 %v3530, %v3569
  %v3571 = vpop.f32.mrb[0].mxu0
  %v3572 = vpop.f32.mrb[0].mxu0
  %v3573 = vpop.f32.mrb[0].mxu0
  %3574 = vdwg.mxu0
  %3575 = vmatprep.subr.bf16.mxu0 0
  %3576 = vmatpush1.bf16.msra.mxu0 %v2392
  %3577 = vmatprep.subr.bf16.mxu0 0
  %3578 = vmatpush1.bf16.msra.mxu0 %v2395
  %3579 = vmatprep.subr.bf16.mxu0 0
  %3580 = vmatpush1.bf16.msra.mxu0 %v2398
  %3581 = vmatprep.subr.bf16.mxu0 0
  %3582 = vmatpush1.bf16.msra.mxu0 %v2401
  %3583 = vmatprep.subr.bf16.mxu0 0
  %3584 = vmatpush1.bf16.msra.mxu0 %v2404
  %3585 = vmatprep.subr.bf16.mxu0 0
  %3586 = vmatpush1.bf16.msra.mxu0 %v2407
  %3587 = vmatprep.subr.bf16.mxu0 0
  %3588 = vmatpush1.bf16.msra.mxu0 %v2410
  %3589 = vmatprep.subr.bf16.mxu0 0
  %3590 = vmatpush1.bf16.msra.mxu0 %v2413
  %3591 = vmatprep.subr.bf16.mxu0 0
  %3592 = vmatpush1.bf16.msra.mxu0 %v2416
  %3593 = vmatprep.subr.bf16.mxu0 0
  %3594 = vmatpush1.bf16.msra.mxu0 %v2419
  %3595 = vmatprep.subr.bf16.mxu0 0
  %3596 = vmatpush1.bf16.msra.mxu0 %v2422
  %3597 = vmatprep.subr.bf16.mxu0 0
  %3598 = vmatpush1.bf16.msra.mxu0 %v2425
  %3599 = vmatprep.subr.bf16.mxu0 0
  %3600 = vmatpush1.bf16.msra.mxu0 %v2428
  %3601 = vmatprep.subr.bf16.mxu0 0
  %3602 = vmatpush1.bf16.msra.mxu0 %v2431
  %3603 = vmatprep.subr.bf16.mxu0 0
  %3604 = vmatpush1.bf16.msra.mxu0 %v2434
  %3605 = vmatprep.subr.bf16.mxu0 0
  %3606 = vmatpush1.bf16.msra.mxu0 %v2437
  %3607 = vmatprep.mubr.bf16.mxu0 %v64
  %3608 = vmatmul.mubr.bf16.gmra.mrb[0].mxu0 %v63
  %v3609 = vpop.f32.mrb[0].mxu0
  %v3610 = vadd.f32 %v3570, %v3609
  %v3611 = vpop.f32.mrb[0].mxu0
  %v3612 = vpop.f32.mrb[0].mxu0
  %v3613 = vpop.f32.mrb[0].mxu0
  %3614 = vdwg.mxu0
  %3615 = vmatprep.subr.bf16.mxu0 0
  %3616 = vmatpush1.bf16.msra.mxu0 %v2440
  %3617 = vmatprep.subr.bf16.mxu0 0
  %3618 = vmatpush1.bf16.msra.mxu0 %v2443
  %3619 = vmatprep.subr.bf16.mxu0 0
  %3620 = vmatpush1.bf16.msra.mxu0 %v2446
  %3621 = vmatprep.subr.bf16.mxu0 0
  %3622 = vmatpush1.bf16.msra.mxu0 %v2449
  %3623 = vmatprep.subr.bf16.mxu0 0
  %3624 = vmatpush1.bf16.msra.mxu0 %v2452
  %3625 = vmatprep.subr.bf16.mxu0 0
  %3626 = vmatpush1.bf16.msra.mxu0 %v2455
  %3627 = vmatprep.subr.bf16.mxu0 0
  %3628 = vmatpush1.bf16.msra.mxu0 %v2458
  %3629 = vmatprep.subr.bf16.mxu0 0
  %3630 = vmatpush1.bf16.msra.mxu0 %v2461
  %3631 = vmatprep.subr.bf16.mxu0 0
  %3632 = vmatpush1.bf16.msra.mxu0 %v2464
  %3633 = vmatprep.subr.bf16.mxu0 0
  %3634 = vmatpush1.bf16.msra.mxu0 %v2467
  %3635 = vmatprep.subr.bf16.mxu0 0
  %3636 = vmatpush1.bf16.msra.mxu0 %v2470
  %3637 = vmatprep.subr.bf16.mxu0 0
  %3638 = vmatpush1.bf16.msra.mxu0 %v2473
  %3639 = vmatprep.subr.bf16.mxu0 0
  %3640 = vmatpush1.bf16.msra.mxu0 %v2476
  %3641 = vmatprep.subr.bf16.mxu0 0
  %3642 = vmatpush1.bf16.msra.mxu0 %v2479
  %3643 = vmatprep.subr.bf16.mxu0 0
  %3644 = vmatpush1.bf16.msra.mxu0 %v2482
  %3645 = vmatprep.subr.bf16.mxu0 0
  %3646 = vmatpush1.bf16.msra.mxu0 %v2485
  %3647 = vmatprep.mubr.bf16.mxu0 %v66
  %3648 = vmatmul.mubr.bf16.gmra.mrb[0].mxu0 %v65
  %v3649 = vpop.f32.mrb[0].mxu0
  %v3650 = vadd.f32 %v3610, %v3649
  %v3651 = vpop.f32.mrb[0].mxu0
  %v3652 = vpop.f32.mrb[0].mxu0
  %v3653 = vpop.f32.mrb[0].mxu0
  %3654 = vdwg.mxu0
  %3655 = vmatprep.subr.bf16.mxu0 0
  %3656 = vmatpush1.bf16.msra.mxu0 %v2488
  %3657 = vmatprep.subr.bf16.mxu0 0
  %3658 = vmatpush1.bf16.msra.mxu0 %v2491
  %3659 = vmatprep.subr.bf16.mxu0 0
  %3660 = vmatpush1.bf16.msra.mxu0 %v2494
  %3661 = vmatprep.subr.bf16.mxu0 0
  %3662 = vmatpush1.bf16.msra.mxu0 %v2497
  %3663 = vmatprep.subr.bf16.mxu0 0
  %3664 = vmatpush1.bf16.msra.mxu0 %v2500
  %3665 = vmatprep.subr.bf16.mxu0 0
  %3666 = vmatpush1.bf16.msra.mxu0 %v2503
  %3667 = vmatprep.subr.bf16.mxu0 0
  %3668 = vmatpush1.bf16.msra.mxu0 %v2506
  %3669 = vmatprep.subr.bf16.mxu0 0
  %3670 = vmatpush1.bf16.msra.mxu0 %v2509
  %3671 = vmatprep.subr.bf16.mxu0 0
  %3672 = vmatpush1.bf16.msra.mxu0 %v2512
  %3673 = vmatprep.subr.bf16.mxu0 0
  %3674 = vmatpush1.bf16.msra.mxu0 %v2515
  %3675 = vmatprep.subr.bf16.mxu0 0
  %3676 = vmatpush1.bf16.msra.mxu0 %v2518
  %3677 = vmatprep.subr.bf16.mxu0 0
  %3678 = vmatpush1.bf16.msra.mxu0 %v2521
  %3679 = vmatprep.subr.bf16.mxu0 0
  %3680 = vmatpush1.bf16.msra.mxu0 %v2524
  %3681 = vmatprep.subr.bf16.mxu0 0
  %3682 = vmatpush1.bf16.msra.mxu0 %v2527
  %3683 = vmatprep.subr.bf16.mxu0 0
  %3684 = vmatpush1.bf16.msra.mxu0 %v2530
  %3685 = vmatprep.subr.bf16.mxu0 0
  %3686 = vmatpush1.bf16.msra.mxu0 %v2533
  %3687 = vmatprep.mubr.bf16.mxu0 %v68
  %3688 = vmatmul.mubr.bf16.gmra.mrb[0].mxu0 %v67
  %v3689 = vpop.f32.mrb[0].mxu0
  %v3690 = vadd.f32 %v3650, %v3689
  %v3691 = vpop.f32.mrb[0].mxu0
  %v3692 = vpop.f32.mrb[0].mxu0
  %v3693 = vpop.f32.mrb[0].mxu0
  %3694 = vdwg.mxu0
  %v3697 = vcombine.low %v3329, %v3331
  %3699 = vst [vmem:[%s3] sm:$0xff] %v3697
  %3700 = vst [vmem:[%s3 + $0x8] sm:$0xf] %v3690
  // Predicated region
  $region14: #{forward.2} parent=0 // pred_check
    _
  $region15: #{forward.2} parent=0 // pred_check_branch
    %3702 = sbr.rel (0) target = $region17
  $region16: #{forward.2} parent=0 // pred_region
    _
  $region17: #{forward.2} parent=0 // pred_fallthru
    _
  // Predicated region
  $region18: #{forward.2} parent=0 // pred_check
    _
  $region19: #{forward.2} parent=0 // pred_check_branch
    %3704 = sbr.rel (0) target = $region21
  $region20: #{forward.2} parent=0 // pred_region
    _
  $region21: #{forward.2} parent=0 // pred_fallthru
    _

// kernel: forward.3
$region0: #{forward.3}
  #allocation0 [shape = 'u32[]', space=smem, size = 0x4, offset = 0x4, fixed_abs, tag = 'smem constant byte address 0x4 - core index']
  #allocation1 [shape = 'u32[144,128]{1,0:T(1,128)}', space=vmem, size = 0x12000, scoped, tag = 'internal scratch']
  %s0 = inlined_call_operand.vmem [shape: f32[4,7,256], index: 0, kind: input, shape index: {}]
  %s1 = inlined_call_operand.vmem [shape: f32[4,8,7], index: 1, kind: input, shape index: {}]
  %s2 = inlined_call_operand.vmem [shape: f32[4,8,9], index: 2, kind: input, shape index: {}]
  %s3 = inlined_call_operand.vmem [shape: f32[4,17,9], index: 3, kind: input, shape index: {}]
  %s4 = inlined_call_operand.vmem [shape: f32[2,17,256], index: 4, kind: input, shape index: {}]
  %s5 = inlined_call_operand.hbm [shape: f32[3,4,17], index: 5, kind: output, shape index: {}]
  %s6 = sld [smem:[#allocation0]]
  $region30: #{forward.3} parent=0
    _
  %s8 = ssub.s32 1, %s6
  %s9 = scalar_select 0, %s8, %s6
  $region1: #{forward.3} parent=0
    #allocation2 [shape = 'u8[6144]{0}', space=vmem, size = 0x1800, scoped, tag = 'output window, operand 0, single buffered']
    #allocation3 [shape = 's32[1]{0}', space=sflag, size = 0x4, scoped, tag = 'scoped memory for forward.3']
    %10 = vsyncpa [#allocation3], 0
    // Predicated region
    $region2: #{forward.3} parent=1 // pred_check
      _
    $region3: #{forward.3} parent=1 // pred_check_branch
      %12 = sbr.rel (0) target = $region5
    $region4: #{forward.3} parent=1 // pred_region
      _
    $region5: #{forward.3} parent=1 // pred_fallthru
      _
    // Predicated region
    $region6: #{forward.3} parent=1 // pred_check
      _
    $region7: #{forward.3} parent=1 // pred_check_branch
      %14 = sbr.rel (0) target = $region9
    $region8: #{forward.3} parent=1 // pred_region
      _
    $region9: #{forward.3} parent=1 // pred_fallthru
      _
    // Predicated region
    $region10: #{forward.3} parent=1 // pred_check
      _
    $region11: #{forward.3} parent=1 // pred_check_branch
      %16 = sbr.rel (0) target = $region13
    $region12: #{forward.3} parent=1 // pred_region
      _
    $region13: #{forward.3} parent=1 // pred_fallthru
      _
    // Predicated region
    $region14: #{forward.3} parent=1 // pred_check
      _
    $region15: #{forward.3} parent=1 // pred_check_branch
      %18 = sbr.rel (0) target = $region17
    $region16: #{forward.3} parent=1 // pred_region
      _
    $region17: #{forward.3} parent=1 // pred_fallthru
      _
    // Predicated region
    $region18: #{forward.3} parent=1 // pred_check
      _
    $region19: #{forward.3} parent=1 // pred_check_branch
      %20 = sbr.rel (0) target = $region21
    $region20: #{forward.3} parent=1 // pred_region
      _
    $region21: #{forward.3} parent=1 // pred_fallthru
      _
    %v21 = vld [vmem:[%s0] sm:$0x7f]
    %v22 = vld [vmem:[%s0 + $0x8] sm:$0x7f]
    %v23 = vld [vmem:[%s0 + $0x10] sm:$0x7f]
    %v24 = vld [vmem:[%s0 + $0x18] sm:$0x7f]
    %v25 = vld [vmem:[%s0 + $0x20] sm:$0x7f]
    %v26 = vld [vmem:[%s0 + $0x28] sm:$0x7f]
    %v27 = vld [vmem:[%s0 + $0x30] sm:$0x7f]
    %v28 = vld [vmem:[%s0 + $0x38] sm:$0x7f]
    %v29 = vld [vmem:[%s1] sm:$0xff]
    %v30 = vld [vmem:[%s1 + $0x8] sm:$0xff]
    %v31 = vld [vmem:[%s1 + $0x10] sm:$0xff]
    %v32 = vld [vmem:[%s1 + $0x18] sm:$0xff]
    %vm33 = vcmask 56320
    %v35 = vsel %vm33, %v29, 0
    %vm37 = vcmask 1046528
    %v39 = vsel %vm37, %v21, 0
    %v42 = vsel %vm37, %v22, 0
    %44 = vmatprep.subr.mxu0 %v42
    %45 = vmatpush1.msra.mxu0 %v39
    %46 = vmatprep.subr.mxu0 0.0
    %47 = vmatpush1.msra.mxu0 0.0
    %48 = vmatprep.subr.mxu0 0.0
    %49 = vmatpush1.msra.mxu0 0.0
    %50 = vmatprep.subr.mxu0 0.0
    %51 = vmatpush1.msra.mxu0 0.0
    %52 = vmatprep.subr.mxu0 0.0
    %53 = vmatpush1.msra.mxu0 0.0
    %54 = vmatprep.subr.mxu0 0.0
    %55 = vmatpush1.msra.mxu0 0.0
    %56 = vmatprep.subr.mxu0 0.0
    %57 = vmatpush1.msra.mxu0 0.0
    %58 = vmatprep.subr.mxu0 0.0
    %59 = vmatpush1.msra.mxu0 0.0
    %60 = vmatprep.subr.mxu0 0.0
    %61 = vmatpush1.msra.mxu0 0.0
    %62 = vmatprep.subr.mxu0 0.0
    %63 = vmatpush1.msra.mxu0 0.0
    %64 = vmatprep.subr.mxu0 0.0
    %65 = vmatpush1.msra.mxu0 0.0
    %66 = vmatprep.subr.mxu0 0.0
    %67 = vmatpush1.msra.mxu0 0.0
    %68 = vmatprep.subr.mxu0 0.0
    %69 = vmatpush1.msra.mxu0 0.0
    %70 = vmatprep.subr.mxu0 0.0
    %71 = vmatpush1.msra.mxu0 0.0
    %72 = vmatprep.subr.mxu0 0.0
    %73 = vmatpush1.msra.mxu0 0.0
    %74 = vmatprep.subr.mxu0 0.0
    %75 = vmatpush1.msra.mxu0 0.0
    %76 = vmatprep.subr.mxu0 0.0
    %77 = vmatpush1.msra.mxu0 0.0
    %78 = vmatprep.subr.mxu0 0.0
    %79 = vmatpush1.msra.mxu0 0.0
    %80 = vmatprep.subr.mxu0 0.0
    %81 = vmatpush1.msra.mxu0 0.0
    %82 = vmatprep.subr.mxu0 0.0
    %83 = vmatpush1.msra.mxu0 0.0
    %84 = vmatprep.subr.mxu0 0.0
    %85 = vmatpush1.msra.mxu0 0.0
    %86 = vmatprep.subr.mxu0 0.0
    %87 = vmatpush1.msra.mxu0 0.0
    %88 = vmatprep.subr.mxu0 0.0
    %89 = vmatpush1.msra.mxu0 0.0
    %90 = vmatprep.subr.mxu0 0.0
    %91 = vmatpush1.msra.mxu0 0.0
    %92 = vmatprep.subr.mxu0 0.0
    %93 = vmatpush1.msra.mxu0 0.0
    %94 = vmatprep.subr.mxu0 0.0
    %95 = vmatpush1.msra.mxu0 0.0
    %96 = vmatprep.subr.mxu0 0.0
    %97 = vmatpush1.msra.mxu0 0.0
    %98 = vmatprep.subr.mxu0 0.0
    %99 = vmatpush1.msra.mxu0 0.0
    %100 = vmatprep.subr.mxu0 0.0
    %101 = vmatpush1.msra.mxu0 0.0
    %102 = vmatprep.subr.mxu0 0.0
    %103 = vmatpush1.msra.mxu0 0.0
    %104 = vmatprep.subr.mxu0 0.0
    %105 = vmatpush1.msra.mxu0 0.0
    %106 = vmatprep.subr.mxu0 0.0
    %107 = vmatpush1.msra.mxu0 0.0
    %108 = vmatprep.mubr.f32.mxu0 0.0
    %109 = vmatmul.mubr.f32.gmra.mrb[0].mxu0 %v35
    %v110 = vpop.f32.mrb[0].mxu0
    %v111 = vadd.f32 0.0, %v110
    %v112 = vpop.f32.mrb[0].mxu0
    %v113 = vadd.f32 0.0, %v112
    %114 = vdwg.mxu0
    %v116 = vsel %vm33, %v30, 0
    %v119 = vsel %vm37, %v23, 0
    %v122 = vsel %vm37, %v24, 0
    %124 = vmatprep.subr.mxu0 %v122
    %125 = vmatpush1.msra.mxu0 %v119
    %126 = vmatprep.subr.mxu0 0.0
    %127 = vmatpush1.msra.mxu0 0.0
    %128 = vmatprep.subr.mxu0 0.0
    %129 = vmatpush1.msra.mxu0 0.0
    %130 = vmatprep.subr.mxu0 0.0
    %131 = vmatpush1.msra.mxu0 0.0
    %132 = vmatprep.subr.mxu0 0.0
    %133 = vmatpush1.msra.mxu0 0.0
    %134 = vmatprep.subr.mxu0 0.0
    %135 = vmatpush1.msra.mxu0 0.0
    %136 = vmatprep.subr.mxu0 0.0
    %137 = vmatpush1.msra.mxu0 0.0
    %138 = vmatprep.subr.mxu0 0.0
    %139 = vmatpush1.msra.mxu0 0.0
    %140 = vmatprep.subr.mxu0 0.0
    %141 = vmatpush1.msra.mxu0 0.0
    %142 = vmatprep.subr.mxu0 0.0
    %143 = vmatpush1.msra.mxu0 0.0
    %144 = vmatprep.subr.mxu0 0.0
    %145 = vmatpush1.msra.mxu0 0.0
    %146 = vmatprep.subr.mxu0 0.0
    %147 = vmatpush1.msra.mxu0 0.0
    %148 = vmatprep.subr.mxu0 0.0
    %149 = vmatpush1.msra.mxu0 0.0
    %150 = vmatprep.subr.mxu0 0.0
    %151 = vmatpush1.msra.mxu0 0.0
    %152 = vmatprep.subr.mxu0 0.0
    %153 = vmatpush1.msra.mxu0 0.0
    %154 = vmatprep.subr.mxu0 0.0
    %155 = vmatpush1.msra.mxu0 0.0
    %156 = vmatprep.subr.mxu0 0.0
    %157 = vmatpush1.msra.mxu0 0.0
    %158 = vmatprep.subr.mxu0 0.0
    %159 = vmatpush1.msra.mxu0 0.0
    %160 = vmatprep.subr.mxu0 0.0
    %161 = vmatpush1.msra.mxu0 0.0
    %162 = vmatprep.subr.mxu0 0.0
    %163 = vmatpush1.msra.mxu0 0.0
    %164 = vmatprep.subr.mxu0 0.0
    %165 = vmatpush1.msra.mxu0 0.0
    %166 = vmatprep.subr.mxu0 0.0
    %167 = vmatpush1.msra.mxu0 0.0
    %168 = vmatprep.subr.mxu0 0.0
    %169 = vmatpush1.msra.mxu0 0.0
    %170 = vmatprep.subr.mxu0 0.0
    %171 = vmatpush1.msra.mxu0 0.0
    %172 = vmatprep.subr.mxu0 0.0
    %173 = vmatpush1.msra.mxu0 0.0
    %174 = vmatprep.subr.mxu0 0.0
    %175 = vmatpush1.msra.mxu0 0.0
    %176 = vmatprep.subr.mxu0 0.0
    %177 = vmatpush1.msra.mxu0 0.0
    %178 = vmatprep.subr.mxu0 0.0
    %179 = vmatpush1.msra.mxu0 0.0
    %180 = vmatprep.subr.mxu0 0.0
    %181 = vmatpush1.msra.mxu0 0.0
    %182 = vmatprep.subr.mxu0 0.0
    %183 = vmatpush1.msra.mxu0 0.0
    %184 = vmatprep.subr.mxu0 0.0
    %185 = vmatpush1.msra.mxu0 0.0
    %186 = vmatprep.subr.mxu0 0.0
    %187 = vmatpush1.msra.mxu0 0.0
    %188 = vmatprep.mubr.f32.mxu0 0.0
    %189 = vmatmul.mubr.f32.gmra.mrb[0].mxu0 %v116
    %v190 = vpop.f32.mrb[0].mxu0
    %v191 = vadd.f32 0.0, %v190
    %v192 = vpop.f32.mrb[0].mxu0
    %v193 = vadd.f32 0.0, %v192
    %194 = vdwg.mxu0
    %v196 = vsel %vm33, %v31, 0
    %v199 = vsel %vm37, %v25, 0
    %v202 = vsel %vm37, %v26, 0
    %204 = vmatprep.subr.mxu0 %v202
    %205 = vmatpush1.msra.mxu0 %v199
    %206 = vmatprep.subr.mxu0 0.0
    %207 = vmatpush1.msra.mxu0 0.0
    %208 = vmatprep.subr.mxu0 0.0
    %209 = vmatpush1.msra.mxu0 0.0
    %210 = vmatprep.subr.mxu0 0.0
    %211 = vmatpush1.msra.mxu0 0.0
    %212 = vmatprep.subr.mxu0 0.0
    %213 = vmatpush1.msra.mxu0 0.0
    %214 = vmatprep.subr.mxu0 0.0
    %215 = vmatpush1.msra.mxu0 0.0
    %216 = vmatprep.subr.mxu0 0.0
    %217 = vmatpush1.msra.mxu0 0.0
    %218 = vmatprep.subr.mxu0 0.0
    %219 = vmatpush1.msra.mxu0 0.0
    %220 = vmatprep.subr.mxu0 0.0
    %221 = vmatpush1.msra.mxu0 0.0
    %222 = vmatprep.subr.mxu0 0.0
    %223 = vmatpush1.msra.mxu0 0.0
    %224 = vmatprep.subr.mxu0 0.0
    %225 = vmatpush1.msra.mxu0 0.0
    %226 = vmatprep.subr.mxu0 0.0
    %227 = vmatpush1.msra.mxu0 0.0
    %228 = vmatprep.subr.mxu0 0.0
    %229 = vmatpush1.msra.mxu0 0.0
    %230 = vmatprep.subr.mxu0 0.0
    %231 = vmatpush1.msra.mxu0 0.0
    %232 = vmatprep.subr.mxu0 0.0
    %233 = vmatpush1.msra.mxu0 0.0
    %234 = vmatprep.subr.mxu0 0.0
    %235 = vmatpush1.msra.mxu0 0.0
    %236 = vmatprep.subr.mxu0 0.0
    %237 = vmatpush1.msra.mxu0 0.0
    %238 = vmatprep.subr.mxu0 0.0
    %239 = vmatpush1.msra.mxu0 0.0
    %240 = vmatprep.subr.mxu0 0.0
    %241 = vmatpush1.msra.mxu0 0.0
    %242 = vmatprep.subr.mxu0 0.0
    %243 = vmatpush1.msra.mxu0 0.0
    %244 = vmatprep.subr.mxu0 0.0
    %245 = vmatpush1.msra.mxu0 0.0
    %246 = vmatprep.subr.mxu0 0.0
    %247 = vmatpush1.msra.mxu0 0.0
    %248 = vmatprep.subr.mxu0 0.0
    %249 = vmatpush1.msra.mxu0 0.0
    %250 = vmatprep.subr.mxu0 0.0
    %251 = vmatpush1.msra.mxu0 0.0
    %252 = vmatprep.subr.mxu0 0.0
    %253 = vmatpush1.msra.mxu0 0.0
    %254 = vmatprep.subr.mxu0 0.0
    %255 = vmatpush1.msra.mxu0 0.0
    %256 = vmatprep.subr.mxu0 0.0
    %257 = vmatpush1.msra.mxu0 0.0
    %258 = vmatprep.subr.mxu0 0.0
    %259 = vmatpush1.msra.mxu0 0.0
    %260 = vmatprep.subr.mxu0 0.0
    %261 = vmatpush1.msra.mxu0 0.0
    %262 = vmatprep.subr.mxu0 0.0
    %263 = vmatpush1.msra.mxu0 0.0
    %264 = vmatprep.subr.mxu0 0.0
    %265 = vmatpush1.msra.mxu0 0.0
    %266 = vmatprep.subr.mxu0 0.0
    %267 = vmatpush1.msra.mxu0 0.0
    %268 = vmatprep.mubr.f32.mxu0 0.0
    %269 = vmatmul.mubr.f32.gmra.mrb[0].mxu0 %v196
    %v270 = vpop.f32.mrb[0].mxu0
    %v271 = vadd.f32 0.0, %v270
    %v272 = vpop.f32.mrb[0].mxu0
    %v273 = vadd.f32 0.0, %v272
    %274 = vdwg.mxu0
    %v276 = vsel %vm33, %v32, 0
    %v279 = vsel %vm37, %v27, 0
    %v282 = vsel %vm37, %v28, 0
    %284 = vmatprep.subr.mxu0 %v282
    %285 = vmatpush1.msra.mxu0 %v279
    %286 = vmatprep.subr.mxu0 0.0
    %287 = vmatpush1.msra.mxu0 0.0
    %288 = vmatprep.subr.mxu0 0.0
    %289 = vmatpush1.msra.mxu0 0.0
    %290 = vmatprep.subr.mxu0 0.0
    %291 = vmatpush1.msra.mxu0 0.0
    %292 = vmatprep.subr.mxu0 0.0
    %293 = vmatpush1.msra.mxu0 0.0
    %294 = vmatprep.subr.mxu0 0.0
    %295 = vmatpush1.msra.mxu0 0.0
    %296 = vmatprep.subr.mxu0 0.0
    %297 = vmatpush1.msra.mxu0 0.0
    %298 = vmatprep.subr.mxu0 0.0
    %299 = vmatpush1.msra.mxu0 0.0
    %300 = vmatprep.subr.mxu0 0.0
    %301 = vmatpush1.msra.mxu0 0.0
    %302 = vmatprep.subr.mxu0 0.0
    %303 = vmatpush1.msra.mxu0 0.0
    %304 = vmatprep.subr.mxu0 0.0
    %305 = vmatpush1.msra.mxu0 0.0
    %306 = vmatprep.subr.mxu0 0.0
    %307 = vmatpush1.msra.mxu0 0.0
    %308 = vmatprep.subr.mxu0 0.0
    %309 = vmatpush1.msra.mxu0 0.0
    %310 = vmatprep.subr.mxu0 0.0
    %311 = vmatpush1.msra.mxu0 0.0
    %312 = vmatprep.subr.mxu0 0.0
    %313 = vmatpush1.msra.mxu0 0.0
    %314 = vmatprep.subr.mxu0 0.0
    %315 = vmatpush1.msra.mxu0 0.0
    %316 = vmatprep.subr.mxu0 0.0
    %317 = vmatpush1.msra.mxu0 0.0
    %318 = vmatprep.subr.mxu0 0.0
    %319 = vmatpush1.msra.mxu0 0.0
    %320 = vmatprep.subr.mxu0 0.0
    %321 = vmatpush1.msra.mxu0 0.0
    %322 = vmatprep.subr.mxu0 0.0
    %323 = vmatpush1.msra.mxu0 0.0
    %324 = vmatprep.subr.mxu0 0.0
    %325 = vmatpush1.msra.mxu0 0.0
    %326 = vmatprep.subr.mxu0 0.0
    %327 = vmatpush1.msra.mxu0 0.0
    %328 = vmatprep.subr.mxu0 0.0
    %329 = vmatpush1.msra.mxu0 0.0
    %330 = vmatprep.subr.mxu0 0.0
    %331 = vmatpush1.msra.mxu0 0.0
    %332 = vmatprep.subr.mxu0 0.0
    %333 = vmatpush1.msra.mxu0 0.0
    %334 = vmatprep.subr.mxu0 0.0
    %335 = vmatpush1.msra.mxu0 0.0
    %336 = vmatprep.subr.mxu0 0.0
    %337 = vmatpush1.msra.mxu0 0.0
    %338 = vmatprep.subr.mxu0 0.0
    %339 = vmatpush1.msra.mxu0 0.0
    %340 = vmatprep.subr.mxu0 0.0
    %341 = vmatpush1.msra.mxu0 0.0
    %342 = vmatprep.subr.mxu0 0.0
    %343 = vmatpush1.msra.mxu0 0.0
    %344 = vmatprep.subr.mxu0 0.0
    %345 = vmatpush1.msra.mxu0 0.0
    %346 = vmatprep.subr.mxu0 0.0
    %347 = vmatpush1.msra.mxu0 0.0
    %348 = vmatprep.mubr.f32.mxu0 0.0
    %349 = vmatmul.mubr.f32.gmra.mrb[0].mxu0 %v276
    %v350 = vpop.f32.mrb[0].mxu0
    %v351 = vadd.f32 0.0, %v350
    %v352 = vpop.f32.mrb[0].mxu0
    %v353 = vadd.f32 0.0, %v352
    %354 = vdwg.mxu0
    %v355 = vmax.f32 %v111, 0.0
    %v356 = vmax.f32 %v113, 0.0
    %v357 = vmax.f32 %v191, 0.0
    %v358 = vmax.f32 %v193, 0.0
    %v359 = vmax.f32 %v271, 0.0
    %v360 = vmax.f32 %v273, 0.0
    %v361 = vmax.f32 %v351, 0.0
    %v362 = vmax.f32 %v353, 0.0
    %v363 = vld [vmem:[%s2] sm:$0xff]
    %v364 = vld [vmem:[%s2 + $0x8] sm:$0xff]
    %v365 = vld [vmem:[%s2 + $0x10] sm:$0xff]
    %v366 = vld [vmem:[%s2 + $0x18] sm:$0xff]
    %vm367 = vcmask 72704
    %v369 = vsel %vm367, %v363, 0
    %vm371 = vcmask 1040384
    %v373 = vsel %vm371, 1.0, 0
    %375 = vmatprep.subr.mxu0 %v356
    %376 = vmatpush1.msra.mxu0 %v355
    %377 = vmatprep.subr.mxu0 %v373
    %378 = vmatpush1.msra.mxu0 %v373
    %379 = vmatprep.subr.mxu0 0.0
    %380 = vmatpush1.msra.mxu0 0.0
    %381 = vmatprep.subr.mxu0 0.0
    %382 = vmatpush1.msra.mxu0 0.0
    %383 = vmatprep.subr.mxu0 0.0
    %384 = vmatpush1.msra.mxu0 0.0
    %385 = vmatprep.subr.mxu0 0.0
    %386 = vmatpush1.msra.mxu0 0.0
    %387 = vmatprep.subr.mxu0 0.0
    %388 = vmatpush1.msra.mxu0 0.0
    %389 = vmatprep.subr.mxu0 0.0
    %390 = vmatpush1.msra.mxu0 0.0
    %391 = vmatprep.subr.mxu0 0.0
    %392 = vmatpush1.msra.mxu0 0.0
    %393 = vmatprep.subr.mxu0 0.0
    %394 = vmatpush1.msra.mxu0 0.0
    %395 = vmatprep.subr.mxu0 0.0
    %396 = vmatpush1.msra.mxu0 0.0
    %397 = vmatprep.subr.mxu0 0.0
    %398 = vmatpush1.msra.mxu0 0.0
    %399 = vmatprep.subr.mxu0 0.0
    %400 = vmatpush1.msra.mxu0 0.0
    %401 = vmatprep.subr.mxu0 0.0
    %402 = vmatpush1.msra.mxu0 0.0
    %403 = vmatprep.subr.mxu0 0.0
    %404 = vmatpush1.msra.mxu0 0.0
    %405 = vmatprep.subr.mxu0 0.0
    %406 = vmatpush1.msra.mxu0 0.0
    %407 = vmatprep.subr.mxu0 0.0
    %408 = vmatpush1.msra.mxu0 0.0
    %409 = vmatprep.subr.mxu0 0.0
    %410 = vmatpush1.msra.mxu0 0.0
    %411 = vmatprep.subr.mxu0 0.0
    %412 = vmatpush1.msra.mxu0 0.0
    %413 = vmatprep.subr.mxu0 0.0
    %414 = vmatpush1.msra.mxu0 0.0
    %415 = vmatprep.subr.mxu0 0.0
    %416 = vmatpush1.msra.mxu0 0.0
    %417 = vmatprep.subr.mxu0 0.0
    %418 = vmatpush1.msra.mxu0 0.0
    %419 = vmatprep.subr.mxu0 0.0
    %420 = vmatpush1.msra.mxu0 0.0
    %421 = vmatprep.subr.mxu0 0.0
    %422 = vmatpush1.msra.mxu0 0.0
    %423 = vmatprep.subr.mxu0 0.0
    %424 = vmatpush1.msra.mxu0 0.0
    %425 = vmatprep.subr.mxu0 0.0
    %426 = vmatpush1.msra.mxu0 0.0
    %427 = vmatprep.subr.mxu0 0.0
    %428 = vmatpush1.msra.mxu0 0.0
    %429 = vmatprep.subr.mxu0 0.0
    %430 = vmatpush1.msra.mxu0 0.0
    %431 = vmatprep.subr.mxu0 0.0
    %432 = vmatpush1.msra.mxu0 0.0
    %433 = vmatprep.subr.mxu0 0.0
    %434 = vmatpush1.msra.mxu0 0.0
    %435 = vmatprep.subr.mxu0 0.0
    %436 = vmatpush1.msra.mxu0 0.0
    %437 = vmatprep.subr.mxu0 0.0
    %438 = vmatpush1.msra.mxu0 0.0
    %439 = vmatprep.mubr.f32.mxu0 0.0
    %440 = vmatmul.mubr.f32.gmra.mrb[0].mxu0 %v369
    %v441 = vpop.f32.mrb[0].mxu0
    %v442 = vadd.f32 0.0, %v441
    %v443 = vpop.f32.mrb[0].mxu0
    %v444 = vadd.f32 0.0, %v443
    %445 = vdwg.mxu0
    %v447 = vsel %vm367, %v364, 0
    %449 = vmatprep.subr.mxu0 %v358
    %450 = vmatpush1.msra.mxu0 %v357
    %451 = vmatprep.subr.mxu0 %v373
    %452 = vmatpush1.msra.mxu0 %v373
    %453 = vmatprep.subr.mxu0 0.0
    %454 = vmatpush1.msra.mxu0 0.0
    %455 = vmatprep.subr.mxu0 0.0
    %456 = vmatpush1.msra.mxu0 0.0
    %457 = vmatprep.subr.mxu0 0.0
    %458 = vmatpush1.msra.mxu0 0.0
    %459 = vmatprep.subr.mxu0 0.0
    %460 = vmatpush1.msra.mxu0 0.0
    %461 = vmatprep.subr.mxu0 0.0
    %462 = vmatpush1.msra.mxu0 0.0
    %463 = vmatprep.subr.mxu0 0.0
    %464 = vmatpush1.msra.mxu0 0.0
    %465 = vmatprep.subr.mxu0 0.0
    %466 = vmatpush1.msra.mxu0 0.0
    %467 = vmatprep.subr.mxu0 0.0
    %468 = vmatpush1.msra.mxu0 0.0
    %469 = vmatprep.subr.mxu0 0.0
    %470 = vmatpush1.msra.mxu0 0.0
    %471 = vmatprep.subr.mxu0 0.0
    %472 = vmatpush1.msra.mxu0 0.0
    %473 = vmatprep.subr.mxu0 0.0
    %474 = vmatpush1.msra.mxu0 0.0
    %475 = vmatprep.subr.mxu0 0.0
    %476 = vmatpush1.msra.mxu0 0.0
    %477 = vmatprep.subr.mxu0 0.0
    %478 = vmatpush1.msra.mxu0 0.0
    %479 = vmatprep.subr.mxu0 0.0
    %480 = vmatpush1.msra.mxu0 0.0
    %481 = vmatprep.subr.mxu0 0.0
    %482 = vmatpush1.msra.mxu0 0.0
    %483 = vmatprep.subr.mxu0 0.0
    %484 = vmatpush1.msra.mxu0 0.0
    %485 = vmatprep.subr.mxu0 0.0
    %486 = vmatpush1.msra.mxu0 0.0
    %487 = vmatprep.subr.mxu0 0.0
    %488 = vmatpush1.msra.mxu0 0.0
    %489 = vmatprep.subr.mxu0 0.0
    %490 = vmatpush1.msra.mxu0 0.0
    %491 = vmatprep.subr.mxu0 0.0
    %492 = vmatpush1.msra.mxu0 0.0
    %493 = vmatprep.subr.mxu0 0.0
    %494 = vmatpush1.msra.mxu0 0.0
    %495 = vmatprep.subr.mxu0 0.0
    %496 = vmatpush1.msra.mxu0 0.0
    %497 = vmatprep.subr.mxu0 0.0
    %498 = vmatpush1.msra.mxu0 0.0
    %499 = vmatprep.subr.mxu0 0.0
    %500 = vmatpush1.msra.mxu0 0.0
    %501 = vmatprep.subr.mxu0 0.0
    %502 = vmatpush1.msra.mxu0 0.0
    %503 = vmatprep.subr.mxu0 0.0
    %504 = vmatpush1.msra.mxu0 0.0
    %505 = vmatprep.subr.mxu0 0.0
    %506 = vmatpush1.msra.mxu0 0.0
    %507 = vmatprep.subr.mxu0 0.0
    %508 = vmatpush1.msra.mxu0 0.0
    %509 = vmatprep.subr.mxu0 0.0
    %510 = vmatpush1.msra.mxu0 0.0
    %511 = vmatprep.subr.mxu0 0.0
    %512 = vmatpush1.msra.mxu0 0.0
    %513 = vmatprep.mubr.f32.mxu0 0.0
    %514 = vmatmul.mubr.f32.gmra.mrb[0].mxu0 %v447
    %v515 = vpop.f32.mrb[0].mxu0
    %v516 = vadd.f32 0.0, %v515
    %v517 = vpop.f32.mrb[0].mxu0
    %v518 = vadd.f32 0.0, %v517
    %519 = vdwg.mxu0
    %v521 = vsel %vm367, %v365, 0
    %523 = vmatprep.subr.mxu0 %v360
    %524 = vmatpush1.msra.mxu0 %v359
    %525 = vmatprep.subr.mxu0 %v373
    %526 = vmatpush1.msra.mxu0 %v373
    %527 = vmatprep.subr.mxu0 0.0
    %528 = vmatpush1.msra.mxu0 0.0
    %529 = vmatprep.subr.mxu0 0.0
    %530 = vmatpush1.msra.mxu0 0.0
    %531 = vmatprep.subr.mxu0 0.0
    %532 = vmatpush1.msra.mxu0 0.0
    %533 = vmatprep.subr.mxu0 0.0
    %534 = vmatpush1.msra.mxu0 0.0
    %535 = vmatprep.subr.mxu0 0.0
    %536 = vmatpush1.msra.mxu0 0.0
    %537 = vmatprep.subr.mxu0 0.0
    %538 = vmatpush1.msra.mxu0 0.0
    %539 = vmatprep.subr.mxu0 0.0
    %540 = vmatpush1.msra.mxu0 0.0
    %541 = vmatprep.subr.mxu0 0.0
    %542 = vmatpush1.msra.mxu0 0.0
    %543 = vmatprep.subr.mxu0 0.0
    %544 = vmatpush1.msra.mxu0 0.0
    %545 = vmatprep.subr.mxu0 0.0
    %546 = vmatpush1.msra.mxu0 0.0
    %547 = vmatprep.subr.mxu0 0.0
    %548 = vmatpush1.msra.mxu0 0.0
    %549 = vmatprep.subr.mxu0 0.0
    %550 = vmatpush1.msra.mxu0 0.0
    %551 = vmatprep.subr.mxu0 0.0
    %552 = vmatpush1.msra.mxu0 0.0
    %553 = vmatprep.subr.mxu0 0.0
    %554 = vmatpush1.msra.mxu0 0.0
    %555 = vmatprep.subr.mxu0 0.0
    %556 = vmatpush1.msra.mxu0 0.0
    %557 = vmatprep.subr.mxu0 0.0
    %558 = vmatpush1.msra.mxu0 0.0
    %559 = vmatprep.subr.mxu0 0.0
    %560 = vmatpush1.msra.mxu0 0.0
    %561 = vmatprep.subr.mxu0 0.0
    %562 = vmatpush1.msra.mxu0 0.0
    %563 = vmatprep.subr.mxu0 0.0
    %564 = vmatpush1.msra.mxu0 0.0
    %565 = vmatprep.subr.mxu0 0.0
    %566 = vmatpush1.msra.mxu0 0.0
    %567 = vmatprep.subr.mxu0 0.0
    %568 = vmatpush1.msra.mxu0 0.0
    %569 = vmatprep.subr.mxu0 0.0
    %570 = vmatpush1.msra.mxu0 0.0
    %571 = vmatprep.subr.mxu0 0.0
    %572 = vmatpush1.msra.mxu0 0.0
    %573 = vmatprep.subr.mxu0 0.0
    %574 = vmatpush1.msra.mxu0 0.0
    %575 = vmatprep.subr.mxu0 0.0
    %576 = vmatpush1.msra.mxu0 0.0
    %577 = vmatprep.subr.mxu0 0.0
    %578 = vmatpush1.msra.mxu0 0.0
    %579 = vmatprep.subr.mxu0 0.0
    %580 = vmatpush1.msra.mxu0 0.0
    %581 = vmatprep.subr.mxu0 0.0
    %582 = vmatpush1.msra.mxu0 0.0
    %583 = vmatprep.subr.mxu0 0.0
    %584 = vmatpush1.msra.mxu0 0.0
    %585 = vmatprep.subr.mxu0 0.0
    %586 = vmatpush1.msra.mxu0 0.0
    %587 = vmatprep.mubr.f32.mxu0 0.0
    %588 = vmatmul.mubr.f32.gmra.mrb[0].mxu0 %v521
    %v589 = vpop.f32.mrb[0].mxu0
    %v590 = vadd.f32 0.0, %v589
    %v591 = vpop.f32.mrb[0].mxu0
    %v592 = vadd.f32 0.0, %v591
    %593 = vdwg.mxu0
    %v595 = vsel %vm367, %v366, 0
    %597 = vmatprep.subr.mxu0 %v362
    %598 = vmatpush1.msra.mxu0 %v361
    %599 = vmatprep.subr.mxu0 %v373
    %600 = vmatpush1.msra.mxu0 %v373
    %601 = vmatprep.subr.mxu0 0.0
    %602 = vmatpush1.msra.mxu0 0.0
    %603 = vmatprep.subr.mxu0 0.0
    %604 = vmatpush1.msra.mxu0 0.0
    %605 = vmatprep.subr.mxu0 0.0
    %606 = vmatpush1.msra.mxu0 0.0
    %607 = vmatprep.subr.mxu0 0.0
    %608 = vmatpush1.msra.mxu0 0.0
    %609 = vmatprep.subr.mxu0 0.0
    %610 = vmatpush1.msra.mxu0 0.0
    %611 = vmatprep.subr.mxu0 0.0
    %612 = vmatpush1.msra.mxu0 0.0
    %613 = vmatprep.subr.mxu0 0.0
    %614 = vmatpush1.msra.mxu0 0.0
    %615 = vmatprep.subr.mxu0 0.0
    %616 = vmatpush1.msra.mxu0 0.0
    %617 = vmatprep.subr.mxu0 0.0
    %618 = vmatpush1.msra.mxu0 0.0
    %619 = vmatprep.subr.mxu0 0.0
    %620 = vmatpush1.msra.mxu0 0.0
    %621 = vmatprep.subr.mxu0 0.0
    %622 = vmatpush1.msra.mxu0 0.0
    %623 = vmatprep.subr.mxu0 0.0
    %624 = vmatpush1.msra.mxu0 0.0
    %625 = vmatprep.subr.mxu0 0.0
    %626 = vmatpush1.msra.mxu0 0.0
    %627 = vmatprep.subr.mxu0 0.0
    %628 = vmatpush1.msra.mxu0 0.0
    %629 = vmatprep.subr.mxu0 0.0
    %630 = vmatpush1.msra.mxu0 0.0
    %631 = vmatprep.subr.mxu0 0.0
    %632 = vmatpush1.msra.mxu0 0.0
    %633 = vmatprep.subr.mxu0 0.0
    %634 = vmatpush1.msra.mxu0 0.0
    %635 = vmatprep.subr.mxu0 0.0
    %636 = vmatpush1.msra.mxu0 0.0
    %637 = vmatprep.subr.mxu0 0.0
    %638 = vmatpush1.msra.mxu0 0.0
    %639 = vmatprep.subr.mxu0 0.0
    %640 = vmatpush1.msra.mxu0 0.0
    %641 = vmatprep.subr.mxu0 0.0
    %642 = vmatpush1.msra.mxu0 0.0
    %643 = vmatprep.subr.mxu0 0.0
    %644 = vmatpush1.msra.mxu0 0.0
    %645 = vmatprep.subr.mxu0 0.0
    %646 = vmatpush1.msra.mxu0 0.0
    %647 = vmatprep.subr.mxu0 0.0
    %648 = vmatpush1.msra.mxu0 0.0
    %649 = vmatprep.subr.mxu0 0.0
    %650 = vmatpush1.msra.mxu0 0.0
    %651 = vmatprep.subr.mxu0 0.0
    %652 = vmatpush1.msra.mxu0 0.0
    %653 = vmatprep.subr.mxu0 0.0
    %654 = vmatpush1.msra.mxu0 0.0
    %655 = vmatprep.subr.mxu0 0.0
    %656 = vmatpush1.msra.mxu0 0.0
    %657 = vmatprep.subr.mxu0 0.0
    %658 = vmatpush1.msra.mxu0 0.0
    %659 = vmatprep.subr.mxu0 0.0
    %660 = vmatpush1.msra.mxu0 0.0
    %661 = vmatprep.mubr.f32.mxu0 0.0
    %662 = vmatmul.mubr.f32.gmra.mrb[0].mxu0 %v595
    %v663 = vpop.f32.mrb[0].mxu0
    %v664 = vadd.f32 0.0, %v663
    %v665 = vpop.f32.mrb[0].mxu0
    %v666 = vadd.f32 0.0, %v665
    %667 = vdwg.mxu0
    %v668 = vmax.f32 %v442, 0.0
    %v669 = vmax.f32 %v444, 0.0
    %v670 = vmax.f32 %v516, 0.0
    %v671 = vmax.f32 %v518, 0.0
    %v672 = vmax.f32 %v590, 0.0
    %v673 = vmax.f32 %v592, 0.0
    %v674 = vmax.f32 %v664, 0.0
    %v675 = vmax.f32 %v666, 0.0
    %v676 = vld [vmem:[%s3] sm:$0xff]
    %v677 = vld [vmem:[%s3 + $0x8] sm:$0xff]
    %v678 = vld [vmem:[%s3 + $0x10] sm:$0x1]
    %v679 = vld [vmem:[%s3 + $0x18] sm:$0xff]
    %v680 = vld [vmem:[%s3 + $0x20] sm:$0xff]
    %v681 = vld [vmem:[%s3 + $0x28] sm:$0x1]
    %v682 = vld [vmem:[%s3 + $0x30] sm:$0xff]
    %v683 = vld [vmem:[%s3 + $0x38] sm:$0xff]
    %v684 = vld [vmem:[%s3 + $0x40] sm:$0x1]
    %v685 = vld [vmem:[%s3 + $0x48] sm:$0xff]
    %v686 = vld [vmem:[%s3 + $0x50] sm:$0xff]
    %v687 = vld [vmem:[%s3 + $0x58] sm:$0x1]
    %v689 = vsel %vm367, %v676, 0
    %v692 = vsel %vm367, %v677, 0
    %v695 = vsel %vm367, %v678, 0
    %697 = vmatprep.subr.mxu0 %v669
    %698 = vmatpush1.msra.mxu0 %v668
    %699 = vmatprep.subr.mxu0 %v373
    %700 = vmatpush1.msra.mxu0 %v373
    %701 = vmatprep.subr.mxu0 0.0
    %702 = vmatpush1.msra.mxu0 0.0
    %703 = vmatprep.subr.mxu0 0.0
    %704 = vmatpush1.msra.mxu0 0.0
    %705 = vmatprep.subr.mxu0 0.0
    %706 = vmatpush1.msra.mxu0 0.0
    %707 = vmatprep.subr.mxu0 0.0
    %708 = vmatpush1.msra.mxu0 0.0
    %709 = vmatprep.subr.mxu0 0.0
    %710 = vmatpush1.msra.mxu0 0.0
    %711 = vmatprep.subr.mxu0 0.0
    %712 = vmatpush1.msra.mxu0 0.0
    %713 = vmatprep.subr.mxu0 0.0
    %714 = vmatpush1.msra.mxu0 0.0
    %715 = vmatprep.subr.mxu0 0.0
    %716 = vmatpush1.msra.mxu0 0.0
    %717 = vmatprep.subr.mxu0 0.0
    %718 = vmatpush1.msra.mxu0 0.0
    %719 = vmatprep.subr.mxu0 0.0
    %720 = vmatpush1.msra.mxu0 0.0
    %721 = vmatprep.subr.mxu0 0.0
    %722 = vmatpush1.msra.mxu0 0.0
    %723 = vmatprep.subr.mxu0 0.0
    %724 = vmatpush1.msra.mxu0 0.0
    %725 = vmatprep.subr.mxu0 0.0
    %726 = vmatpush1.msra.mxu0 0.0
    %727 = vmatprep.subr.mxu0 0.0
    %728 = vmatpush1.msra.mxu0 0.0
    %729 = vmatprep.subr.mxu0 0.0
    %730 = vmatpush1.msra.mxu0 0.0
    %731 = vmatprep.subr.mxu0 0.0
    %732 = vmatpush1.msra.mxu0 0.0
    %733 = vmatprep.subr.mxu0 0.0
    %734 = vmatpush1.msra.mxu0 0.0
    %735 = vmatprep.subr.mxu0 0.0
    %736 = vmatpush1.msra.mxu0 0.0
    %737 = vmatprep.subr.mxu0 0.0
    %738 = vmatpush1.msra.mxu0 0.0
    %739 = vmatprep.subr.mxu0 0.0
    %740 = vmatpush1.msra.mxu0 0.0
    %741 = vmatprep.subr.mxu0 0.0
    %742 = vmatpush1.msra.mxu0 0.0
    %743 = vmatprep.subr.mxu0 0.0
    %744 = vmatpush1.msra.mxu0 0.0
    %745 = vmatprep.subr.mxu0 0.0
    %746 = vmatpush1.msra.mxu0 0.0
    %747 = vmatprep.subr.mxu0 0.0
    %748 = vmatpush1.msra.mxu0 0.0
    %749 = vmatprep.subr.mxu0 0.0
    %750 = vmatpush1.msra.mxu0 0.0
    %751 = vmatprep.subr.mxu0 0.0
    %752 = vmatpush1.msra.mxu0 0.0
    %753 = vmatprep.subr.mxu0 0.0
    %754 = vmatpush1.msra.mxu0 0.0
    %755 = vmatprep.subr.mxu0 0.0
    %756 = vmatpush1.msra.mxu0 0.0
    %757 = vmatprep.subr.mxu0 0.0
    %758 = vmatpush1.msra.mxu0 0.0
    %759 = vmatprep.subr.mxu0 0.0
    %760 = vmatpush1.msra.mxu0 0.0
    %761 = vmatprep.mubr.f32.mxu0 0.0
    %762 = vmatmul.mubr.f32.gmra.mrb[0].mxu0 %v689
    %v763 = vpop.f32.mrb[0].mxu0
    %v764 = vadd.f32 0.0, %v763
    %v765 = vpop.f32.mrb[0].mxu0
    %v766 = vadd.f32 0.0, %v765
    %767 = vmatprep.mubr.f32.mxu0 0.0
    %768 = vmatmul.mubr.f32.gmra.mrb[0].mxu0 %v692
    %v769 = vpop.f32.mrb[0].mxu0
    %v770 = vadd.f32 0.0, %v769
    %v771 = vpop.f32.mrb[0].mxu0
    %v772 = vadd.f32 0.0, %v771
    %773 = vmatprep.mubr.f32.mxu0 0.0
    %774 = vmatmul.mubr.f32.gmra.mrb[0].mxu0 %v695
    %v775 = vpop.f32.mrb[0].mxu0
    %v776 = vadd.f32 0.0, %v775
    %v777 = vpop.f32.mrb[0].mxu0
    %v778 = vadd.f32 0.0, %v777
    %779 = vdwg.mxu0
    %v781 = vsel %vm367, %v679, 0
    %v784 = vsel %vm367, %v680, 0
    %v787 = vsel %vm367, %v681, 0
    %789 = vmatprep.subr.mxu0 %v671
    %790 = vmatpush1.msra.mxu0 %v670
    %791 = vmatprep.subr.mxu0 %v373
    %792 = vmatpush1.msra.mxu0 %v373
    %793 = vmatprep.subr.mxu0 0.0
    %794 = vmatpush1.msra.mxu0 0.0
    %795 = vmatprep.subr.mxu0 0.0
    %796 = vmatpush1.msra.mxu0 0.0
    %797 = vmatprep.subr.mxu0 0.0
    %798 = vmatpush1.msra.mxu0 0.0
    %799 = vmatprep.subr.mxu0 0.0
    %800 = vmatpush1.msra.mxu0 0.0
    %801 = vmatprep.subr.mxu0 0.0
    %802 = vmatpush1.msra.mxu0 0.0
    %803 = vmatprep.subr.mxu0 0.0
    %804 = vmatpush1.msra.mxu0 0.0
    %805 = vmatprep.subr.mxu0 0.0
    %806 = vmatpush1.msra.mxu0 0.0
    %807 = vmatprep.subr.mxu0 0.0
    %808 = vmatpush1.msra.mxu0 0.0
    %809 = vmatprep.subr.mxu0 0.0
    %810 = vmatpush1.msra.mxu0 0.0
    %811 = vmatprep.subr.mxu0 0.0
    %812 = vmatpush1.msra.mxu0 0.0
    %813 = vmatprep.subr.mxu0 0.0
    %814 = vmatpush1.msra.mxu0 0.0
    %815 = vmatprep.subr.mxu0 0.0
    %816 = vmatpush1.msra.mxu0 0.0
    %817 = vmatprep.subr.mxu0 0.0
    %818 = vmatpush1.msra.mxu0 0.0
    %819 = vmatprep.subr.mxu0 0.0
    %820 = vmatpush1.msra.mxu0 0.0
    %821 = vmatprep.subr.mxu0 0.0
    %822 = vmatpush1.msra.mxu0 0.0
    %823 = vmatprep.subr.mxu0 0.0
    %824 = vmatpush1.msra.mxu0 0.0
    %825 = vmatprep.subr.mxu0 0.0
    %826 = vmatpush1.msra.mxu0 0.0
    %827 = vmatprep.subr.mxu0 0.0
    %828 = vmatpush1.msra.mxu0 0.0
    %829 = vmatprep.subr.mxu0 0.0
    %830 = vmatpush1.msra.mxu0 0.0
    %831 = vmatprep.subr.mxu0 0.0
    %832 = vmatpush1.msra.mxu0 0.0
    %833 = vmatprep.subr.mxu0 0.0
    %834 = vmatpush1.msra.mxu0 0.0
    %835 = vmatprep.subr.mxu0 0.0
    %836 = vmatpush1.msra.mxu0 0.0
    %837 = vmatprep.subr.mxu0 0.0
    %838 = vmatpush1.msra.mxu0 0.0
    %839 = vmatprep.subr.mxu0 0.0
    %840 = vmatpush1.msra.mxu0 0.0
    %841 = vmatprep.subr.mxu0 0.0
    %842 = vmatpush1.msra.mxu0 0.0
    %843 = vmatprep.subr.mxu0 0.0
    %844 = vmatpush1.msra.mxu0 0.0
    %845 = vmatprep.subr.mxu0 0.0
    %846 = vmatpush1.msra.mxu0 0.0
    %847 = vmatprep.subr.mxu0 0.0
    %848 = vmatpush1.msra.mxu0 0.0
    %849 = vmatprep.subr.mxu0 0.0
    %850 = vmatpush1.msra.mxu0 0.0
    %851 = vmatprep.subr.mxu0 0.0
    %852 = vmatpush1.msra.mxu0 0.0
    %853 = vmatprep.mubr.f32.mxu0 0.0
    %854 = vmatmul.mubr.f32.gmra.mrb[0].mxu0 %v781
    %v855 = vpop.f32.mrb[0].mxu0
    %v856 = vadd.f32 0.0, %v855
    %v857 = vpop.f32.mrb[0].mxu0
    %v858 = vadd.f32 0.0, %v857
    %859 = vmatprep.mubr.f32.mxu0 0.0
    %860 = vmatmul.mubr.f32.gmra.mrb[0].mxu0 %v784
    %v861 = vpop.f32.mrb[0].mxu0
    %v862 = vadd.f32 0.0, %v861
    %v863 = vpop.f32.mrb[0].mxu0
    %v864 = vadd.f32 0.0, %v863
    %865 = vmatprep.mubr.f32.mxu0 0.0
    %866 = vmatmul.mubr.f32.gmra.mrb[0].mxu0 %v787
    %v867 = vpop.f32.mrb[0].mxu0
    %v868 = vadd.f32 0.0, %v867
    %v869 = vpop.f32.mrb[0].mxu0
    %v870 = vadd.f32 0.0, %v869
    %871 = vdwg.mxu0
    %v873 = vsel %vm367, %v682, 0
    %v876 = vsel %vm367, %v683, 0
    %v879 = vsel %vm367, %v684, 0
    %881 = vmatprep.subr.mxu0 %v673
    %882 = vmatpush1.msra.mxu0 %v672
    %883 = vmatprep.subr.mxu0 %v373
    %884 = vmatpush1.msra.mxu0 %v373
    %885 = vmatprep.subr.mxu0 0.0
    %886 = vmatpush1.msra.mxu0 0.0
    %887 = vmatprep.subr.mxu0 0.0
    %888 = vmatpush1.msra.mxu0 0.0
    %889 = vmatprep.subr.mxu0 0.0
    %890 = vmatpush1.msra.mxu0 0.0
    %891 = vmatprep.subr.mxu0 0.0
    %892 = vmatpush1.msra.mxu0 0.0
    %893 = vmatprep.subr.mxu0 0.0
    %894 = vmatpush1.msra.mxu0 0.0
    %895 = vmatprep.subr.mxu0 0.0
    %896 = vmatpush1.msra.mxu0 0.0
    %897 = vmatprep.subr.mxu0 0.0
    %898 = vmatpush1.msra.mxu0 0.0
    %899 = vmatprep.subr.mxu0 0.0
    %900 = vmatpush1.msra.mxu0 0.0
    %901 = vmatprep.subr.mxu0 0.0
    %902 = vmatpush1.msra.mxu0 0.0
    %903 = vmatprep.subr.mxu0 0.0
    %904 = vmatpush1.msra.mxu0 0.0
    %905 = vmatprep.subr.mxu0 0.0
    %906 = vmatpush1.msra.mxu0 0.0
    %907 = vmatprep.subr.mxu0 0.0
    %908 = vmatpush1.msra.mxu0 0.0
    %909 = vmatprep.subr.mxu0 0.0
    %910 = vmatpush1.msra.mxu0 0.0
    %911 = vmatprep.subr.mxu0 0.0
    %912 = vmatpush1.msra.mxu0 0.0
    %913 = vmatprep.subr.mxu0 0.0
    %914 = vmatpush1.msra.mxu0 0.0
    %915 = vmatprep.subr.mxu0 0.0
    %916 = vmatpush1.msra.mxu0 0.0
    %917 = vmatprep.subr.mxu0 0.0
    %918 = vmatpush1.msra.mxu0 0.0
    %919 = vmatprep.subr.mxu0 0.0
    %920 = vmatpush1.msra.mxu0 0.0
    %921 = vmatprep.subr.mxu0 0.0
    %922 = vmatpush1.msra.mxu0 0.0
    %923 = vmatprep.subr.mxu0 0.0
    %924 = vmatpush1.msra.mxu0 0.0
    %925 = vmatprep.subr.mxu0 0.0
    %926 = vmatpush1.msra.mxu0 0.0
    %927 = vmatprep.subr.mxu0 0.0
    %928 = vmatpush1.msra.mxu0 0.0
    %929 = vmatprep.subr.mxu0 0.0
    %930 = vmatpush1.msra.mxu0 0.0
    %931 = vmatprep.subr.mxu0 0.0
    %932 = vmatpush1.msra.mxu0 0.0
    %933 = vmatprep.subr.mxu0 0.0
    %934 = vmatpush1.msra.mxu0 0.0
    %935 = vmatprep.subr.mxu0 0.0
    %936 = vmatpush1.msra.mxu0 0.0
    %937 = vmatprep.subr.mxu0 0.0
    %938 = vmatpush1.msra.mxu0 0.0
    %939 = vmatprep.subr.mxu0 0.0
    %940 = vmatpush1.msra.mxu0 0.0
    %941 = vmatprep.subr.mxu0 0.0
    %942 = vmatpush1.msra.mxu0 0.0
    %943 = vmatprep.subr.mxu0 0.0
    %944 = vmatpush1.msra.mxu0 0.0
    %945 = vmatprep.mubr.f32.mxu0 0.0
    %946 = vmatmul.mubr.f32.gmra.mrb[0].mxu0 %v873
    %v947 = vpop.f32.mrb[0].mxu0
    %v948 = vadd.f32 0.0, %v947
    %v949 = vpop.f32.mrb[0].mxu0
    %v950 = vadd.f32 0.0, %v949
    %951 = vmatprep.mubr.f32.mxu0 0.0
    %952 = vmatmul.mubr.f32.gmra.mrb[0].mxu0 %v876
    %v953 = vpop.f32.mrb[0].mxu0
    %v954 = vadd.f32 0.0, %v953
    %v955 = vpop.f32.mrb[0].mxu0
    %v956 = vadd.f32 0.0, %v955
    %957 = vmatprep.mubr.f32.mxu0 0.0
    %958 = vmatmul.mubr.f32.gmra.mrb[0].mxu0 %v879
    %v959 = vpop.f32.mrb[0].mxu0
    %v960 = vadd.f32 0.0, %v959
    %v961 = vpop.f32.mrb[0].mxu0
    %v962 = vadd.f32 0.0, %v961
    %963 = vdwg.mxu0
    %v965 = vsel %vm367, %v685, 0
    %v968 = vsel %vm367, %v686, 0
    %v971 = vsel %vm367, %v687, 0
    %973 = vmatprep.subr.mxu0 %v675
    %974 = vmatpush1.msra.mxu0 %v674
    %975 = vmatprep.subr.mxu0 %v373
    %976 = vmatpush1.msra.mxu0 %v373
    %977 = vmatprep.subr.mxu0 0.0
    %978 = vmatpush1.msra.mxu0 0.0
    %979 = vmatprep.subr.mxu0 0.0
    %980 = vmatpush1.msra.mxu0 0.0
    %981 = vmatprep.subr.mxu0 0.0
    %982 = vmatpush1.msra.mxu0 0.0
    %983 = vmatprep.subr.mxu0 0.0
    %984 = vmatpush1.msra.mxu0 0.0
    %985 = vmatprep.subr.mxu0 0.0
    %986 = vmatpush1.msra.mxu0 0.0
    %987 = vmatprep.subr.mxu0 0.0
    %988 = vmatpush1.msra.mxu0 0.0
    %989 = vmatprep.subr.mxu0 0.0
    %990 = vmatpush1.msra.mxu0 0.0
    %991 = vmatprep.subr.mxu0 0.0
    %992 = vmatpush1.msra.mxu0 0.0
    %993 = vmatprep.subr.mxu0 0.0
    %994 = vmatpush1.msra.mxu0 0.0
    %995 = vmatprep.subr.mxu0 0.0
    %996 = vmatpush1.msra.mxu0 0.0
    %997 = vmatprep.subr.mxu0 0.0
    %998 = vmatpush1.msra.mxu0 0.0
    %999 = vmatprep.subr.mxu0 0.0
    %1000 = vmatpush1.msra.mxu0 0.0
    %1001 = vmatprep.subr.mxu0 0.0
    %1002 = vmatpush1.msra.mxu0 0.0
    %1003 = vmatprep.subr.mxu0 0.0
    %1004 = vmatpush1.msra.mxu0 0.0
    %1005 = vmatprep.subr.mxu0 0.0
    %1006 = vmatpush1.msra.mxu0 0.0
    %1007 = vmatprep.subr.mxu0 0.0
    %1008 = vmatpush1.msra.mxu0 0.0
    %1009 = vmatprep.subr.mxu0 0.0
    %1010 = vmatpush1.msra.mxu0 0.0
    %1011 = vmatprep.subr.mxu0 0.0
    %1012 = vmatpush1.msra.mxu0 0.0
    %1013 = vmatprep.subr.mxu0 0.0
    %1014 = vmatpush1.msra.mxu0 0.0
    %1015 = vmatprep.subr.mxu0 0.0
    %1016 = vmatpush1.msra.mxu0 0.0
    %1017 = vmatprep.subr.mxu0 0.0
    %1018 = vmatpush1.msra.mxu0 0.0
    %1019 = vmatprep.subr.mxu0 0.0
    %1020 = vmatpush1.msra.mxu0 0.0
    %1021 = vmatprep.subr.mxu0 0.0
    %1022 = vmatpush1.msra.mxu0 0.0
    %1023 = vmatprep.subr.mxu0 0.0
    %1024 = vmatpush1.msra.mxu0 0.0
    %1025 = vmatprep.subr.mxu0 0.0
    %1026 = vmatpush1.msra.mxu0 0.0
    %1027 = vmatprep.subr.mxu0 0.0
    %1028 = vmatpush1.msra.mxu0 0.0
    %1029 = vmatprep.subr.mxu0 0.0
    %1030 = vmatpush1.msra.mxu0 0.0
    %1031 = vmatprep.subr.mxu0 0.0
    %1032 = vmatpush1.msra.mxu0 0.0
    %1033 = vmatprep.subr.mxu0 0.0
    %1034 = vmatpush1.msra.mxu0 0.0
    %1035 = vmatprep.subr.mxu0 0.0
    %1036 = vmatpush1.msra.mxu0 0.0
    %1037 = vmatprep.mubr.f32.mxu0 0.0
    %1038 = vmatmul.mubr.f32.gmra.mrb[0].mxu0 %v965
    %v1039 = vpop.f32.mrb[0].mxu0
    %v1040 = vadd.f32 0.0, %v1039
    %v1041 = vpop.f32.mrb[0].mxu0
    %v1042 = vadd.f32 0.0, %v1041
    %1043 = vmatprep.mubr.f32.mxu0 0.0
    %1044 = vmatmul.mubr.f32.gmra.mrb[0].mxu0 %v968
    %v1045 = vpop.f32.mrb[0].mxu0
    %v1046 = vadd.f32 0.0, %v1045
    %v1047 = vpop.f32.mrb[0].mxu0
    %v1048 = vadd.f32 0.0, %v1047
    %1049 = vmatprep.mubr.f32.mxu0 0.0
    %1050 = vmatmul.mubr.f32.gmra.mrb[0].mxu0 %v971
    %v1051 = vpop.f32.mrb[0].mxu0
    %v1052 = vadd.f32 0.0, %v1051
    %v1053 = vpop.f32.mrb[0].mxu0
    %v1054 = vadd.f32 0.0, %v1053
    %1055 = vdwg.mxu0
    %v1056 = vmax.f32 %v764, %v766
    %1057 = vmax.xlane.f32.xlu0 %v1056
    %v1058 = vpop.xlane.xlu0 %1057
    %v1059 = vmax.f32 %v770, %v772
    %1060 = vmax.xlane.f32.xlu0 %v1059
    %v1061 = vpop.xlane.xlu0 %1060
    %v1062 = vsel %vm371, %v776, -inf
    %v1063 = vsel %vm371, %v778, -inf
    %v1064 = vmax.f32 %v1062, %v1063
    %1065 = vmax.xlane.f32.xlu0 %v1064
    %v1066 = vpop.xlane.xlu0 %1065
    %v1067 = vmax.f32 %v856, %v858
    %1068 = vmax.xlane.f32.xlu0 %v1067
    %v1069 = vpop.xlane.xlu0 %1068
    %v1070 = vmax.f32 %v862, %v864
    %1071 = vmax.xlane.f32.xlu0 %v1070
    %v1072 = vpop.xlane.xlu0 %1071
    %v1073 = vsel %vm371, %v868, -inf
    %v1074 = vsel %vm371, %v870, -inf
    %v1075 = vmax.f32 %v1073, %v1074
    %1076 = vmax.xlane.f32.xlu0 %v1075
    %v1077 = vpop.xlane.xlu0 %1076
    %v1078 = vmax.f32 %v948, %v950
    %1079 = vmax.xlane.f32.xlu0 %v1078
    %v1080 = vpop.xlane.xlu0 %1079
    %v1081 = vmax.f32 %v954, %v956
    %1082 = vmax.xlane.f32.xlu0 %v1081
    %v1083 = vpop.xlane.xlu0 %1082
    %v1084 = vsel %vm371, %v960, -inf
    %v1085 = vsel %vm371, %v962, -inf
    %v1086 = vmax.f32 %v1084, %v1085
    %1087 = vmax.xlane.f32.xlu0 %v1086
    %v1088 = vpop.xlane.xlu0 %1087
    %v1089 = vmax.f32 %v1040, %v1042
    %1090 = vmax.xlane.f32.xlu0 %v1089
    %v1091 = vpop.xlane.xlu0 %1090
    %v1092 = vmax.f32 %v1046, %v1048
    %1093 = vmax.xlane.f32.xlu0 %v1092
    %v1094 = vpop.xlane.xlu0 %1093
    %v1095 = vsel %vm371, %v1052, -inf
    %v1096 = vsel %vm371, %v1054, -inf
    %v1097 = vmax.f32 %v1095, %v1096
    %1098 = vmax.xlane.f32.xlu0 %v1097
    %v1099 = vpop.xlane.xlu0 %1098
    %v1100 = vlaneseq
    %v1101 = vand.u32 %v1100, 127
    %v1102 = vadd.s32 %v1101, 128
    %vm1103 = vcmp.eq.f32.partialorder %v764, %v1058
    %vm1104 = vcmp.eq.f32.partialorder %v766, %v1058
    %vm1105 = vcmp.eq.f32.partialorder %v770, %v1061
    %vm1106 = vcmp.eq.f32.partialorder %v772, %v1061
    %vm1107 = vcmp.eq.f32.partialorder %v776, %v1066
    %vm1108 = vcmp.eq.f32.partialorder %v778, %v1066
    %vm1109 = vcmp.eq.f32.partialorder %v856, %v1069
    %vm1110 = vcmp.eq.f32.partialorder %v858, %v1069
    %vm1111 = vcmp.eq.f32.partialorder %v862, %v1072
    %vm1112 = vcmp.eq.f32.partialorder %v864, %v1072
    %vm1113 = vcmp.eq.f32.partialorder %v868, %v1077
    %vm1114 = vcmp.eq.f32.partialorder %v870, %v1077
    %vm1115 = vcmp.eq.f32.partialorder %v948, %v1080
    %vm1116 = vcmp.eq.f32.partialorder %v950, %v1080
    %vm1117 = vcmp.eq.f32.partialorder %v954, %v1083
    %vm1118 = vcmp.eq.f32.partialorder %v956, %v1083
    %vm1119 = vcmp.eq.f32.partialorder %v960, %v1088
    %vm1120 = vcmp.eq.f32.partialorder %v962, %v1088
    %vm1121 = vcmp.eq.f32.partialorder %v1040, %v1091
    %vm1122 = vcmp.eq.f32.partialorder %v1042, %v1091
    %vm1123 = vcmp.eq.f32.partialorder %v1046, %v1094
    %vm1124 = vcmp.eq.f32.partialorder %v1048, %v1094
    %vm1125 = vcmp.eq.f32.partialorder %v1052, %v1099
    %vm1126 = vcmp.eq.f32.partialorder %v1054, %v1099
    %v1127 = vsel %vm1103, %v1101, 256
    %v1128 = vsel %vm1104, %v1102, 256
    %v1129 = vsel %vm1105, %v1101, 256
    %v1130 = vsel %vm1106, %v1102, 256
    %v1131 = vsel %vm1107, %v1101, 256
    %v1132 = vsel %vm1108, %v1102, 256
    %v1133 = vsel %vm1109, %v1101, 256
    %v1134 = vsel %vm1110, %v1102, 256
    %v1135 = vsel %vm1111, %v1101, 256
    %v1136 = vsel %vm1112, %v1102, 256
    %v1137 = vsel %vm1113, %v1101, 256
    %v1138 = vsel %vm1114, %v1102, 256
    %v1139 = vsel %vm1115, %v1101, 256
    %v1140 = vsel %vm1116, %v1102, 256
    %v1141 = vsel %vm1117, %v1101, 256
    %v1142 = vsel %vm1118, %v1102, 256
    %v1143 = vsel %vm1119, %v1101, 256
    %v1144 = vsel %vm1120, %v1102, 256
    %v1145 = vsel %vm1121, %v1101, 256
    %v1146 = vsel %vm1122, %v1102, 256
    %v1147 = vsel %vm1123, %v1101, 256
    %v1148 = vsel %vm1124, %v1102, 256
    %v1149 = vsel %vm1125, %v1101, 256
    %v1150 = vsel %vm1126, %v1102, 256
    %vm1151 = vcmp.lt.s32.totalorder %v1127, %v1128
    %v1152 = vsel %vm1151, %v1127, %v1128
    %v1153 = vand.u32 %v1152, 65535
    %v1154 = vshra.s32 %v1152, 16
    %v1155 = vcvt.s32.f32 %v1153
    %v1156 = vcvt.s32.f32 %v1154
    %1157 = vmin.xlane.f32.xlu0 %v1156
    %v1158 = vpop.xlane.xlu0 %1157
    %vm1159 = vcmp.eq.f32.partialorder %v1156, %v1158
    %v1160 = vsel %vm1159, %v1155, inf
    %1161 = vmin.xlane.f32.xlu0 %v1160
    %v1162 = vpop.xlane.xlu0 %1161
    %v1163 = vcvt.f32.s32 %v1162
    %v1164 = vcvt.f32.s32 %v1158
    %v1165 = vshll.u32 %v1164, 16
    %v1166 = vadd.s32 %v1165, %v1163
    %vm1167 = vcmp.lt.s32.totalorder %v1129, %v1130
    %v1168 = vsel %vm1167, %v1129, %v1130
    %v1169 = vand.u32 %v1168, 65535
    %v1170 = vshra.s32 %v1168, 16
    %v1171 = vcvt.s32.f32 %v1169
    %v1172 = vcvt.s32.f32 %v1170
    %1173 = vmin.xlane.f32.xlu0 %v1172
    %v1174 = vpop.xlane.xlu0 %1173
    %vm1175 = vcmp.eq.f32.partialorder %v1172, %v1174
    %v1176 = vsel %vm1175, %v1171, inf
    %1177 = vmin.xlane.f32.xlu0 %v1176
    %v1178 = vpop.xlane.xlu0 %1177
    %v1179 = vcvt.f32.s32 %v1178
    %v1180 = vcvt.f32.s32 %v1174
    %v1181 = vshll.u32 %v1180, 16
    %v1182 = vadd.s32 %v1181, %v1179
    %v1183 = vsel %vm371, %v1131, 2147483647
    %v1184 = vsel %vm371, %v1132, 2147483647
    %vm1185 = vcmp.lt.s32.totalorder %v1183, %v1184
    %v1186 = vsel %vm1185, %v1183, %v1184
    %v1187 = vand.u32 %v1186, 65535
    %v1188 = vshra.s32 %v1186, 16
    %v1189 = vcvt.s32.f32 %v1187
    %v1190 = vcvt.s32.f32 %v1188
    %1191 = vmin.xlane.f32.xlu0 %v1190
    %v1192 = vpop.xlane.xlu0 %1191
    %vm1193 = vcmp.eq.f32.partialorder %v1190, %v1192
    %v1194 = vsel %vm1193, %v1189, inf
    %1195 = vmin.xlane.f32.xlu0 %v1194
    %v1196 = vpop.xlane.xlu0 %1195
    %v1197 = vcvt.f32.s32 %v1196
    %v1198 = vcvt.f32.s32 %v1192
    %v1199 = vshll.u32 %v1198, 16
    %v1200 = vadd.s32 %v1199, %v1197
    %vm1201 = vcmp.lt.s32.totalorder %v1133, %v1134
    %v1202 = vsel %vm1201, %v1133, %v1134
    %v1203 = vand.u32 %v1202, 65535
    %v1204 = vshra.s32 %v1202, 16
    %v1205 = vcvt.s32.f32 %v1203
    %v1206 = vcvt.s32.f32 %v1204
    %1207 = vmin.xlane.f32.xlu0 %v1206
    %v1208 = vpop.xlane.xlu0 %1207
    %vm1209 = vcmp.eq.f32.partialorder %v1206, %v1208
    %v1210 = vsel %vm1209, %v1205, inf
    %1211 = vmin.xlane.f32.xlu0 %v1210
    %v1212 = vpop.xlane.xlu0 %1211
    %v1213 = vcvt.f32.s32 %v1212
    %v1214 = vcvt.f32.s32 %v1208
    %v1215 = vshll.u32 %v1214, 16
    %v1216 = vadd.s32 %v1215, %v1213
    %vm1217 = vcmp.lt.s32.totalorder %v1135, %v1136
    %v1218 = vsel %vm1217, %v1135, %v1136
    %v1219 = vand.u32 %v1218, 65535
    %v1220 = vshra.s32 %v1218, 16
    %v1221 = vcvt.s32.f32 %v1219
    %v1222 = vcvt.s32.f32 %v1220
    %1223 = vmin.xlane.f32.xlu0 %v1222
    %v1224 = vpop.xlane.xlu0 %1223
    %vm1225 = vcmp.eq.f32.partialorder %v1222, %v1224
    %v1226 = vsel %vm1225, %v1221, inf
    %1227 = vmin.xlane.f32.xlu0 %v1226
    %v1228 = vpop.xlane.xlu0 %1227
    %v1229 = vcvt.f32.s32 %v1228
    %v1230 = vcvt.f32.s32 %v1224
    %v1231 = vshll.u32 %v1230, 16
    %v1232 = vadd.s32 %v1231, %v1229
    %v1233 = vsel %vm371, %v1137, 2147483647
    %v1234 = vsel %vm371, %v1138, 2147483647
    %vm1235 = vcmp.lt.s32.totalorder %v1233, %v1234
    %v1236 = vsel %vm1235, %v1233, %v1234
    %v1237 = vand.u32 %v1236, 65535
    %v1238 = vshra.s32 %v1236, 16
    %v1239 = vcvt.s32.f32 %v1237
    %v1240 = vcvt.s32.f32 %v1238
    %1241 = vmin.xlane.f32.xlu0 %v1240
    %v1242 = vpop.xlane.xlu0 %1241
    %vm1243 = vcmp.eq.f32.partialorder %v1240, %v1242
    %v1244 = vsel %vm1243, %v1239, inf
    %1245 = vmin.xlane.f32.xlu0 %v1244
    %v1246 = vpop.xlane.xlu0 %1245
    %v1247 = vcvt.f32.s32 %v1246
    %v1248 = vcvt.f32.s32 %v1242
    %v1249 = vshll.u32 %v1248, 16
    %v1250 = vadd.s32 %v1249, %v1247
    %vm1251 = vcmp.lt.s32.totalorder %v1139, %v1140
    %v1252 = vsel %vm1251, %v1139, %v1140
    %v1253 = vand.u32 %v1252, 65535
    %v1254 = vshra.s32 %v1252, 16
    %v1255 = vcvt.s32.f32 %v1253
    %v1256 = vcvt.s32.f32 %v1254
    %1257 = vmin.xlane.f32.xlu0 %v1256
    %v1258 = vpop.xlane.xlu0 %1257
    %vm1259 = vcmp.eq.f32.partialorder %v1256, %v1258
    %v1260 = vsel %vm1259, %v1255, inf
    %1261 = vmin.xlane.f32.xlu0 %v1260
    %v1262 = vpop.xlane.xlu0 %1261
    %v1263 = vcvt.f32.s32 %v1262
    %v1264 = vcvt.f32.s32 %v1258
    %v1265 = vshll.u32 %v1264, 16
    %v1266 = vadd.s32 %v1265, %v1263
    %vm1267 = vcmp.lt.s32.totalorder %v1141, %v1142
    %v1268 = vsel %vm1267, %v1141, %v1142
    %v1269 = vand.u32 %v1268, 65535
    %v1270 = vshra.s32 %v1268, 16
    %v1271 = vcvt.s32.f32 %v1269
    %v1272 = vcvt.s32.f32 %v1270
    %1273 = vmin.xlane.f32.xlu0 %v1272
    %v1274 = vpop.xlane.xlu0 %1273
    %vm1275 = vcmp.eq.f32.partialorder %v1272, %v1274
    %v1276 = vsel %vm1275, %v1271, inf
    %1277 = vmin.xlane.f32.xlu0 %v1276
    %v1278 = vpop.xlane.xlu0 %1277
    %v1279 = vcvt.f32.s32 %v1278
    %v1280 = vcvt.f32.s32 %v1274
    %v1281 = vshll.u32 %v1280, 16
    %v1282 = vadd.s32 %v1281, %v1279
    %v1283 = vsel %vm371, %v1143, 2147483647
    %v1284 = vsel %vm371, %v1144, 2147483647
    %vm1285 = vcmp.lt.s32.totalorder %v1283, %v1284
    %v1286 = vsel %vm1285, %v1283, %v1284
    %v1287 = vand.u32 %v1286, 65535
    %v1288 = vshra.s32 %v1286, 16
    %v1289 = vcvt.s32.f32 %v1287
    %v1290 = vcvt.s32.f32 %v1288
    %1291 = vmin.xlane.f32.xlu0 %v1290
    %v1292 = vpop.xlane.xlu0 %1291
    %vm1293 = vcmp.eq.f32.partialorder %v1290, %v1292
    %v1294 = vsel %vm1293, %v1289, inf
    %1295 = vmin.xlane.f32.xlu0 %v1294
    %v1296 = vpop.xlane.xlu0 %1295
    %v1297 = vcvt.f32.s32 %v1296
    %v1298 = vcvt.f32.s32 %v1292
    %v1299 = vshll.u32 %v1298, 16
    %v1300 = vadd.s32 %v1299, %v1297
    %vm1301 = vcmp.lt.s32.totalorder %v1145, %v1146
    %v1302 = vsel %vm1301, %v1145, %v1146
    %v1303 = vand.u32 %v1302, 65535
    %v1304 = vshra.s32 %v1302, 16
    %v1305 = vcvt.s32.f32 %v1303
    %v1306 = vcvt.s32.f32 %v1304
    %1307 = vmin.xlane.f32.xlu0 %v1306
    %v1308 = vpop.xlane.xlu0 %1307
    %vm1309 = vcmp.eq.f32.partialorder %v1306, %v1308
    %v1310 = vsel %vm1309, %v1305, inf
    %1311 = vmin.xlane.f32.xlu0 %v1310
    %v1312 = vpop.xlane.xlu0 %1311
    %v1313 = vcvt.f32.s32 %v1312
    %v1314 = vcvt.f32.s32 %v1308
    %v1315 = vshll.u32 %v1314, 16
    %v1316 = vadd.s32 %v1315, %v1313
    %vm1317 = vcmp.lt.s32.totalorder %v1147, %v1148
    %v1318 = vsel %vm1317, %v1147, %v1148
    %v1319 = vand.u32 %v1318, 65535
    %v1320 = vshra.s32 %v1318, 16
    %v1321 = vcvt.s32.f32 %v1319
    %v1322 = vcvt.s32.f32 %v1320
    %1323 = vmin.xlane.f32.xlu0 %v1322
    %v1324 = vpop.xlane.xlu0 %1323
    %vm1325 = vcmp.eq.f32.partialorder %v1322, %v1324
    %v1326 = vsel %vm1325, %v1321, inf
    %1327 = vmin.xlane.f32.xlu0 %v1326
    %v1328 = vpop.xlane.xlu0 %1327
    %v1329 = vcvt.f32.s32 %v1328
    %v1330 = vcvt.f32.s32 %v1324
    %v1331 = vshll.u32 %v1330, 16
    %v1332 = vadd.s32 %v1331, %v1329
    %v1333 = vsel %vm371, %v1149, 2147483647
    %v1334 = vsel %vm371, %v1150, 2147483647
    %vm1335 = vcmp.lt.s32.totalorder %v1333, %v1334
    %v1336 = vsel %vm1335, %v1333, %v1334
    %v1337 = vand.u32 %v1336, 65535
    %v1338 = vshra.s32 %v1336, 16
    %v1339 = vcvt.s32.f32 %v1337
    %v1340 = vcvt.s32.f32 %v1338
    %1341 = vmin.xlane.f32.xlu0 %v1340
    %v1342 = vpop.xlane.xlu0 %1341
    %vm1343 = vcmp.eq.f32.partialorder %v1340, %v1342
    %v1344 = vsel %vm1343, %v1339, inf
    %1345 = vmin.xlane.f32.xlu0 %v1344
    %v1346 = vpop.xlane.xlu0 %1345
    %v1347 = vcvt.f32.s32 %v1346
    %v1348 = vcvt.f32.s32 %v1342
    %v1349 = vshll.u32 %v1348, 16
    %v1350 = vadd.s32 %v1349, %v1347
    %vm1351 = vcmp.eq.s32.totalorder %v1101, %v1166
    %vm1352 = vcmp.eq.s32.totalorder %v1102, %v1166
    %vm1353 = vcmp.eq.s32.totalorder %v1101, %v1182
    %vm1354 = vcmp.eq.s32.totalorder %v1102, %v1182
    %vm1355 = vcmp.eq.s32.totalorder %v1101, %v1200
    %vm1356 = vcmp.eq.s32.totalorder %v1102, %v1200
    %vm1357 = vcmp.eq.s32.totalorder %v1101, %v1216
    %vm1358 = vcmp.eq.s32.totalorder %v1102, %v1216
    %vm1359 = vcmp.eq.s32.totalorder %v1101, %v1232
    %vm1360 = vcmp.eq.s32.totalorder %v1102, %v1232
    %vm1361 = vcmp.eq.s32.totalorder %v1101, %v1250
    %vm1362 = vcmp.eq.s32.totalorder %v1102, %v1250
    %vm1363 = vcmp.eq.s32.totalorder %v1101, %v1266
    %vm1364 = vcmp.eq.s32.totalorder %v1102, %v1266
    %vm1365 = vcmp.eq.s32.totalorder %v1101, %v1282
    %vm1366 = vcmp.eq.s32.totalorder %v1102, %v1282
    %vm1367 = vcmp.eq.s32.totalorder %v1101, %v1300
    %vm1368 = vcmp.eq.s32.totalorder %v1102, %v1300
    %vm1369 = vcmp.eq.s32.totalorder %v1101, %v1316
    %vm1370 = vcmp.eq.s32.totalorder %v1102, %v1316
    %vm1371 = vcmp.eq.s32.totalorder %v1101, %v1332
    %vm1372 = vcmp.eq.s32.totalorder %v1102, %v1332
    %vm1373 = vcmp.eq.s32.totalorder %v1101, %v1350
    %vm1374 = vcmp.eq.s32.totalorder %v1102, %v1350
    %v1375 = vld [vmem:[%s4] sm:$0xff]
    %v1376 = vld [vmem:[%s4 + $0x8] sm:$0xff]
    %v1377 = vld [vmem:[%s4 + $0x10] sm:$0xff]
    %v1378 = vld [vmem:[%s4 + $0x18] sm:$0xff]
    %v1379 = vld [vmem:[%s4 + $0x20] sm:$0x1]
    %v1380 = vld [vmem:[%s4 + $0x28] sm:$0x1]
    %s1381 = scalar_lea.vmem %s4, 48
    %v1382 = vld [vmem:[%s1381] sm:$0xff]
    %v1383 = vld [vmem:[%s1381 + $0x8] sm:$0xff]
    %v1384 = vld [vmem:[%s1381 + $0x10] sm:$0xff]
    %v1385 = vld [vmem:[%s1381 + $0x18] sm:$0xff]
    %v1386 = vld [vmem:[%s1381 + $0x20] sm:$0x1]
    %v1387 = vld [vmem:[%s1381 + $0x28] sm:$0x1]
    %v1388 = vsel %vm1351, %v1375, 0.0
    %v1389 = vsel %vm1352, %v1376, 0.0
    %v1390 = vsel %vm1353, %v1377, 0.0
    %v1391 = vsel %vm1354, %v1378, 0.0
    %v1392 = vsel %vm1355, %v1379, 0.0
    %v1393 = vsel %vm1356, %v1380, 0.0
    %v1394 = vsel %vm1357, %v1375, 0.0
    %v1395 = vsel %vm1358, %v1376, 0.0
    %v1396 = vsel %vm1359, %v1377, 0.0
    %v1397 = vsel %vm1360, %v1378, 0.0
    %v1398 = vsel %vm1361, %v1379, 0.0
    %v1399 = vsel %vm1362, %v1380, 0.0
    %v1400 = vsel %vm1363, %v1375, 0.0
    %v1401 = vsel %vm1364, %v1376, 0.0
    %v1402 = vsel %vm1365, %v1377, 0.0
    %v1403 = vsel %vm1366, %v1378, 0.0
    %v1404 = vsel %vm1367, %v1379, 0.0
    %v1405 = vsel %vm1368, %v1380, 0.0
    %v1406 = vsel %vm1369, %v1375, 0.0
    %v1407 = vsel %vm1370, %v1376, 0.0
    %v1408 = vsel %vm1371, %v1377, 0.0
    %v1409 = vsel %vm1372, %v1378, 0.0
    %v1410 = vsel %vm1373, %v1379, 0.0
    %v1411 = vsel %vm1374, %v1380, 0.0
    %v1412 = vadd.f32 %v1388, %v1389
    %1413 = vadd.xlane.f32.xlu0 %v1412
    %v1414 = vpop.xlane.xlu0 %1413
    %v1415 = vadd.f32 %v1390, %v1391
    %1416 = vadd.xlane.f32.xlu0 %v1415
    %v1417 = vpop.xlane.xlu0 %1416
    %v1418 = vsel %vm371, %v1392, 0.0
    %v1419 = vsel %vm371, %v1393, 0.0
    %v1420 = vadd.f32 %v1418, %v1419
    %1421 = vadd.xlane.f32.xlu0 %v1420
    %v1422 = vpop.xlane.xlu0 %1421
    %v1423 = vadd.f32 %v1394, %v1395
    %1424 = vadd.xlane.f32.xlu0 %v1423
    %v1425 = vpop.xlane.xlu0 %1424
    %v1426 = vadd.f32 %v1396, %v1397
    %1427 = vadd.xlane.f32.xlu0 %v1426
    %v1428 = vpop.xlane.xlu0 %1427
    %v1429 = vsel %vm371, %v1398, 0.0
    %v1430 = vsel %vm371, %v1399, 0.0
    %v1431 = vadd.f32 %v1429, %v1430
    %1432 = vadd.xlane.f32.xlu0 %v1431
    %v1433 = vpop.xlane.xlu0 %1432
    %v1434 = vadd.f32 %v1400, %v1401
    %1435 = vadd.xlane.f32.xlu0 %v1434
    %v1436 = vpop.xlane.xlu0 %1435
    %v1437 = vadd.f32 %v1402, %v1403
    %1438 = vadd.xlane.f32.xlu0 %v1437
    %v1439 = vpop.xlane.xlu0 %1438
    %v1440 = vsel %vm371, %v1404, 0.0
    %v1441 = vsel %vm371, %v1405, 0.0
    %v1442 = vadd.f32 %v1440, %v1441
    %1443 = vadd.xlane.f32.xlu0 %v1442
    %v1444 = vpop.xlane.xlu0 %1443
    %v1445 = vadd.f32 %v1406, %v1407
    %1446 = vadd.xlane.f32.xlu0 %v1445
    %v1447 = vpop.xlane.xlu0 %1446
    %v1448 = vadd.f32 %v1408, %v1409
    %1449 = vadd.xlane.f32.xlu0 %v1448
    %v1450 = vpop.xlane.xlu0 %1449
    %v1451 = vsel %vm371, %v1410, 0.0
    %v1452 = vsel %vm371, %v1411, 0.0
    %v1453 = vadd.f32 %v1451, %v1452
    %1454 = vadd.xlane.f32.xlu0 %v1453
    %v1455 = vpop.xlane.xlu0 %1454
    %v1456 = vsel %vm1351, %v1382, 0.0
    %v1457 = vsel %vm1352, %v1383, 0.0
    %v1458 = vsel %vm1353, %v1384, 0.0
    %v1459 = vsel %vm1354, %v1385, 0.0
    %v1460 = vsel %vm1355, %v1386, 0.0
    %v1461 = vsel %vm1356, %v1387, 0.0
    %v1462 = vsel %vm1357, %v1382, 0.0
    %v1463 = vsel %vm1358, %v1383, 0.0
    %v1464 = vsel %vm1359, %v1384, 0.0
    %v1465 = vsel %vm1360, %v1385, 0.0
    %v1466 = vsel %vm1361, %v1386, 0.0
    %v1467 = vsel %vm1362, %v1387, 0.0
    %v1468 = vsel %vm1363, %v1382, 0.0
    %v1469 = vsel %vm1364, %v1383, 0.0
    %v1470 = vsel %vm1365, %v1384, 0.0
    %v1471 = vsel %vm1366, %v1385, 0.0
    %v1472 = vsel %vm1367, %v1386, 0.0
    %v1473 = vsel %vm1368, %v1387, 0.0
    %v1474 = vsel %vm1369, %v1382, 0.0
    %v1475 = vsel %vm1370, %v1383, 0.0
    %v1476 = vsel %vm1371, %v1384, 0.0
    %v1477 = vsel %vm1372, %v1385, 0.0
    %v1478 = vsel %vm1373, %v1386, 0.0
    %v1479 = vsel %vm1374, %v1387, 0.0
    %v1480 = vadd.f32 %v1456, %v1457
    %1481 = vadd.xlane.f32.xlu0 %v1480
    %v1482 = vpop.xlane.xlu0 %1481
    %v1483 = vadd.f32 %v1458, %v1459
    %1484 = vadd.xlane.f32.xlu0 %v1483
    %v1485 = vpop.xlane.xlu0 %1484
    %v1486 = vsel %vm371, %v1460, 0.0
    %v1487 = vsel %vm371, %v1461, 0.0
    %v1488 = vadd.f32 %v1486, %v1487
    %1489 = vadd.xlane.f32.xlu0 %v1488
    %v1490 = vpop.xlane.xlu0 %1489
    %v1491 = vadd.f32 %v1462, %v1463
    %1492 = vadd.xlane.f32.xlu0 %v1491
    %v1493 = vpop.xlane.xlu0 %1492
    %v1494 = vadd.f32 %v1464, %v1465
    %1495 = vadd.xlane.f32.xlu0 %v1494
    %v1496 = vpop.xlane.xlu0 %1495
    %v1497 = vsel %vm371, %v1466, 0.0
    %v1498 = vsel %vm371, %v1467, 0.0
    %v1499 = vadd.f32 %v1497, %v1498
    %1500 = vadd.xlane.f32.xlu0 %v1499
    %v1501 = vpop.xlane.xlu0 %1500
    %v1502 = vadd.f32 %v1468, %v1469
    %1503 = vadd.xlane.f32.xlu0 %v1502
    %v1504 = vpop.xlane.xlu0 %1503
    %v1505 = vadd.f32 %v1470, %v1471
    %1506 = vadd.xlane.f32.xlu0 %v1505
    %v1507 = vpop.xlane.xlu0 %1506
    %v1508 = vsel %vm371, %v1472, 0.0
    %v1509 = vsel %vm371, %v1473, 0.0
    %v1510 = vadd.f32 %v1508, %v1509
    %1511 = vadd.xlane.f32.xlu0 %v1510
    %v1512 = vpop.xlane.xlu0 %1511
    %v1513 = vadd.f32 %v1474, %v1475
    %1514 = vadd.xlane.f32.xlu0 %v1513
    %v1515 = vpop.xlane.xlu0 %1514
    %v1516 = vadd.f32 %v1476, %v1477
    %1517 = vadd.xlane.f32.xlu0 %v1516
    %v1518 = vpop.xlane.xlu0 %1517
    %v1519 = vsel %vm371, %v1478, 0.0
    %v1520 = vsel %vm371, %v1479, 0.0
    %v1521 = vadd.f32 %v1519, %v1520
    %1522 = vadd.xlane.f32.xlu0 %v1521
    %v1523 = vpop.xlane.xlu0 %1522
    %1560 = vset.pattern.permute.xlu0 0
    %1561 = vperm.xlu0 %1560, %v1414
    %v1562 = vpop.permute.xlu0 %1561
    %1563 = vset.pattern.permute.xlu0 0
    %1564 = vperm.xlu0 %1563, %v1417
    %v1565 = vpop.permute.xlu0 %1564
    %1566 = vset.pattern.permute.xlu0 0
    %1567 = vperm.xlu0 %1566, %v1422
    %v1568 = vpop.permute.xlu0 %1567
    %1569 = vset.pattern.permute.xlu0 0
    %1570 = vperm.xlu0 %1569, %v1425
    %v1571 = vpop.permute.xlu0 %1570
    %1572 = vset.pattern.permute.xlu0 0
    %1573 = vperm.xlu0 %1572, %v1428
    %v1574 = vpop.permute.xlu0 %1573
    %1575 = vset.pattern.permute.xlu0 0
    %1576 = vperm.xlu0 %1575, %v1433
    %v1577 = vpop.permute.xlu0 %1576
    %1578 = vset.pattern.permute.xlu0 0
    %1579 = vperm.xlu0 %1578, %v1436
    %v1580 = vpop.permute.xlu0 %1579
    %1581 = vset.pattern.permute.xlu0 0
    %1582 = vperm.xlu0 %1581, %v1439
    %v1583 = vpop.permute.xlu0 %1582
    %1584 = vset.pattern.permute.xlu0 0
    %1585 = vperm.xlu0 %1584, %v1444
    %v1586 = vpop.permute.xlu0 %1585
    %1587 = vset.pattern.permute.xlu0 0
    %1588 = vperm.xlu0 %1587, %v1447
    %v1589 = vpop.permute.xlu0 %1588
    %1590 = vset.pattern.permute.xlu0 0
    %1591 = vperm.xlu0 %1590, %v1450
    %v1592 = vpop.permute.xlu0 %1591
    %1593 = vset.pattern.permute.xlu0 0
    %1594 = vperm.xlu0 %1593, %v1455
    %v1595 = vpop.permute.xlu0 %1594
    %1596 = vset.pattern.permute.xlu0 0
    %1597 = vperm.xlu0 %1596, %v1482
    %v1598 = vpop.permute.xlu0 %1597
    %1599 = vset.pattern.permute.xlu0 0
    %1600 = vperm.xlu0 %1599, %v1485
    %v1601 = vpop.permute.xlu0 %1600
    %1602 = vset.pattern.permute.xlu0 0
    %1603 = vperm.xlu0 %1602, %v1490
    %v1604 = vpop.permute.xlu0 %1603
    %1605 = vset.pattern.permute.xlu0 0
    %1606 = vperm.xlu0 %1605, %v1493
    %v1607 = vpop.permute.xlu0 %1606
    %1608 = vset.pattern.permute.xlu0 0
    %1609 = vperm.xlu0 %1608, %v1496
    %v1610 = vpop.permute.xlu0 %1609
    %1611 = vset.pattern.permute.xlu0 0
    %1612 = vperm.xlu0 %1611, %v1501
    %v1613 = vpop.permute.xlu0 %1612
    %1614 = vset.pattern.permute.xlu0 0
    %1615 = vperm.xlu0 %1614, %v1504
    %v1616 = vpop.permute.xlu0 %1615
    %1617 = vset.pattern.permute.xlu0 0
    %1618 = vperm.xlu0 %1617, %v1507
    %v1619 = vpop.permute.xlu0 %1618
    %1620 = vset.pattern.permute.xlu0 0
    %1621 = vperm.xlu0 %1620, %v1512
    %v1622 = vpop.permute.xlu0 %1621
    %1623 = vset.pattern.permute.xlu0 0
    %1624 = vperm.xlu0 %1623, %v1515
    %v1625 = vpop.permute.xlu0 %1624
    %1626 = vset.pattern.permute.xlu0 0
    %1627 = vperm.xlu0 %1626, %v1518
    %v1628 = vpop.permute.xlu0 %1627
    %1629 = vset.pattern.permute.xlu0 0
    %1630 = vperm.xlu0 %1629, %v1523
    %v1631 = vpop.permute.xlu0 %1630
    %1632 = vset.pattern.permute.xlu0 0
    %1633 = vperm.xlu0 %1632, %v1058
    %v1634 = vpop.permute.xlu0 %1633
    %1635 = vset.pattern.permute.xlu0 0
    %1636 = vperm.xlu0 %1635, %v1061
    %v1637 = vpop.permute.xlu0 %1636
    %1638 = vset.pattern.permute.xlu0 0
    %1639 = vperm.xlu0 %1638, %v1066
    %v1640 = vpop.permute.xlu0 %1639
    %1641 = vset.pattern.permute.xlu0 0
    %1642 = vperm.xlu0 %1641, %v1069
    %v1643 = vpop.permute.xlu0 %1642
    %1644 = vset.pattern.permute.xlu0 0
    %1645 = vperm.xlu0 %1644, %v1072
    %v1646 = vpop.permute.xlu0 %1645
    %1647 = vset.pattern.permute.xlu0 0
    %1648 = vperm.xlu0 %1647, %v1077
    %v1649 = vpop.permute.xlu0 %1648
    %1650 = vset.pattern.permute.xlu0 0
    %1651 = vperm.xlu0 %1650, %v1080
    %v1652 = vpop.permute.xlu0 %1651
    %1653 = vset.pattern.permute.xlu0 0
    %1654 = vperm.xlu0 %1653, %v1083
    %v1655 = vpop.permute.xlu0 %1654
    %1656 = vset.pattern.permute.xlu0 0
    %1657 = vperm.xlu0 %1656, %v1088
    %v1658 = vpop.permute.xlu0 %1657
    %1659 = vset.pattern.permute.xlu0 0
    %1660 = vperm.xlu0 %1659, %v1091
    %v1661 = vpop.permute.xlu0 %1660
    %1662 = vset.pattern.permute.xlu0 0
    %1663 = vperm.xlu0 %1662, %v1094
    %v1664 = vpop.permute.xlu0 %1663
    %1665 = vset.pattern.permute.xlu0 0
    %1666 = vperm.xlu0 %1665, %v1099
    %v1667 = vpop.permute.xlu0 %1666
    %v1668 = vlaneseq
    %v1669 = vshrl.u32 %v1668, 7
    %v1670 = vsub.s32 %v1101, %v1669
    %v1671 = vrot.slane %v1562, %v1670
    %v1672 = vadd.s32 %v1101, 4294967288
    %v1673 = vlaneseq
    %v1674 = vshrl.u32 %v1673, 7
    %v1675 = vsub.s32 %v1672, %v1674
    %v1676 = vrot.slane %v1565, %v1675
    %vm1677 = vcmask 130112
    %v1678 = vsel %vm1677, %v1676, %v1671
    %v1679 = vadd.s32 %v1101, 4294967280
    %v1680 = vlaneseq
    %v1681 = vshrl.u32 %v1680, 7
    %v1682 = vsub.s32 %v1679, %v1681
    %v1683 = vrot.slane %v1568, %v1682
    %vm1684 = vcmask 195712
    %v1685 = vsel %vm1684, %v1683, %v1678
    %v1686 = vlaneseq
    %v1687 = vshrl.u32 %v1686, 7
    %v1688 = vsub.s32 %v1101, %v1687
    %v1689 = vrot.slane %v1571, %v1688
    %v1690 = vlaneseq
    %v1691 = vshrl.u32 %v1690, 7
    %v1692 = vsub.s32 %v1672, %v1691
    %v1693 = vrot.slane %v1574, %v1692
    %v1694 = vsel %vm1677, %v1693, %v1689
    %v1695 = vlaneseq
    %v1696 = vshrl.u32 %v1695, 7
    %v1697 = vsub.s32 %v1679, %v1696
    %v1698 = vrot.slane %v1577, %v1697
    %v1699 = vsel %vm1684, %v1698, %v1694
    %v1700 = vlaneseq
    %v1701 = vshrl.u32 %v1700, 7
    %v1702 = vsub.s32 %v1101, %v1701
    %v1703 = vrot.slane %v1580, %v1702
    %v1704 = vlaneseq
    %v1705 = vshrl.u32 %v1704, 7
    %v1706 = vsub.s32 %v1672, %v1705
    %v1707 = vrot.slane %v1583, %v1706
    %v1708 = vsel %vm1677, %v1707, %v1703
    %v1709 = vlaneseq
    %v1710 = vshrl.u32 %v1709, 7
    %v1711 = vsub.s32 %v1679, %v1710
    %v1712 = vrot.slane %v1586, %v1711
    %v1713 = vsel %vm1684, %v1712, %v1708
    %v1714 = vlaneseq
    %v1715 = vshrl.u32 %v1714, 7
    %v1716 = vsub.s32 %v1101, %v1715
    %v1717 = vrot.slane %v1589, %v1716
    %v1718 = vlaneseq
    %v1719 = vshrl.u32 %v1718, 7
    %v1720 = vsub.s32 %v1672, %v1719
    %v1721 = vrot.slane %v1592, %v1720
    %v1722 = vsel %vm1677, %v1721, %v1717
    %v1723 = vlaneseq
    %v1724 = vshrl.u32 %v1723, 7
    %v1725 = vsub.s32 %v1679, %v1724
    %v1726 = vrot.slane %v1595, %v1725
    %v1727 = vsel %vm1684, %v1726, %v1722
    %v1728 = vlaneseq
    %v1729 = vshrl.u32 %v1728, 7
    %v1730 = vsub.s32 %v1101, %v1729
    %v1731 = vrot.slane %v1598, %v1730
    %v1732 = vlaneseq
    %v1733 = vshrl.u32 %v1732, 7
    %v1734 = vsub.s32 %v1672, %v1733
    %v1735 = vrot.slane %v1601, %v1734
    %v1736 = vsel %vm1677, %v1735, %v1731
    %v1737 = vlaneseq
    %v1738 = vshrl.u32 %v1737, 7
    %v1739 = vsub.s32 %v1679, %v1738
    %v1740 = vrot.slane %v1604, %v1739
    %v1741 = vsel %vm1684, %v1740, %v1736
    %v1742 = vlaneseq
    %v1743 = vshrl.u32 %v1742, 7
    %v1744 = vsub.s32 %v1101, %v1743
    %v1745 = vrot.slane %v1607, %v1744
    %v1746 = vlaneseq
    %v1747 = vshrl.u32 %v1746, 7
    %v1748 = vsub.s32 %v1672, %v1747
    %v1749 = vrot.slane %v1610, %v1748
    %v1750 = vsel %vm1677, %v1749, %v1745
    %v1751 = vlaneseq
    %v1752 = vshrl.u32 %v1751, 7
    %v1753 = vsub.s32 %v1679, %v1752
    %v1754 = vrot.slane %v1613, %v1753
    %v1755 = vsel %vm1684, %v1754, %v1750
    %v1756 = vlaneseq
    %v1757 = vshrl.u32 %v1756, 7
    %v1758 = vsub.s32 %v1101, %v1757
    %v1759 = vrot.slane %v1616, %v1758
    %v1760 = vlaneseq
    %v1761 = vshrl.u32 %v1760, 7
    %v1762 = vsub.s32 %v1672, %v1761
    %v1763 = vrot.slane %v1619, %v1762
    %v1764 = vsel %vm1677, %v1763, %v1759
    %v1765 = vlaneseq
    %v1766 = vshrl.u32 %v1765, 7
    %v1767 = vsub.s32 %v1679, %v1766
    %v1768 = vrot.slane %v1622, %v1767
    %v1769 = vsel %vm1684, %v1768, %v1764
    %v1770 = vlaneseq
    %v1771 = vshrl.u32 %v1770, 7
    %v1772 = vsub.s32 %v1101, %v1771
    %v1773 = vrot.slane %v1625, %v1772
    %v1774 = vlaneseq
    %v1775 = vshrl.u32 %v1774, 7
    %v1776 = vsub.s32 %v1672, %v1775
    %v1777 = vrot.slane %v1628, %v1776
    %v1778 = vsel %vm1677, %v1777, %v1773
    %v1779 = vlaneseq
    %v1780 = vshrl.u32 %v1779, 7
    %v1781 = vsub.s32 %v1679, %v1780
    %v1782 = vrot.slane %v1631, %v1781
    %v1783 = vsel %vm1684, %v1782, %v1778
    %v1784 = vlaneseq
    %v1785 = vshrl.u32 %v1784, 7
    %v1786 = vsub.s32 %v1101, %v1785
    %v1787 = vrot.slane %v1634, %v1786
    %v1788 = vlaneseq
    %v1789 = vshrl.u32 %v1788, 7
    %v1790 = vsub.s32 %v1672, %v1789
    %v1791 = vrot.slane %v1637, %v1790
    %v1792 = vsel %vm1677, %v1791, %v1787
    %v1793 = vlaneseq
    %v1794 = vshrl.u32 %v1793, 7
    %v1795 = vsub.s32 %v1679, %v1794
    %v1796 = vrot.slane %v1640, %v1795
    %v1797 = vsel %vm1684, %v1796, %v1792
    %v1798 = vlaneseq
    %v1799 = vshrl.u32 %v1798, 7
    %v1800 = vsub.s32 %v1101, %v1799
    %v1801 = vrot.slane %v1643, %v1800
    %v1802 = vlaneseq
    %v1803 = vshrl.u32 %v1802, 7
    %v1804 = vsub.s32 %v1672, %v1803
    %v1805 = vrot.slane %v1646, %v1804
    %v1806 = vsel %vm1677, %v1805, %v1801
    %v1807 = vlaneseq
    %v1808 = vshrl.u32 %v1807, 7
    %v1809 = vsub.s32 %v1679, %v1808
    %v1810 = vrot.slane %v1649, %v1809
    %v1811 = vsel %vm1684, %v1810, %v1806
    %v1812 = vlaneseq
    %v1813 = vshrl.u32 %v1812, 7
    %v1814 = vsub.s32 %v1101, %v1813
    %v1815 = vrot.slane %v1652, %v1814
    %v1816 = vlaneseq
    %v1817 = vshrl.u32 %v1816, 7
    %v1818 = vsub.s32 %v1672, %v1817
    %v1819 = vrot.slane %v1655, %v1818
    %v1820 = vsel %vm1677, %v1819, %v1815
    %v1821 = vlaneseq
    %v1822 = vshrl.u32 %v1821, 7
    %v1823 = vsub.s32 %v1679, %v1822
    %v1824 = vrot.slane %v1658, %v1823
    %v1825 = vsel %vm1684, %v1824, %v1820
    %v1826 = vlaneseq
    %v1827 = vshrl.u32 %v1826, 7
    %v1828 = vsub.s32 %v1101, %v1827
    %v1829 = vrot.slane %v1661, %v1828
    %v1830 = vlaneseq
    %v1831 = vshrl.u32 %v1830, 7
    %v1832 = vsub.s32 %v1672, %v1831
    %v1833 = vrot.slane %v1664, %v1832
    %v1834 = vsel %vm1677, %v1833, %v1829
    %v1835 = vlaneseq
    %v1836 = vshrl.u32 %v1835, 7
    %v1837 = vsub.s32 %v1679, %v1836
    %v1838 = vrot.slane %v1667, %v1837
    %v1839 = vsel %vm1684, %v1838, %v1834
    %vm1840 = vcmask 1041409
    %v1841 = vsel %vm1840, %v1699, %v1685
    %vm1842 = vcmask 1042434
    %v1843 = vsel %vm1842, %v1713, %v1841
    %vm1844 = vcmask 1043459
    %v1845 = vsel %vm1844, %v1727, %v1843
    %v1846 = vsel %vm1840, %v1755, %v1741
    %v1847 = vsel %vm1842, %v1769, %v1846
    %v1848 = vsel %vm1844, %v1783, %v1847
    %v1849 = vsel %vm1840, %v1811, %v1797
    %v1850 = vsel %vm1842, %v1825, %v1849
    %v1851 = vsel %vm1844, %v1839, %v1850
    %vm1855 = vcmask 134144
    %1856 = vst.msk [vmem:[#allocation2] sm:$0xf] %vm1855, %v1845
    %1857 = vst.msk [vmem:[#allocation2 + $0x4] sm:$0xf] %vm1855, %v1848
    %1858 = vst.msk [vmem:[#allocation2 + $0x8] sm:$0xf] %vm1855, %v1851
    // Predicated region
    $region22: #{forward.3} parent=1 // pred_check
      _
    $region23: #{forward.3} parent=1 // pred_check_branch
      %1860 = sbr.rel (0) target = $region25
    $region24: #{forward.3} parent=1 // pred_region
      %s1862 = ssub.s32 192, 192
      %1863 = vsyncadd [#allocation3], %s1862
      %s1864 = sshll.u32 [#allocation2], 4
      %s1865 = int_to_ptr.vmem [resolvable:$true] %s1864
      %1870 = dma.vmem_to_hbm [thread:$0]  %s1865, 192, %s5, [#allocation3], 64, 64, 4
    $region25: #{forward.3} parent=1 // pred_fallthru
      _
    // Predicated region
    $region26: #{forward.3} parent=1 // pred_check
      _
    $region27: #{forward.3} parent=1 // pred_check_branch
      %1872 = sbr.rel (0) target = $region29
    $region28: #{forward.3} parent=1 // pred_region
      %1873 = dma.done [#allocation3], 192
    $region29: #{forward.3} parent=1 // pred_fallthru
      _
    %1874 = vsyncpa [#allocation3], 1

</llo_original>
